<compile_context>
chip_gen: v7x
topology: tpu7x:2x2x1
jax: 0.10.0
libtpu: 0.0.40
codegen_flags: <defaults>
</compile_context>

<pallas_src>
import numpy as np
import jax
import jax.numpy as jnp
from jax.experimental import pallas as pl
from jax.experimental.pallas import tpu as pltpu

_VMEM = pl.BlockSpec(memory_space=pltpu.MemorySpace.VMEM)
_FC_PAD = 128  # lane-dense width for the FC output


# ----------------------------- fused kernel ----------------------------------

def make_fused_kernel(Bp, L, C, H, num_layers):
  """Fused conv+bn -> wavefront-stacked LSTM -> FC kernel for static shapes."""

  def kernel(*refs):
    x_ref = refs[0]                      # (L*Bp, C) bf16, time-major rows (row = t*Bp + b)
    wconv_ref = refs[1]                  # (3C, C) bf16, [w_{t-1}; w_t; w_{t+1}] with BN folded
    cb_ref = refs[2]                     # (1, C) f32 folded conv+bn bias
    wih0_ref, whh0_ref, b0_ref = refs[3:6]   # layer 0: (C,4H) bf16, (H,4H) bf16, (1,4H) f32
    n_deep = num_layers - 1
    deep_refs = refs[6:6 + 2 * n_deep]       # per deep layer: (2H,4H) bf16, (1,4H) f32
    fcw_ref = refs[6 + 2 * n_deep]           # (H, _FC_PAD) bf16
    fcb_ref = refs[7 + 2 * n_deep]           # (1, _FC_PAD) f32
    o_ref = refs[8 + 2 * n_deep]             # (Bp, _FC_PAD) f32
    gx_ref = refs[9 + 2 * n_deep]            # scratch (L*Bp, 4H) f32

    # ---- Conv1d(k=3, pad=1) + folded BatchNorm (eval), single fused matmul ----
    # Shifting by Bp whole rows shifts time by 1 for every batch element; the zero
    # rows land exactly on the t=0 / t=L-1 boundaries.  Bp is a multiple of 8, so the
    # shifts are whole-sublane-tile moves.
    xf = x_ref[...].astype(jnp.float32)                        # (L*Bp, C)
    zpad = jnp.zeros((Bp, C), jnp.float32)
    xm1 = jnp.concatenate([zpad, xf[:-Bp, :]], axis=0)         # x[t-1]
    xp1 = jnp.concatenate([xf[Bp:, :], zpad], axis=0)          # x[t+1]
    xcat = jnp.concatenate([xm1, xf, xp1], axis=1)             # (L*Bp, 3C)
    seq = (jnp.dot(xcat.astype(jnp.bfloat16), wconv_ref[...],
                   preferred_element_type=jnp.float32)
           + cb_ref[...])                                      # (L*Bp, C) f32

    # ---- Layer-0 input projection hoisted out of the recurrence ----
    # One dense matmul, bias folded in, result parked in VMEM scratch so the unrolled
    # recurrence only loads one aligned (Bp, 4H) tile per step.
    gx_ref[...] = (jnp.dot(seq.astype(jnp.bfloat16), wih0_ref[...],
                           preferred_element_type=jnp.float32) + b0_ref[...])

    whh0 = whh0_ref[...]                                       # (H, 4H) bf16, loop-invariant
    wdeep = [deep_refs[2 * i][...] for i in range(n_deep)]     # (2H, 4H) bf16
    bdeep = [deep_refs[2 * i + 1][...] for i in range(n_deep)] # (1, 4H) f32

    h = [jnp.zeros((Bp, H), jnp.float32) for _ in range(num_layers)]
    c = [jnp.zeros((Bp, H), jnp.float32) for _ in range(num_layers)]

    def cell(g, c_prev):
      # PyTorch gate order [i, f, g, o]; only the needed transcendental per gate slice.
      sg_if = jax.nn.sigmoid(g[:, :2 * H])                     # i, f
      g_g = jnp.tanh(g[:, 2 * H:3 * H])                        # g
      o_g = jax.nn.sigmoid(g[:, 3 * H:])                       # o
      c_new = sg_if[:, H:] * c_prev + sg_if[:, :H] * g_g
      h_new = o_g * jnp.tanh(c_new)
      return h_new, c_new

    # ---- Wavefront over (time, layer) ----
    # At wavefront step s, layer l processes time t = s - l.  Layers are visited in
    # DESCENDING order so layer l reads h[l-1] before it is overwritten this step,
    # i.e. it still holds layer (l-1)'s output for time t.  The two (or more)
    # recurrence chains therefore overlap, and no inter-layer sequence is stored.
    for s in range(L + num_layers - 1):                        # static, fully unrolled
      for l in range(num_layers - 1, -1, -1):
        t = s - l
        if t < 0 or t >= L:
          continue
        if l == 0:
          g = gx_ref[t * Bp:(t + 1) * Bp, :] + jnp.dot(
              h[0].astype(jnp.bfloat16), whh0,
              preferred_element_type=jnp.float32)              # (Bp, 4H)
        else:
          hin = jnp.concatenate([h[l - 1], h[l]], axis=1).astype(jnp.bfloat16)
          g = (jnp.dot(hin, wdeep[l - 1],
                       preferred_element_type=jnp.float32)
               + bdeep[l - 1])                                 # (Bp, 4H)
        h[l], c[l] = cell(g, c[l])

    # ---- FC head (lane-padded output; real result in column 0) ----
    o_ref[...] = (jnp.dot(h[-1].astype(jnp.bfloat16), fcw_ref[...],
                          preferred_element_type=jnp.float32)
                  + fcb_ref[...]).astype(o_ref.dtype)

  return kernel


# ----------------------------- wrapper ---------------------------------------

def cnn_lstm_forward(x, params):
  B, L, C = x.shape
  H = params['lstm'][0]['w_hh'].shape[1]
  num_layers = len(params['lstm'])
  Bp = ((B + 7) // 8) * 8                                       # pad batch to sublane tile

  # Fold BatchNorm1d (eval) into the conv weights/bias; stack the 3 taps into one matmul.
  eps = 1e-5
  scale = params['bn_gamma'] * jax.lax.rsqrt(params['bn_var'] + eps)   # (C,)
  shift = params['bn_beta'] - params['bn_mean'] * scale
  cw = params['conv_w']                                                # (C_out, C_in, 3)
  w_taps = [cw[:, :, k].T * scale[None, :] for k in range(3)]          # (C_in, C_out)
  wconv = jnp.concatenate(w_taps, axis=0).astype(jnp.bfloat16)         # (3C, C)
  cb = (params['conv_b'] * scale + shift)[None, :].astype(jnp.float32) # (1, C)

  layer0 = params['lstm'][0]
  wih0 = layer0['w_ih'].T.astype(jnp.bfloat16)                         # (C, 4H)
  whh0 = layer0['w_hh'].T.astype(jnp.bfloat16)                         # (H, 4H)
  b0 = (layer0['b_ih'] + layer0['b_hh'])[None, :].astype(jnp.float32)  # (1, 4H)

  deep_args = []
  for layer in params['lstm'][1:]:
    wcat = jnp.concatenate([layer['w_ih'].T, layer['w_hh'].T],
                           axis=0).astype(jnp.bfloat16)                # (2H, 4H)
    b = (layer['b_ih'] + layer['b_hh'])[None, :].astype(jnp.float32)   # (1, 4H)
    deep_args += [wcat, b]

  fc_w = jnp.pad(params['fc_w'].T, ((0, 0), (0, _FC_PAD - 1))).astype(jnp.bfloat16)
  fc_b = jnp.pad(params['fc_b'][None, :], ((0, 0), (0, _FC_PAD - 1))).astype(jnp.float32)

  # Time-major, batch padded to Bp: row index = t*Bp + b.  bf16 halves the x DMA.
  x_tm = jnp.zeros((L, Bp, C), jnp.bfloat16).at[:, :B, :].set(
      x.transpose(1, 0, 2).astype(jnp.bfloat16)).reshape(L * Bp, C)

  args = [x_tm, wconv, cb, wih0, whh0, b0, *deep_args, fc_w, fc_b]
  out_pad = pl.pallas_call(
      make_fused_kernel(Bp, L, C, H, num_layers),
      out_shape=jax.ShapeDtypeStruct((Bp, _FC_PAD), jnp.float32),
      in_specs=[_VMEM] * len(args),
      out_specs=_VMEM,
      scratch_shapes=[pltpu.VMEM((L * Bp, 4 * H), jnp.float32)],
  )(*args)
  return out_pad[:B, :1]                                               # (B, 1)


# ----------------------------- params / reference ----------------------------

def init_params(key, input_size, hidden_size, num_layers):
  C, H = input_size, hidden_size
  ks = list(jax.random.split(key, 8 + 4 * num_layers))
  it = iter(ks)
  u = lambda k, shape, b: jax.random.uniform(k, shape, jnp.float32, -b, b)
  kc = 1.0 / np.sqrt(C * 3)
  kh = 1.0 / np.sqrt(H)
  params = dict(
      conv_w=u(next(it), (C, C, 3), kc),
      conv_b=u(next(it), (C,), kc),
      bn_gamma=jax.random.uniform(next(it), (C,), jnp.float32, 0.5, 1.5),
      bn_beta=u(next(it), (C,), 0.1),
      bn_mean=u(next(it), (C,), 0.1),
      bn_var=jax.random.uniform(next(it), (C,), jnp.float32, 0.5, 1.5),
      fc_w=u(next(it), (1, H), kh),
      fc_b=u(next(it), (1,), kh),
      lstm=[],
  )
  for layer in range(num_layers):
    In = C if layer == 0 else H
    params['lstm'].append(dict(
        w_ih=u(next(it), (4 * H, In), kh),
        w_hh=u(next(it), (4 * H, H), kh),
        b_ih=u(next(it), (4 * H,), kh),
        b_hh=u(next(it), (4 * H,), kh),
    ))
  return params


def reference_forward(x, params):
  """Pure-JAX f32 reference mirroring the PyTorch forward (eval mode)."""
  B, L, C = x.shape
  xc = jnp.transpose(x, (0, 2, 1))                           # (B, C, L)
  xp = jnp.pad(xc, ((0, 0), (0, 0), (1, 1)))
  y = jnp.zeros((B, C, L), jnp.float32)
  for k in range(3):
    y = y + jnp.einsum('oi,bil->bol', params['conv_w'][:, :, k],
                       xp[:, :, k:k + L])
  y = y + params['conv_b'][None, :, None]
  eps = 1e-5
  y = (y - params['bn_mean'][None, :, None]) / jnp.sqrt(
      params['bn_var'] + eps)[None, :, None]
  y = y * params['bn_gamma'][None, :, None] + params['bn_beta'][None, :, None]
  inp = jnp.transpose(y, (0, 2, 1))                          # (B, L, C)
  H = params['lstm'][0]['w_hh'].shape[1]
  for layer in params['lstm']:
    h = jnp.zeros((B, H), jnp.float32)
    c = jnp.zeros((B, H), jnp.float32)
    outs = []
    for t in range(L):
      gates = (inp[:, t, :] @ layer['w_ih'].T + h @ layer['w_hh'].T
               + layer['b_ih'] + layer['b_hh'])
      i = jax.nn.sigmoid(gates[:, 0 * H:1 * H])
      f = jax.nn.sigmoid(gates[:, 1 * H:2 * H])
      g = jnp.tanh(gates[:, 2 * H:3 * H])
      o = jax.nn.sigmoid(gates[:, 3 * H:4 * H])
      c = f * c + i * g
      h = o * jnp.tanh(c)
      outs.append(h)
    inp = jnp.stack(outs, axis=1)
  return inp[:, -1, :] @ params['fc_w'].T + params['fc_b']


# ----------------------------- main -------------------------------------------

if __name__ == "__main__":
  B, L, input_size, hidden_size, num_layers = 2, 16, 8, 32, 2
  key = jax.random.PRNGKey(0)
  kx, kp = jax.random.split(key)
  x = jax.random.normal(kx, (B, L, input_size), jnp.float32)
  params = init_params(kp, input_size, hidden_size, num_layers)

  fwd = jax.jit(cnn_lstm_forward)
  out = jax.block_until_ready(fwd(x, params))
  ref = jax.block_until_ready(reference_forward(x, params))
  # Tolerance documents the deliberate bf16 MXU operands (f32 accumulation/state).
  np.testing.assert_allclose(np.asarray(out), np.asarray(ref),
                             rtol=2e-2, atol=2e-2)
  print("KERNEL_OK")
</pallas_src>

<mosaic_0001>
module attributes {stable_mosaic.version = 11 : i64} {
  func.func @kernel(%arg0: memref<128x8xbf16, #tpu.memory_space<vmem>>, %arg1: memref<24x8xbf16, #tpu.memory_space<vmem>>, %arg2: memref<1x8xf32, #tpu.memory_space<vmem>>, %arg3: memref<8x128xbf16, #tpu.memory_space<vmem>>, %arg4: memref<32x128xbf16, #tpu.memory_space<vmem>>, %arg5: memref<1x128xf32, #tpu.memory_space<vmem>>, %arg6: memref<64x128xbf16, #tpu.memory_space<vmem>>, %arg7: memref<1x128xf32, #tpu.memory_space<vmem>>, %arg8: memref<32x128xbf16, #tpu.memory_space<vmem>>, %arg9: memref<1x128xf32, #tpu.memory_space<vmem>>, %arg10: memref<8x128xf32, #tpu.memory_space<vmem>>, %arg11: memref<128x128xf32, #tpu.memory_space<vmem>>) attributes {dimension_semantics = [], scalar_prefetch = 0 : i64, scratch_operands = 1 : i64, tpu.core_type = #tpu.core_type<tc>} {
    %c0 = arith.constant 0 : index
    %c0_0 = arith.constant 0 : index
    %0 = vector.load %arg0[%c0, %c0_0] : memref<128x8xbf16, #tpu.memory_space<vmem>>, vector<128x8xbf16>
    %1 = arith.extf %0 : vector<128x8xbf16> to vector<128x8xf32>
    %cst = arith.constant 0.000000e+00 : f32
    %2 = vector.broadcast %cst : f32 to vector<8x8xf32>
    %3 = vector.extract_strided_slice %1 {offsets = [0, 0], sizes = [120, 8], strides = [1, 1]} : vector<128x8xf32> to vector<120x8xf32>
    %4 = tpu.concatenate %2, %3 in 0 : vector<8x8xf32>, vector<120x8xf32> -> vector<128x8xf32>
    %5 = vector.extract_strided_slice %1 {offsets = [8, 0], sizes = [120, 8], strides = [1, 1]} : vector<128x8xf32> to vector<120x8xf32>
    %6 = tpu.concatenate %5, %2 in 0 : vector<120x8xf32>, vector<8x8xf32> -> vector<128x8xf32>
    %7 = tpu.concatenate %4, %1, %6 in 1 : vector<128x8xf32>, vector<128x8xf32>, vector<128x8xf32> -> vector<128x24xf32>
    %8 = arith.truncf %7 : vector<128x24xf32> to vector<128x24xbf16>
    %c0_1 = arith.constant 0 : index
    %c0_2 = arith.constant 0 : index
    %9 = vector.load %arg1[%c0_1, %c0_2] : memref<24x8xbf16, #tpu.memory_space<vmem>>, vector<24x8xbf16>
    %cst_3 = arith.constant dense<0.000000e+00> : vector<128x8xf32>
    %10 = tpu.matmul %8, %9, %cst_3 {dimension_numbers = #tpu.dot_dimension_numbers<[1], [0], [0], [1], [0, 0, 1, 1], [], []>} : vector<128x24xbf16>, vector<24x8xbf16>, vector<128x8xf32> -> vector<128x8xf32>
    %c0_4 = arith.constant 0 : index
    %c0_5 = arith.constant 0 : index
    %11 = vector.load %arg2[%c0_4, %c0_5] : memref<1x8xf32, #tpu.memory_space<vmem>>, vector<1x8xf32>
    %12 = vector.broadcast %11 : vector<1x8xf32> to vector<128x8xf32>
    %13 = arith.addf %10, %12 : vector<128x8xf32>
    %14 = arith.truncf %13 : vector<128x8xf32> to vector<128x8xbf16>
    %c0_6 = arith.constant 0 : index
    %c0_7 = arith.constant 0 : index
    %15 = vector.load %arg3[%c0_6, %c0_7] : memref<8x128xbf16, #tpu.memory_space<vmem>>, vector<8x128xbf16>
    %cst_8 = arith.constant dense<0.000000e+00> : vector<128x128xf32>
    %16 = tpu.matmul %14, %15, %cst_8 {dimension_numbers = #tpu.dot_dimension_numbers<[1], [0], [0], [1], [0, 0, 1, 1], [], []>} : vector<128x8xbf16>, vector<8x128xbf16>, vector<128x128xf32> -> vector<128x128xf32>
    %c0_9 = arith.constant 0 : index
    %c0_10 = arith.constant 0 : index
    %17 = vector.load %arg5[%c0_9, %c0_10] : memref<1x128xf32, #tpu.memory_space<vmem>>, vector<1x128xf32>
    %18 = vector.broadcast %17 : vector<1x128xf32> to vector<128x128xf32>
    %19 = arith.addf %16, %18 : vector<128x128xf32>
    %c0_11 = arith.constant 0 : index
    %c0_12 = arith.constant 0 : index
    %20 = vector.load %arg11[%c0_11, %c0_12] : memref<128x128xf32, #tpu.memory_space<vmem>>, vector<128x128xf32>
    tpu.vector_store %arg11[%c0_11, %c0_12], %19 {strides = array<i32>} : memref<128x128xf32, #tpu.memory_space<vmem>>, vector<128x128xf32>,
    %c0_13 = arith.constant 0 : index
    %c0_14 = arith.constant 0 : index
    %21 = vector.load %arg4[%c0_13, %c0_14] : memref<32x128xbf16, #tpu.memory_space<vmem>>, vector<32x128xbf16>
    %c0_15 = arith.constant 0 : index
    %c0_16 = arith.constant 0 : index
    %22 = vector.load %arg6[%c0_15, %c0_16] : memref<64x128xbf16, #tpu.memory_space<vmem>>, vector<64x128xbf16>
    %c0_17 = arith.constant 0 : index
    %c0_18 = arith.constant 0 : index
    %23 = vector.load %arg7[%c0_17, %c0_18] : memref<1x128xf32, #tpu.memory_space<vmem>>, vector<1x128xf32>
    %cst_19 = arith.constant 0.000000e+00 : f32
    %24 = vector.broadcast %cst_19 : f32 to vector<8x32xf32>
    %cst_20 = arith.constant 0.000000e+00 : f32
    %25 = vector.broadcast %cst_20 : f32 to vector<8x32xf32>
    %cst_21 = arith.constant 0.000000e+00 : f32
    %26 = vector.broadcast %cst_21 : f32 to vector<8x32xf32>
    %cst_22 = arith.constant 0.000000e+00 : f32
    %27 = vector.broadcast %cst_22 : f32 to vector<8x32xf32>
    %c0_23 = arith.constant 0 : index
    %c0_24 = arith.constant 0 : index
    %28 = vector.load %arg11[%c0_23, %c0_24] : memref<128x128xf32, #tpu.memory_space<vmem>>, vector<8x128xf32>
    %29 = arith.truncf %24 : vector<8x32xf32> to vector<8x32xbf16>
    %cst_25 = arith.constant dense<0.000000e+00> : vector<8x128xf32>
    %30 = tpu.matmul %29, %21, %cst_25 {dimension_numbers = #tpu.dot_dimension_numbers<[1], [0], [0], [1], [0, 0, 1, 1], [], []>} : vector<8x32xbf16>, vector<32x128xbf16>, vector<8x128xf32> -> vector<8x128xf32>
    %31 = arith.addf %28, %30 : vector<8x128xf32>
    %32 = vector.extract_strided_slice %31 {offsets = [0, 0], sizes = [8, 64], strides = [1, 1]} : vector<8x128xf32> to vector<8x64xf32>
    %33 = arith.negf %32 : vector<8x64xf32>
    %34 = math.exp %33 : vector<8x64xf32>
    %cst_26 = arith.constant 1.000000e+00 : f32
    %35 = vector.broadcast %cst_26 : f32 to vector<8x64xf32>
    %36 = arith.addf %35, %34 : vector<8x64xf32>
    %37 = arith.divf %35, %36 : vector<8x64xf32>
    %38 = vector.extract_strided_slice %31 {offsets = [0, 64], sizes = [8, 32], strides = [1, 1]} : vector<8x128xf32> to vector<8x32xf32>
    %39 = math.tanh %38 : vector<8x32xf32>
    %40 = vector.extract_strided_slice %31 {offsets = [0, 96], sizes = [8, 32], strides = [1, 1]} : vector<8x128xf32> to vector<8x32xf32>
    %41 = arith.negf %40 : vector<8x32xf32>
    %42 = math.exp %41 : vector<8x32xf32>
    %cst_27 = arith.constant 1.000000e+00 : f32
    %43 = vector.broadcast %cst_27 : f32 to vector<8x32xf32>
    %44 = arith.addf %43, %42 : vector<8x32xf32>
    %45 = arith.divf %43, %44 : vector<8x32xf32>
    %46 = vector.extract_strided_slice %37 {offsets = [0, 32], sizes = [8, 32], strides = [1, 1]} : vector<8x64xf32> to vector<8x32xf32>
    %47 = arith.mulf %46, %26 : vector<8x32xf32>
    %48 = vector.extract_strided_slice %37 {offsets = [0, 0], sizes = [8, 32], strides = [1, 1]} : vector<8x64xf32> to vector<8x32xf32>
    %49 = arith.mulf %48, %39 : vector<8x32xf32>
    %50 = arith.addf %47, %49 : vector<8x32xf32>
    %51 = math.tanh %50 : vector<8x32xf32>
    %52 = arith.mulf %45, %51 : vector<8x32xf32>
    %53 = tpu.concatenate %52, %25 in 1 : vector<8x32xf32>, vector<8x32xf32> -> vector<8x64xf32>
    %54 = arith.truncf %53 : vector<8x64xf32> to vector<8x64xbf16>
    %cst_28 = arith.constant dense<0.000000e+00> : vector<8x128xf32>
    %55 = tpu.matmul %54, %22, %cst_28 {dimension_numbers = #tpu.dot_dimension_numbers<[1], [0], [0], [1], [0, 0, 1, 1], [], []>} : vector<8x64xbf16>, vector<64x128xbf16>, vector<8x128xf32> -> vector<8x128xf32>
    %56 = vector.broadcast %23 : vector<1x128xf32> to vector<8x128xf32>
    %57 = arith.addf %55, %56 : vector<8x128xf32>
    %58 = vector.extract_strided_slice %57 {offsets = [0, 0], sizes = [8, 64], strides = [1, 1]} : vector<8x128xf32> to vector<8x64xf32>
    %59 = arith.negf %58 : vector<8x64xf32>
    %60 = math.exp %59 : vector<8x64xf32>
    %cst_29 = arith.constant 1.000000e+00 : f32
    %61 = vector.broadcast %cst_29 : f32 to vector<8x64xf32>
    %62 = arith.addf %61, %60 : vector<8x64xf32>
    %63 = arith.divf %61, %62 : vector<8x64xf32>
    %64 = vector.extract_strided_slice %57 {offsets = [0, 64], sizes = [8, 32], strides = [1, 1]} : vector<8x128xf32> to vector<8x32xf32>
    %65 = math.tanh %64 : vector<8x32xf32>
    %66 = vector.extract_strided_slice %57 {offsets = [0, 96], sizes = [8, 32], strides = [1, 1]} : vector<8x128xf32> to vector<8x32xf32>
    %67 = arith.negf %66 : vector<8x32xf32>
    %68 = math.exp %67 : vector<8x32xf32>
    %cst_30 = arith.constant 1.000000e+00 : f32
    %69 = vector.broadcast %cst_30 : f32 to vector<8x32xf32>
    %70 = arith.addf %69, %68 : vector<8x32xf32>
    %71 = arith.divf %69, %70 : vector<8x32xf32>
    %72 = vector.extract_strided_slice %63 {offsets = [0, 32], sizes = [8, 32], strides = [1, 1]} : vector<8x64xf32> to vector<8x32xf32>
    %73 = arith.mulf %72, %27 : vector<8x32xf32>
    %74 = vector.extract_strided_slice %63 {offsets = [0, 0], sizes = [8, 32], strides = [1, 1]} : vector<8x64xf32> to vector<8x32xf32>
    %75 = arith.mulf %74, %65 : vector<8x32xf32>
    %76 = arith.addf %73, %75 : vector<8x32xf32>
    %77 = math.tanh %76 : vector<8x32xf32>
    %78 = arith.mulf %71, %77 : vector<8x32xf32>
    %c8 = arith.constant 8 : index
    %c0_31 = arith.constant 0 : index
    %79 = vector.load %arg11[%c8, %c0_31] : memref<128x128xf32, #tpu.memory_space<vmem>>, vector<8x128xf32>
    %80 = arith.truncf %52 : vector<8x32xf32> to vector<8x32xbf16>
    %cst_32 = arith.constant dense<0.000000e+00> : vector<8x128xf32>
    %81 = tpu.matmul %80, %21, %cst_32 {dimension_numbers = #tpu.dot_dimension_numbers<[1], [0], [0], [1], [0, 0, 1, 1], [], []>} : vector<8x32xbf16>, vector<32x128xbf16>, vector<8x128xf32> -> vector<8x128xf32>
    %82 = arith.addf %79, %81 : vector<8x128xf32>
    %83 = vector.extract_strided_slice %82 {offsets = [0, 0], sizes = [8, 64], strides = [1, 1]} : vector<8x128xf32> to vector<8x64xf32>
    %84 = arith.negf %83 : vector<8x64xf32>
    %85 = math.exp %84 : vector<8x64xf32>
    %cst_33 = arith.constant 1.000000e+00 : f32
    %86 = vector.broadcast %cst_33 : f32 to vector<8x64xf32>
    %87 = arith.addf %86, %85 : vector<8x64xf32>
    %88 = arith.divf %86, %87 : vector<8x64xf32>
    %89 = vector.extract_strided_slice %82 {offsets = [0, 64], sizes = [8, 32], strides = [1, 1]} : vector<8x128xf32> to vector<8x32xf32>
    %90 = math.tanh %89 : vector<8x32xf32>
    %91 = vector.extract_strided_slice %82 {offsets = [0, 96], sizes = [8, 32], strides = [1, 1]} : vector<8x128xf32> to vector<8x32xf32>
    %92 = arith.negf %91 : vector<8x32xf32>
    %93 = math.exp %92 : vector<8x32xf32>
    %cst_34 = arith.constant 1.000000e+00 : f32
    %94 = vector.broadcast %cst_34 : f32 to vector<8x32xf32>
    %95 = arith.addf %94, %93 : vector<8x32xf32>
    %96 = arith.divf %94, %95 : vector<8x32xf32>
    %97 = vector.extract_strided_slice %88 {offsets = [0, 32], sizes = [8, 32], strides = [1, 1]} : vector<8x64xf32> to vector<8x32xf32>
    %98 = arith.mulf %97, %50 : vector<8x32xf32>
    %99 = vector.extract_strided_slice %88 {offsets = [0, 0], sizes = [8, 32], strides = [1, 1]} : vector<8x64xf32> to vector<8x32xf32>
    %100 = arith.mulf %99, %90 : vector<8x32xf32>
    %101 = arith.addf %98, %100 : vector<8x32xf32>
    %102 = math.tanh %101 : vector<8x32xf32>
    %103 = arith.mulf %96, %102 : vector<8x32xf32>
    %104 = tpu.concatenate %103, %78 in 1 : vector<8x32xf32>, vector<8x32xf32> -> vector<8x64xf32>
    %105 = arith.truncf %104 : vector<8x64xf32> to vector<8x64xbf16>
    %cst_35 = arith.constant dense<0.000000e+00> : vector<8x128xf32>
    %106 = tpu.matmul %105, %22, %cst_35 {dimension_numbers = #tpu.dot_dimension_numbers<[1], [0], [0], [1], [0, 0, 1, 1], [], []>} : vector<8x64xbf16>, vector<64x128xbf16>, vector<8x128xf32> -> vector<8x128xf32>
    %107 = vector.broadcast %23 : vector<1x128xf32> to vector<8x128xf32>
    %108 = arith.addf %106, %107 : vector<8x128xf32>
    %109 = vector.extract_strided_slice %108 {offsets = [0, 0], sizes = [8, 64], strides = [1, 1]} : vector<8x128xf32> to vector<8x64xf32>
    %110 = arith.negf %109 : vector<8x64xf32>
    %111 = math.exp %110 : vector<8x64xf32>
    %cst_36 = arith.constant 1.000000e+00 : f32
    %112 = vector.broadcast %cst_36 : f32 to vector<8x64xf32>
    %113 = arith.addf %112, %111 : vector<8x64xf32>
    %114 = arith.divf %112, %113 : vector<8x64xf32>
    %115 = vector.extract_strided_slice %108 {offsets = [0, 64], sizes = [8, 32], strides = [1, 1]} : vector<8x128xf32> to vector<8x32xf32>
    %116 = math.tanh %115 : vector<8x32xf32>
    %117 = vector.extract_strided_slice %108 {offsets = [0, 96], sizes = [8, 32], strides = [1, 1]} : vector<8x128xf32> to vector<8x32xf32>
    %118 = arith.negf %117 : vector<8x32xf32>
    %119 = math.exp %118 : vector<8x32xf32>
    %cst_37 = arith.constant 1.000000e+00 : f32
    %120 = vector.broadcast %cst_37 : f32 to vector<8x32xf32>
    %121 = arith.addf %120, %119 : vector<8x32xf32>
    %122 = arith.divf %120, %121 : vector<8x32xf32>
    %123 = vector.extract_strided_slice %114 {offsets = [0, 32], sizes = [8, 32], strides = [1, 1]} : vector<8x64xf32> to vector<8x32xf32>
    %124 = arith.mulf %123, %76 : vector<8x32xf32>
    %125 = vector.extract_strided_slice %114 {offsets = [0, 0], sizes = [8, 32], strides = [1, 1]} : vector<8x64xf32> to vector<8x32xf32>
    %126 = arith.mulf %125, %116 : vector<8x32xf32>
    %127 = arith.addf %124, %126 : vector<8x32xf32>
    %128 = math.tanh %127 : vector<8x32xf32>
    %129 = arith.mulf %122, %128 : vector<8x32xf32>
    %c16 = arith.constant 16 : index
    %c0_38 = arith.constant 0 : index
    %130 = vector.load %arg11[%c16, %c0_38] : memref<128x128xf32, #tpu.memory_space<vmem>>, vector<8x128xf32>
    %131 = arith.truncf %103 : vector<8x32xf32> to vector<8x32xbf16>
    %cst_39 = arith.constant dense<0.000000e+00> : vector<8x128xf32>
    %132 = tpu.matmul %131, %21, %cst_39 {dimension_numbers = #tpu.dot_dimension_numbers<[1], [0], [0], [1], [0, 0, 1, 1], [], []>} : vector<8x32xbf16>, vector<32x128xbf16>, vector<8x128xf32> -> vector<8x128xf32>
    %133 = arith.addf %130, %132 : vector<8x128xf32>
    %134 = vector.extract_strided_slice %133 {offsets = [0, 0], sizes = [8, 64], strides = [1, 1]} : vector<8x128xf32> to vector<8x64xf32>
    %135 = arith.negf %134 : vector<8x64xf32>
    %136 = math.exp %135 : vector<8x64xf32>
    %cst_40 = arith.constant 1.000000e+00 : f32
    %137 = vector.broadcast %cst_40 : f32 to vector<8x64xf32>
    %138 = arith.addf %137, %136 : vector<8x64xf32>
    %139 = arith.divf %137, %138 : vector<8x64xf32>
    %140 = vector.extract_strided_slice %133 {offsets = [0, 64], sizes = [8, 32], strides = [1, 1]} : vector<8x128xf32> to vector<8x32xf32>
    %141 = math.tanh %140 : vector<8x32xf32>
    %142 = vector.extract_strided_slice %133 {offsets = [0, 96], sizes = [8, 32], strides = [1, 1]} : vector<8x128xf32> to vector<8x32xf32>
    %143 = arith.negf %142 : vector<8x32xf32>
    %144 = math.exp %143 : vector<8x32xf32>
    %cst_41 = arith.constant 1.000000e+00 : f32
    %145 = vector.broadcast %cst_41 : f32 to vector<8x32xf32>
    %146 = arith.addf %145, %144 : vector<8x32xf32>
    %147 = arith.divf %145, %146 : vector<8x32xf32>
    %148 = vector.extract_strided_slice %139 {offsets = [0, 32], sizes = [8, 32], strides = [1, 1]} : vector<8x64xf32> to vector<8x32xf32>
    %149 = arith.mulf %148, %101 : vector<8x32xf32>
    %150 = vector.extract_strided_slice %139 {offsets = [0, 0], sizes = [8, 32], strides = [1, 1]} : vector<8x64xf32> to vector<8x32xf32>
    %151 = arith.mulf %150, %141 : vector<8x32xf32>
    %152 = arith.addf %149, %151 : vector<8x32xf32>
    %153 = math.tanh %152 : vector<8x32xf32>
    %154 = arith.mulf %147, %153 : vector<8x32xf32>
    %155 = tpu.concatenate %154, %129 in 1 : vector<8x32xf32>, vector<8x32xf32> -> vector<8x64xf32>
    %156 = arith.truncf %155 : vector<8x64xf32> to vector<8x64xbf16>
    %cst_42 = arith.constant dense<0.000000e+00> : vector<8x128xf32>
    %157 = tpu.matmul %156, %22, %cst_42 {dimension_numbers = #tpu.dot_dimension_numbers<[1], [0], [0], [1], [0, 0, 1, 1], [], []>} : vector<8x64xbf16>, vector<64x128xbf16>, vector<8x128xf32> -> vector<8x128xf32>
    %158 = vector.broadcast %23 : vector<1x128xf32> to vector<8x128xf32>
    %159 = arith.addf %157, %158 : vector<8x128xf32>
    %160 = vector.extract_strided_slice %159 {offsets = [0, 0], sizes = [8, 64], strides = [1, 1]} : vector<8x128xf32> to vector<8x64xf32>
    %161 = arith.negf %160 : vector<8x64xf32>
    %162 = math.exp %161 : vector<8x64xf32>
    %cst_43 = arith.constant 1.000000e+00 : f32
    %163 = vector.broadcast %cst_43 : f32 to vector<8x64xf32>
    %164 = arith.addf %163, %162 : vector<8x64xf32>
    %165 = arith.divf %163, %164 : vector<8x64xf32>
    %166 = vector.extract_strided_slice %159 {offsets = [0, 64], sizes = [8, 32], strides = [1, 1]} : vector<8x128xf32> to vector<8x32xf32>
    %167 = math.tanh %166 : vector<8x32xf32>
    %168 = vector.extract_strided_slice %159 {offsets = [0, 96], sizes = [8, 32], strides = [1, 1]} : vector<8x128xf32> to vector<8x32xf32>
    %169 = arith.negf %168 : vector<8x32xf32>
    %170 = math.exp %169 : vector<8x32xf32>
    %cst_44 = arith.constant 1.000000e+00 : f32
    %171 = vector.broadcast %cst_44 : f32 to vector<8x32xf32>
    %172 = arith.addf %171, %170 : vector<8x32xf32>
    %173 = arith.divf %171, %172 : vector<8x32xf32>
    %174 = vector.extract_strided_slice %165 {offsets = [0, 32], sizes = [8, 32], strides = [1, 1]} : vector<8x64xf32> to vector<8x32xf32>
    %175 = arith.mulf %174, %127 : vector<8x32xf32>
    %176 = vector.extract_strided_slice %165 {offsets = [0, 0], sizes = [8, 32], strides = [1, 1]} : vector<8x64xf32> to vector<8x32xf32>
    %177 = arith.mulf %176, %167 : vector<8x32xf32>
    %178 = arith.addf %175, %177 : vector<8x32xf32>
    %179 = math.tanh %178 : vector<8x32xf32>
    %180 = arith.mulf %173, %179 : vector<8x32xf32>
    %c24 = arith.constant 24 : index
    %c0_45 = arith.constant 0 : index
    %181 = vector.load %arg11[%c24, %c0_45] : memref<128x128xf32, #tpu.memory_space<vmem>>, vector<8x128xf32>
    %182 = arith.truncf %154 : vector<8x32xf32> to vector<8x32xbf16>
    %cst_46 = arith.constant dense<0.000000e+00> : vector<8x128xf32>
    %183 = tpu.matmul %182, %21, %cst_46 {dimension_numbers = #tpu.dot_dimension_numbers<[1], [0], [0], [1], [0, 0, 1, 1], [], []>} : vector<8x32xbf16>, vector<32x128xbf16>, vector<8x128xf32> -> vector<8x128xf32>
    %184 = arith.addf %181, %183 : vector<8x128xf32>
    %185 = vector.extract_strided_slice %184 {offsets = [0, 0], sizes = [8, 64], strides = [1, 1]} : vector<8x128xf32> to vector<8x64xf32>
    %186 = arith.negf %185 : vector<8x64xf32>
    %187 = math.exp %186 : vector<8x64xf32>
    %cst_47 = arith.constant 1.000000e+00 : f32
    %188 = vector.broadcast %cst_47 : f32 to vector<8x64xf32>
    %189 = arith.addf %188, %187 : vector<8x64xf32>
    %190 = arith.divf %188, %189 : vector<8x64xf32>
    %191 = vector.extract_strided_slice %184 {offsets = [0, 64], sizes = [8, 32], strides = [1, 1]} : vector<8x128xf32> to vector<8x32xf32>
    %192 = math.tanh %191 : vector<8x32xf32>
    %193 = vector.extract_strided_slice %184 {offsets = [0, 96], sizes = [8, 32], strides = [1, 1]} : vector<8x128xf32> to vector<8x32xf32>
    %194 = arith.negf %193 : vector<8x32xf32>
    %195 = math.exp %194 : vector<8x32xf32>
    %cst_48 = arith.constant 1.000000e+00 : f32
    %196 = vector.broadcast %cst_48 : f32 to vector<8x32xf32>
    %197 = arith.addf %196, %195 : vector<8x32xf32>
    %198 = arith.divf %196, %197 : vector<8x32xf32>
    %199 = vector.extract_strided_slice %190 {offsets = [0, 32], sizes = [8, 32], strides = [1, 1]} : vector<8x64xf32> to vector<8x32xf32>
    %200 = arith.mulf %199, %152 : vector<8x32xf32>
    %201 = vector.extract_strided_slice %190 {offsets = [0, 0], sizes = [8, 32], strides = [1, 1]} : vector<8x64xf32> to vector<8x32xf32>
    %202 = arith.mulf %201, %192 : vector<8x32xf32>
    %203 = arith.addf %200, %202 : vector<8x32xf32>
    %204 = math.tanh %203 : vector<8x32xf32>
    %205 = arith.mulf %198, %204 : vector<8x32xf32>
    %206 = tpu.concatenate %205, %180 in 1 : vector<8x32xf32>, vector<8x32xf32> -> vector<8x64xf32>
    %207 = arith.truncf %206 : vector<8x64xf32> to vector<8x64xbf16>
    %cst_49 = arith.constant dense<0.000000e+00> : vector<8x128xf32>
    %208 = tpu.matmul %207, %22, %cst_49 {dimension_numbers = #tpu.dot_dimension_numbers<[1], [0], [0], [1], [0, 0, 1, 1], [], []>} : vector<8x64xbf16>, vector<64x128xbf16>, vector<8x128xf32> -> vector<8x128xf32>
    %209 = vector.broadcast %23 : vector<1x128xf32> to vector<8x128xf32>
    %210 = arith.addf %208, %209 : vector<8x128xf32>
    %211 = vector.extract_strided_slice %210 {offsets = [0, 0], sizes = [8, 64], strides = [1, 1]} : vector<8x128xf32> to vector<8x64xf32>
    %212 = arith.negf %211 : vector<8x64xf32>
    %213 = math.exp %212 : vector<8x64xf32>
    %cst_50 = arith.constant 1.000000e+00 : f32
    %214 = vector.broadcast %cst_50 : f32 to vector<8x64xf32>
    %215 = arith.addf %214, %213 : vector<8x64xf32>
    %216 = arith.divf %214, %215 : vector<8x64xf32>
    %217 = vector.extract_strided_slice %210 {offsets = [0, 64], sizes = [8, 32], strides = [1, 1]} : vector<8x128xf32> to vector<8x32xf32>
    %218 = math.tanh %217 : vector<8x32xf32>
    %219 = vector.extract_strided_slice %210 {offsets = [0, 96], sizes = [8, 32], strides = [1, 1]} : vector<8x128xf32> to vector<8x32xf32>
    %220 = arith.negf %219 : vector<8x32xf32>
    %221 = math.exp %220 : vector<8x32xf32>
    %cst_51 = arith.constant 1.000000e+00 : f32
    %222 = vector.broadcast %cst_51 : f32 to vector<8x32xf32>
    %223 = arith.addf %222, %221 : vector<8x32xf32>
    %224 = arith.divf %222, %223 : vector<8x32xf32>
    %225 = vector.extract_strided_slice %216 {offsets = [0, 32], sizes = [8, 32], strides = [1, 1]} : vector<8x64xf32> to vector<8x32xf32>
    %226 = arith.mulf %225, %178 : vector<8x32xf32>
    %227 = vector.extract_strided_slice %216 {offsets = [0, 0], sizes = [8, 32], strides = [1, 1]} : vector<8x64xf32> to vector<8x32xf32>
    %228 = arith.mulf %227, %218 : vector<8x32xf32>
    %229 = arith.addf %226, %228 : vector<8x32xf32>
    %230 = math.tanh %229 : vector<8x32xf32>
    %231 = arith.mulf %224, %230 : vector<8x32xf32>
    %c32 = arith.constant 32 : index
    %c0_52 = arith.constant 0 : index
    %232 = vector.load %arg11[%c32, %c0_52] : memref<128x128xf32, #tpu.memory_space<vmem>>, vector<8x128xf32>
    %233 = arith.truncf %205 : vector<8x32xf32> to vector<8x32xbf16>
    %cst_53 = arith.constant dense<0.000000e+00> : vector<8x128xf32>
    %234 = tpu.matmul %233, %21, %cst_53 {dimension_numbers = #tpu.dot_dimension_numbers<[1], [0], [0], [1], [0, 0, 1, 1], [], []>} : vector<8x32xbf16>, vector<32x128xbf16>, vector<8x128xf32> -> vector<8x128xf32>
    %235 = arith.addf %232, %234 : vector<8x128xf32>
    %236 = vector.extract_strided_slice %235 {offsets = [0, 0], sizes = [8, 64], strides = [1, 1]} : vector<8x128xf32> to vector<8x64xf32>
    %237 = arith.negf %236 : vector<8x64xf32>
    %238 = math.exp %237 : vector<8x64xf32>
    %cst_54 = arith.constant 1.000000e+00 : f32
    %239 = vector.broadcast %cst_54 : f32 to vector<8x64xf32>
    %240 = arith.addf %239, %238 : vector<8x64xf32>
    %241 = arith.divf %239, %240 : vector<8x64xf32>
    %242 = vector.extract_strided_slice %235 {offsets = [0, 64], sizes = [8, 32], strides = [1, 1]} : vector<8x128xf32> to vector<8x32xf32>
    %243 = math.tanh %242 : vector<8x32xf32>
    %244 = vector.extract_strided_slice %235 {offsets = [0, 96], sizes = [8, 32], strides = [1, 1]} : vector<8x128xf32> to vector<8x32xf32>
    %245 = arith.negf %244 : vector<8x32xf32>
    %246 = math.exp %245 : vector<8x32xf32>
    %cst_55 = arith.constant 1.000000e+00 : f32
    %247 = vector.broadcast %cst_55 : f32 to vector<8x32xf32>
    %248 = arith.addf %247, %246 : vector<8x32xf32>
    %249 = arith.divf %247, %248 : vector<8x32xf32>
    %250 = vector.extract_strided_slice %241 {offsets = [0, 32], sizes = [8, 32], strides = [1, 1]} : vector<8x64xf32> to vector<8x32xf32>
    %251 = arith.mulf %250, %203 : vector<8x32xf32>
    %252 = vector.extract_strided_slice %241 {offsets = [0, 0], sizes = [8, 32], strides = [1, 1]} : vector<8x64xf32> to vector<8x32xf32>
    %253 = arith.mulf %252, %243 : vector<8x32xf32>
    %254 = arith.addf %251, %253 : vector<8x32xf32>
    %255 = math.tanh %254 : vector<8x32xf32>
    %256 = arith.mulf %249, %255 : vector<8x32xf32>
    %257 = tpu.concatenate %256, %231 in 1 : vector<8x32xf32>, vector<8x32xf32> -> vector<8x64xf32>
    %258 = arith.truncf %257 : vector<8x64xf32> to vector<8x64xbf16>
    %cst_56 = arith.constant dense<0.000000e+00> : vector<8x128xf32>
    %259 = tpu.matmul %258, %22, %cst_56 {dimension_numbers = #tpu.dot_dimension_numbers<[1], [0], [0], [1], [0, 0, 1, 1], [], []>} : vector<8x64xbf16>, vector<64x128xbf16>, vector<8x128xf32> -> vector<8x128xf32>
    %260 = vector.broadcast %23 : vector<1x128xf32> to vector<8x128xf32>
    %261 = arith.addf %259, %260 : vector<8x128xf32>
    %262 = vector.extract_strided_slice %261 {offsets = [0, 0], sizes = [8, 64], strides = [1, 1]} : vector<8x128xf32> to vector<8x64xf32>
    %263 = arith.negf %262 : vector<8x64xf32>
    %264 = math.exp %263 : vector<8x64xf32>
    %cst_57 = arith.constant 1.000000e+00 : f32
    %265 = vector.broadcast %cst_57 : f32 to vector<8x64xf32>
    %266 = arith.addf %265, %264 : vector<8x64xf32>
    %267 = arith.divf %265, %266 : vector<8x64xf32>
    %268 = vector.extract_strided_slice %261 {offsets = [0, 64], sizes = [8, 32], strides = [1, 1]} : vector<8x128xf32> to vector<8x32xf32>
    %269 = math.tanh %268 : vector<8x32xf32>
    %270 = vector.extract_strided_slice %261 {offsets = [0, 96], sizes = [8, 32], strides = [1, 1]} : vector<8x128xf32> to vector<8x32xf32>
    %271 = arith.negf %270 : vector<8x32xf32>
    %272 = math.exp %271 : vector<8x32xf32>
    %cst_58 = arith.constant 1.000000e+00 : f32
    %273 = vector.broadcast %cst_58 : f32 to vector<8x32xf32>
    %274 = arith.addf %273, %272 : vector<8x32xf32>
    %275 = arith.divf %273, %274 : vector<8x32xf32>
    %276 = vector.extract_strided_slice %267 {offsets = [0, 32], sizes = [8, 32], strides = [1, 1]} : vector<8x64xf32> to vector<8x32xf32>
    %277 = arith.mulf %276, %229 : vector<8x32xf32>
    %278 = vector.extract_strided_slice %267 {offsets = [0, 0], sizes = [8, 32], strides = [1, 1]} : vector<8x64xf32> to vector<8x32xf32>
    %279 = arith.mulf %278, %269 : vector<8x32xf32>
    %280 = arith.addf %277, %279 : vector<8x32xf32>
    %281 = math.tanh %280 : vector<8x32xf32>
    %282 = arith.mulf %275, %281 : vector<8x32xf32>
    %c40 = arith.constant 40 : index
    %c0_59 = arith.constant 0 : index
    %283 = vector.load %arg11[%c40, %c0_59] : memref<128x128xf32, #tpu.memory_space<vmem>>, vector<8x128xf32>
    %284 = arith.truncf %256 : vector<8x32xf32> to vector<8x32xbf16>
    %cst_60 = arith.constant dense<0.000000e+00> : vector<8x128xf32>
    %285 = tpu.matmul %284, %21, %cst_60 {dimension_numbers = #tpu.dot_dimension_numbers<[1], [0], [0], [1], [0, 0, 1, 1], [], []>} : vector<8x32xbf16>, vector<32x128xbf16>, vector<8x128xf32> -> vector<8x128xf32>
    %286 = arith.addf %283, %285 : vector<8x128xf32>
    %287 = vector.extract_strided_slice %286 {offsets = [0, 0], sizes = [8, 64], strides = [1, 1]} : vector<8x128xf32> to vector<8x64xf32>
    %288 = arith.negf %287 : vector<8x64xf32>
    %289 = math.exp %288 : vector<8x64xf32>
    %cst_61 = arith.constant 1.000000e+00 : f32
    %290 = vector.broadcast %cst_61 : f32 to vector<8x64xf32>
    %291 = arith.addf %290, %289 : vector<8x64xf32>
    %292 = arith.divf %290, %291 : vector<8x64xf32>
    %293 = vector.extract_strided_slice %286 {offsets = [0, 64], sizes = [8, 32], strides = [1, 1]} : vector<8x128xf32> to vector<8x32xf32>
    %294 = math.tanh %293 : vector<8x32xf32>
    %295 = vector.extract_strided_slice %286 {offsets = [0, 96], sizes = [8, 32], strides = [1, 1]} : vector<8x128xf32> to vector<8x32xf32>
    %296 = arith.negf %295 : vector<8x32xf32>
    %297 = math.exp %296 : vector<8x32xf32>
    %cst_62 = arith.constant 1.000000e+00 : f32
    %298 = vector.broadcast %cst_62 : f32 to vector<8x32xf32>
    %299 = arith.addf %298, %297 : vector<8x32xf32>
    %300 = arith.divf %298, %299 : vector<8x32xf32>
    %301 = vector.extract_strided_slice %292 {offsets = [0, 32], sizes = [8, 32], strides = [1, 1]} : vector<8x64xf32> to vector<8x32xf32>
    %302 = arith.mulf %301, %254 : vector<8x32xf32>
    %303 = vector.extract_strided_slice %292 {offsets = [0, 0], sizes = [8, 32], strides = [1, 1]} : vector<8x64xf32> to vector<8x32xf32>
    %304 = arith.mulf %303, %294 : vector<8x32xf32>
    %305 = arith.addf %302, %304 : vector<8x32xf32>
    %306 = math.tanh %305 : vector<8x32xf32>
    %307 = arith.mulf %300, %306 : vector<8x32xf32>
    %308 = tpu.concatenate %307, %282 in 1 : vector<8x32xf32>, vector<8x32xf32> -> vector<8x64xf32>
    %309 = arith.truncf %308 : vector<8x64xf32> to vector<8x64xbf16>
    %cst_63 = arith.constant dense<0.000000e+00> : vector<8x128xf32>
    %310 = tpu.matmul %309, %22, %cst_63 {dimension_numbers = #tpu.dot_dimension_numbers<[1], [0], [0], [1], [0, 0, 1, 1], [], []>} : vector<8x64xbf16>, vector<64x128xbf16>, vector<8x128xf32> -> vector<8x128xf32>
    %311 = vector.broadcast %23 : vector<1x128xf32> to vector<8x128xf32>
    %312 = arith.addf %310, %311 : vector<8x128xf32>
    %313 = vector.extract_strided_slice %312 {offsets = [0, 0], sizes = [8, 64], strides = [1, 1]} : vector<8x128xf32> to vector<8x64xf32>
    %314 = arith.negf %313 : vector<8x64xf32>
    %315 = math.exp %314 : vector<8x64xf32>
    %cst_64 = arith.constant 1.000000e+00 : f32
    %316 = vector.broadcast %cst_64 : f32 to vector<8x64xf32>
    %317 = arith.addf %316, %315 : vector<8x64xf32>
    %318 = arith.divf %316, %317 : vector<8x64xf32>
    %319 = vector.extract_strided_slice %312 {offsets = [0, 64], sizes = [8, 32], strides = [1, 1]} : vector<8x128xf32> to vector<8x32xf32>
    %320 = math.tanh %319 : vector<8x32xf32>
    %321 = vector.extract_strided_slice %312 {offsets = [0, 96], sizes = [8, 32], strides = [1, 1]} : vector<8x128xf32> to vector<8x32xf32>
    %322 = arith.negf %321 : vector<8x32xf32>
    %323 = math.exp %322 : vector<8x32xf32>
    %cst_65 = arith.constant 1.000000e+00 : f32
    %324 = vector.broadcast %cst_65 : f32 to vector<8x32xf32>
    %325 = arith.addf %324, %323 : vector<8x32xf32>
    %326 = arith.divf %324, %325 : vector<8x32xf32>
    %327 = vector.extract_strided_slice %318 {offsets = [0, 32], sizes = [8, 32], strides = [1, 1]} : vector<8x64xf32> to vector<8x32xf32>
    %328 = arith.mulf %327, %280 : vector<8x32xf32>
    %329 = vector.extract_strided_slice %318 {offsets = [0, 0], sizes = [8, 32], strides = [1, 1]} : vector<8x64xf32> to vector<8x32xf32>
    %330 = arith.mulf %329, %320 : vector<8x32xf32>
    %331 = arith.addf %328, %330 : vector<8x32xf32>
    %332 = math.tanh %331 : vector<8x32xf32>
    %333 = arith.mulf %326, %332 : vector<8x32xf32>
    %c48 = arith.constant 48 : index
    %c0_66 = arith.constant 0 : index
    %334 = vector.load %arg11[%c48, %c0_66] : memref<128x128xf32, #tpu.memory_space<vmem>>, vector<8x128xf32>
    %335 = arith.truncf %307 : vector<8x32xf32> to vector<8x32xbf16>
    %cst_67 = arith.constant dense<0.000000e+00> : vector<8x128xf32>
    %336 = tpu.matmul %335, %21, %cst_67 {dimension_numbers = #tpu.dot_dimension_numbers<[1], [0], [0], [1], [0, 0, 1, 1], [], []>} : vector<8x32xbf16>, vector<32x128xbf16>, vector<8x128xf32> -> vector<8x128xf32>
    %337 = arith.addf %334, %336 : vector<8x128xf32>
    %338 = vector.extract_strided_slice %337 {offsets = [0, 0], sizes = [8, 64], strides = [1, 1]} : vector<8x128xf32> to vector<8x64xf32>
    %339 = arith.negf %338 : vector<8x64xf32>
    %340 = math.exp %339 : vector<8x64xf32>
    %cst_68 = arith.constant 1.000000e+00 : f32
    %341 = vector.broadcast %cst_68 : f32 to vector<8x64xf32>
    %342 = arith.addf %341, %340 : vector<8x64xf32>
    %343 = arith.divf %341, %342 : vector<8x64xf32>
    %344 = vector.extract_strided_slice %337 {offsets = [0, 64], sizes = [8, 32], strides = [1, 1]} : vector<8x128xf32> to vector<8x32xf32>
    %345 = math.tanh %344 : vector<8x32xf32>
    %346 = vector.extract_strided_slice %337 {offsets = [0, 96], sizes = [8, 32], strides = [1, 1]} : vector<8x128xf32> to vector<8x32xf32>
    %347 = arith.negf %346 : vector<8x32xf32>
    %348 = math.exp %347 : vector<8x32xf32>
    %cst_69 = arith.constant 1.000000e+00 : f32
    %349 = vector.broadcast %cst_69 : f32 to vector<8x32xf32>
    %350 = arith.addf %349, %348 : vector<8x32xf32>
    %351 = arith.divf %349, %350 : vector<8x32xf32>
    %352 = vector.extract_strided_slice %343 {offsets = [0, 32], sizes = [8, 32], strides = [1, 1]} : vector<8x64xf32> to vector<8x32xf32>
    %353 = arith.mulf %352, %305 : vector<8x32xf32>
    %354 = vector.extract_strided_slice %343 {offsets = [0, 0], sizes = [8, 32], strides = [1, 1]} : vector<8x64xf32> to vector<8x32xf32>
    %355 = arith.mulf %354, %345 : vector<8x32xf32>
    %356 = arith.addf %353, %355 : vector<8x32xf32>
    %357 = math.tanh %356 : vector<8x32xf32>
    %358 = arith.mulf %351, %357 : vector<8x32xf32>
    %359 = tpu.concatenate %358, %333 in 1 : vector<8x32xf32>, vector<8x32xf32> -> vector<8x64xf32>
    %360 = arith.truncf %359 : vector<8x64xf32> to vector<8x64xbf16>
    %cst_70 = arith.constant dense<0.000000e+00> : vector<8x128xf32>
    %361 = tpu.matmul %360, %22, %cst_70 {dimension_numbers = #tpu.dot_dimension_numbers<[1], [0], [0], [1], [0, 0, 1, 1], [], []>} : vector<8x64xbf16>, vector<64x128xbf16>, vector<8x128xf32> -> vector<8x128xf32>
    %362 = vector.broadcast %23 : vector<1x128xf32> to vector<8x128xf32>
    %363 = arith.addf %361, %362 : vector<8x128xf32>
    %364 = vector.extract_strided_slice %363 {offsets = [0, 0], sizes = [8, 64], strides = [1, 1]} : vector<8x128xf32> to vector<8x64xf32>
    %365 = arith.negf %364 : vector<8x64xf32>
    %366 = math.exp %365 : vector<8x64xf32>
    %cst_71 = arith.constant 1.000000e+00 : f32
    %367 = vector.broadcast %cst_71 : f32 to vector<8x64xf32>
    %368 = arith.addf %367, %366 : vector<8x64xf32>
    %369 = arith.divf %367, %368 : vector<8x64xf32>
    %370 = vector.extract_strided_slice %363 {offsets = [0, 64], sizes = [8, 32], strides = [1, 1]} : vector<8x128xf32> to vector<8x32xf32>
    %371 = math.tanh %370 : vector<8x32xf32>
    %372 = vector.extract_strided_slice %363 {offsets = [0, 96], sizes = [8, 32], strides = [1, 1]} : vector<8x128xf32> to vector<8x32xf32>
    %373 = arith.negf %372 : vector<8x32xf32>
    %374 = math.exp %373 : vector<8x32xf32>
    %cst_72 = arith.constant 1.000000e+00 : f32
    %375 = vector.broadcast %cst_72 : f32 to vector<8x32xf32>
    %376 = arith.addf %375, %374 : vector<8x32xf32>
    %377 = arith.divf %375, %376 : vector<8x32xf32>
    %378 = vector.extract_strided_slice %369 {offsets = [0, 32], sizes = [8, 32], strides = [1, 1]} : vector<8x64xf32> to vector<8x32xf32>
    %379 = arith.mulf %378, %331 : vector<8x32xf32>
    %380 = vector.extract_strided_slice %369 {offsets = [0, 0], sizes = [8, 32], strides = [1, 1]} : vector<8x64xf32> to vector<8x32xf32>
    %381 = arith.mulf %380, %371 : vector<8x32xf32>
    %382 = arith.addf %379, %381 : vector<8x32xf32>
    %383 = math.tanh %382 : vector<8x32xf32>
    %384 = arith.mulf %377, %383 : vector<8x32xf32>
    %c56 = arith.constant 56 : index
    %c0_73 = arith.constant 0 : index
    %385 = vector.load %arg11[%c56, %c0_73] : memref<128x128xf32, #tpu.memory_space<vmem>>, vector<8x128xf32>
    %386 = arith.truncf %358 : vector<8x32xf32> to vector<8x32xbf16>
    %cst_74 = arith.constant dense<0.000000e+00> : vector<8x128xf32>
    %387 = tpu.matmul %386, %21, %cst_74 {dimension_numbers = #tpu.dot_dimension_numbers<[1], [0], [0], [1], [0, 0, 1, 1], [], []>} : vector<8x32xbf16>, vector<32x128xbf16>, vector<8x128xf32> -> vector<8x128xf32>
    %388 = arith.addf %385, %387 : vector<8x128xf32>
    %389 = vector.extract_strided_slice %388 {offsets = [0, 0], sizes = [8, 64], strides = [1, 1]} : vector<8x128xf32> to vector<8x64xf32>
    %390 = arith.negf %389 : vector<8x64xf32>
    %391 = math.exp %390 : vector<8x64xf32>
    %cst_75 = arith.constant 1.000000e+00 : f32
    %392 = vector.broadcast %cst_75 : f32 to vector<8x64xf32>
    %393 = arith.addf %392, %391 : vector<8x64xf32>
    %394 = arith.divf %392, %393 : vector<8x64xf32>
    %395 = vector.extract_strided_slice %388 {offsets = [0, 64], sizes = [8, 32], strides = [1, 1]} : vector<8x128xf32> to vector<8x32xf32>
    %396 = math.tanh %395 : vector<8x32xf32>
    %397 = vector.extract_strided_slice %388 {offsets = [0, 96], sizes = [8, 32], strides = [1, 1]} : vector<8x128xf32> to vector<8x32xf32>
    %398 = arith.negf %397 : vector<8x32xf32>
    %399 = math.exp %398 : vector<8x32xf32>
    %cst_76 = arith.constant 1.000000e+00 : f32
    %400 = vector.broadcast %cst_76 : f32 to vector<8x32xf32>
    %401 = arith.addf %400, %399 : vector<8x32xf32>
    %402 = arith.divf %400, %401 : vector<8x32xf32>
    %403 = vector.extract_strided_slice %394 {offsets = [0, 32], sizes = [8, 32], strides = [1, 1]} : vector<8x64xf32> to vector<8x32xf32>
    %404 = arith.mulf %403, %356 : vector<8x32xf32>
    %405 = vector.extract_strided_slice %394 {offsets = [0, 0], sizes = [8, 32], strides = [1, 1]} : vector<8x64xf32> to vector<8x32xf32>
    %406 = arith.mulf %405, %396 : vector<8x32xf32>
    %407 = arith.addf %404, %406 : vector<8x32xf32>
    %408 = math.tanh %407 : vector<8x32xf32>
    %409 = arith.mulf %402, %408 : vector<8x32xf32>
    %410 = tpu.concatenate %409, %384 in 1 : vector<8x32xf32>, vector<8x32xf32> -> vector<8x64xf32>
    %411 = arith.truncf %410 : vector<8x64xf32> to vector<8x64xbf16>
    %cst_77 = arith.constant dense<0.000000e+00> : vector<8x128xf32>
    %412 = tpu.matmul %411, %22, %cst_77 {dimension_numbers = #tpu.dot_dimension_numbers<[1], [0], [0], [1], [0, 0, 1, 1], [], []>} : vector<8x64xbf16>, vector<64x128xbf16>, vector<8x128xf32> -> vector<8x128xf32>
    %413 = vector.broadcast %23 : vector<1x128xf32> to vector<8x128xf32>
    %414 = arith.addf %412, %413 : vector<8x128xf32>
    %415 = vector.extract_strided_slice %414 {offsets = [0, 0], sizes = [8, 64], strides = [1, 1]} : vector<8x128xf32> to vector<8x64xf32>
    %416 = arith.negf %415 : vector<8x64xf32>
    %417 = math.exp %416 : vector<8x64xf32>
    %cst_78 = arith.constant 1.000000e+00 : f32
    %418 = vector.broadcast %cst_78 : f32 to vector<8x64xf32>
    %419 = arith.addf %418, %417 : vector<8x64xf32>
    %420 = arith.divf %418, %419 : vector<8x64xf32>
    %421 = vector.extract_strided_slice %414 {offsets = [0, 64], sizes = [8, 32], strides = [1, 1]} : vector<8x128xf32> to vector<8x32xf32>
    %422 = math.tanh %421 : vector<8x32xf32>
    %423 = vector.extract_strided_slice %414 {offsets = [0, 96], sizes = [8, 32], strides = [1, 1]} : vector<8x128xf32> to vector<8x32xf32>
    %424 = arith.negf %423 : vector<8x32xf32>
    %425 = math.exp %424 : vector<8x32xf32>
    %cst_79 = arith.constant 1.000000e+00 : f32
    %426 = vector.broadcast %cst_79 : f32 to vector<8x32xf32>
    %427 = arith.addf %426, %425 : vector<8x32xf32>
    %428 = arith.divf %426, %427 : vector<8x32xf32>
    %429 = vector.extract_strided_slice %420 {offsets = [0, 32], sizes = [8, 32], strides = [1, 1]} : vector<8x64xf32> to vector<8x32xf32>
    %430 = arith.mulf %429, %382 : vector<8x32xf32>
    %431 = vector.extract_strided_slice %420 {offsets = [0, 0], sizes = [8, 32], strides = [1, 1]} : vector<8x64xf32> to vector<8x32xf32>
    %432 = arith.mulf %431, %422 : vector<8x32xf32>
    %433 = arith.addf %430, %432 : vector<8x32xf32>
    %434 = math.tanh %433 : vector<8x32xf32>
    %435 = arith.mulf %428, %434 : vector<8x32xf32>
    %c64 = arith.constant 64 : index
    %c0_80 = arith.constant 0 : index
    %436 = vector.load %arg11[%c64, %c0_80] : memref<128x128xf32, #tpu.memory_space<vmem>>, vector<8x128xf32>
    %437 = arith.truncf %409 : vector<8x32xf32> to vector<8x32xbf16>
    %cst_81 = arith.constant dense<0.000000e+00> : vector<8x128xf32>
    %438 = tpu.matmul %437, %21, %cst_81 {dimension_numbers = #tpu.dot_dimension_numbers<[1], [0], [0], [1], [0, 0, 1, 1], [], []>} : vector<8x32xbf16>, vector<32x128xbf16>, vector<8x128xf32> -> vector<8x128xf32>
    %439 = arith.addf %436, %438 : vector<8x128xf32>
    %440 = vector.extract_strided_slice %439 {offsets = [0, 0], sizes = [8, 64], strides = [1, 1]} : vector<8x128xf32> to vector<8x64xf32>
    %441 = arith.negf %440 : vector<8x64xf32>
    %442 = math.exp %441 : vector<8x64xf32>
    %cst_82 = arith.constant 1.000000e+00 : f32
    %443 = vector.broadcast %cst_82 : f32 to vector<8x64xf32>
    %444 = arith.addf %443, %442 : vector<8x64xf32>
    %445 = arith.divf %443, %444 : vector<8x64xf32>
    %446 = vector.extract_strided_slice %439 {offsets = [0, 64], sizes = [8, 32], strides = [1, 1]} : vector<8x128xf32> to vector<8x32xf32>
    %447 = math.tanh %446 : vector<8x32xf32>
    %448 = vector.extract_strided_slice %439 {offsets = [0, 96], sizes = [8, 32], strides = [1, 1]} : vector<8x128xf32> to vector<8x32xf32>
    %449 = arith.negf %448 : vector<8x32xf32>
    %450 = math.exp %449 : vector<8x32xf32>
    %cst_83 = arith.constant 1.000000e+00 : f32
    %451 = vector.broadcast %cst_83 : f32 to vector<8x32xf32>
    %452 = arith.addf %451, %450 : vector<8x32xf32>
    %453 = arith.divf %451, %452 : vector<8x32xf32>
    %454 = vector.extract_strided_slice %445 {offsets = [0, 32], sizes = [8, 32], strides = [1, 1]} : vector<8x64xf32> to vector<8x32xf32>
    %455 = arith.mulf %454, %407 : vector<8x32xf32>
    %456 = vector.extract_strided_slice %445 {offsets = [0, 0], sizes = [8, 32], strides = [1, 1]} : vector<8x64xf32> to vector<8x32xf32>
    %457 = arith.mulf %456, %447 : vector<8x32xf32>
    %458 = arith.addf %455, %457 : vector<8x32xf32>
    %459 = math.tanh %458 : vector<8x32xf32>
    %460 = arith.mulf %453, %459 : vector<8x32xf32>
    %461 = tpu.concatenate %460, %435 in 1 : vector<8x32xf32>, vector<8x32xf32> -> vector<8x64xf32>
    %462 = arith.truncf %461 : vector<8x64xf32> to vector<8x64xbf16>
    %cst_84 = arith.constant dense<0.000000e+00> : vector<8x128xf32>
    %463 = tpu.matmul %462, %22, %cst_84 {dimension_numbers = #tpu.dot_dimension_numbers<[1], [0], [0], [1], [0, 0, 1, 1], [], []>} : vector<8x64xbf16>, vector<64x128xbf16>, vector<8x128xf32> -> vector<8x128xf32>
    %464 = vector.broadcast %23 : vector<1x128xf32> to vector<8x128xf32>
    %465 = arith.addf %463, %464 : vector<8x128xf32>
    %466 = vector.extract_strided_slice %465 {offsets = [0, 0], sizes = [8, 64], strides = [1, 1]} : vector<8x128xf32> to vector<8x64xf32>
    %467 = arith.negf %466 : vector<8x64xf32>
    %468 = math.exp %467 : vector<8x64xf32>
    %cst_85 = arith.constant 1.000000e+00 : f32
    %469 = vector.broadcast %cst_85 : f32 to vector<8x64xf32>
    %470 = arith.addf %469, %468 : vector<8x64xf32>
    %471 = arith.divf %469, %470 : vector<8x64xf32>
    %472 = vector.extract_strided_slice %465 {offsets = [0, 64], sizes = [8, 32], strides = [1, 1]} : vector<8x128xf32> to vector<8x32xf32>
    %473 = math.tanh %472 : vector<8x32xf32>
    %474 = vector.extract_strided_slice %465 {offsets = [0, 96], sizes = [8, 32], strides = [1, 1]} : vector<8x128xf32> to vector<8x32xf32>
    %475 = arith.negf %474 : vector<8x32xf32>
    %476 = math.exp %475 : vector<8x32xf32>
    %cst_86 = arith.constant 1.000000e+00 : f32
    %477 = vector.broadcast %cst_86 : f32 to vector<8x32xf32>
    %478 = arith.addf %477, %476 : vector<8x32xf32>
    %479 = arith.divf %477, %478 : vector<8x32xf32>
    %480 = vector.extract_strided_slice %471 {offsets = [0, 32], sizes = [8, 32], strides = [1, 1]} : vector<8x64xf32> to vector<8x32xf32>
    %481 = arith.mulf %480, %433 : vector<8x32xf32>
    %482 = vector.extract_strided_slice %471 {offsets = [0, 0], sizes = [8, 32], strides = [1, 1]} : vector<8x64xf32> to vector<8x32xf32>
    %483 = arith.mulf %482, %473 : vector<8x32xf32>
    %484 = arith.addf %481, %483 : vector<8x32xf32>
    %485 = math.tanh %484 : vector<8x32xf32>
    %486 = arith.mulf %479, %485 : vector<8x32xf32>
    %c72 = arith.constant 72 : index
    %c0_87 = arith.constant 0 : index
    %487 = vector.load %arg11[%c72, %c0_87] : memref<128x128xf32, #tpu.memory_space<vmem>>, vector<8x128xf32>
    %488 = arith.truncf %460 : vector<8x32xf32> to vector<8x32xbf16>
    %cst_88 = arith.constant dense<0.000000e+00> : vector<8x128xf32>
    %489 = tpu.matmul %488, %21, %cst_88 {dimension_numbers = #tpu.dot_dimension_numbers<[1], [0], [0], [1], [0, 0, 1, 1], [], []>} : vector<8x32xbf16>, vector<32x128xbf16>, vector<8x128xf32> -> vector<8x128xf32>
    %490 = arith.addf %487, %489 : vector<8x128xf32>
    %491 = vector.extract_strided_slice %490 {offsets = [0, 0], sizes = [8, 64], strides = [1, 1]} : vector<8x128xf32> to vector<8x64xf32>
    %492 = arith.negf %491 : vector<8x64xf32>
    %493 = math.exp %492 : vector<8x64xf32>
    %cst_89 = arith.constant 1.000000e+00 : f32
    %494 = vector.broadcast %cst_89 : f32 to vector<8x64xf32>
    %495 = arith.addf %494, %493 : vector<8x64xf32>
    %496 = arith.divf %494, %495 : vector<8x64xf32>
    %497 = vector.extract_strided_slice %490 {offsets = [0, 64], sizes = [8, 32], strides = [1, 1]} : vector<8x128xf32> to vector<8x32xf32>
    %498 = math.tanh %497 : vector<8x32xf32>
    %499 = vector.extract_strided_slice %490 {offsets = [0, 96], sizes = [8, 32], strides = [1, 1]} : vector<8x128xf32> to vector<8x32xf32>
    %500 = arith.negf %499 : vector<8x32xf32>
    %501 = math.exp %500 : vector<8x32xf32>
    %cst_90 = arith.constant 1.000000e+00 : f32
    %502 = vector.broadcast %cst_90 : f32 to vector<8x32xf32>
    %503 = arith.addf %502, %501 : vector<8x32xf32>
    %504 = arith.divf %502, %503 : vector<8x32xf32>
    %505 = vector.extract_strided_slice %496 {offsets = [0, 32], sizes = [8, 32], strides = [1, 1]} : vector<8x64xf32> to vector<8x32xf32>
    %506 = arith.mulf %505, %458 : vector<8x32xf32>
    %507 = vector.extract_strided_slice %496 {offsets = [0, 0], sizes = [8, 32], strides = [1, 1]} : vector<8x64xf32> to vector<8x32xf32>
    %508 = arith.mulf %507, %498 : vector<8x32xf32>
    %509 = arith.addf %506, %508 : vector<8x32xf32>
    %510 = math.tanh %509 : vector<8x32xf32>
    %511 = arith.mulf %504, %510 : vector<8x32xf32>
    %512 = tpu.concatenate %511, %486 in 1 : vector<8x32xf32>, vector<8x32xf32> -> vector<8x64xf32>
    %513 = arith.truncf %512 : vector<8x64xf32> to vector<8x64xbf16>
    %cst_91 = arith.constant dense<0.000000e+00> : vector<8x128xf32>
    %514 = tpu.matmul %513, %22, %cst_91 {dimension_numbers = #tpu.dot_dimension_numbers<[1], [0], [0], [1], [0, 0, 1, 1], [], []>} : vector<8x64xbf16>, vector<64x128xbf16>, vector<8x128xf32> -> vector<8x128xf32>
    %515 = vector.broadcast %23 : vector<1x128xf32> to vector<8x128xf32>
    %516 = arith.addf %514, %515 : vector<8x128xf32>
    %517 = vector.extract_strided_slice %516 {offsets = [0, 0], sizes = [8, 64], strides = [1, 1]} : vector<8x128xf32> to vector<8x64xf32>
    %518 = arith.negf %517 : vector<8x64xf32>
    %519 = math.exp %518 : vector<8x64xf32>
    %cst_92 = arith.constant 1.000000e+00 : f32
    %520 = vector.broadcast %cst_92 : f32 to vector<8x64xf32>
    %521 = arith.addf %520, %519 : vector<8x64xf32>
    %522 = arith.divf %520, %521 : vector<8x64xf32>
    %523 = vector.extract_strided_slice %516 {offsets = [0, 64], sizes = [8, 32], strides = [1, 1]} : vector<8x128xf32> to vector<8x32xf32>
    %524 = math.tanh %523 : vector<8x32xf32>
    %525 = vector.extract_strided_slice %516 {offsets = [0, 96], sizes = [8, 32], strides = [1, 1]} : vector<8x128xf32> to vector<8x32xf32>
    %526 = arith.negf %525 : vector<8x32xf32>
    %527 = math.exp %526 : vector<8x32xf32>
    %cst_93 = arith.constant 1.000000e+00 : f32
    %528 = vector.broadcast %cst_93 : f32 to vector<8x32xf32>
    %529 = arith.addf %528, %527 : vector<8x32xf32>
    %530 = arith.divf %528, %529 : vector<8x32xf32>
    %531 = vector.extract_strided_slice %522 {offsets = [0, 32], sizes = [8, 32], strides = [1, 1]} : vector<8x64xf32> to vector<8x32xf32>
    %532 = arith.mulf %531, %484 : vector<8x32xf32>
    %533 = vector.extract_strided_slice %522 {offsets = [0, 0], sizes = [8, 32], strides = [1, 1]} : vector<8x64xf32> to vector<8x32xf32>
    %534 = arith.mulf %533, %524 : vector<8x32xf32>
    %535 = arith.addf %532, %534 : vector<8x32xf32>
    %536 = math.tanh %535 : vector<8x32xf32>
    %537 = arith.mulf %530, %536 : vector<8x32xf32>
    %c80 = arith.constant 80 : index
    %c0_94 = arith.constant 0 : index
    %538 = vector.load %arg11[%c80, %c0_94] : memref<128x128xf32, #tpu.memory_space<vmem>>, vector<8x128xf32>
    %539 = arith.truncf %511 : vector<8x32xf32> to vector<8x32xbf16>
    %cst_95 = arith.constant dense<0.000000e+00> : vector<8x128xf32>
    %540 = tpu.matmul %539, %21, %cst_95 {dimension_numbers = #tpu.dot_dimension_numbers<[1], [0], [0], [1], [0, 0, 1, 1], [], []>} : vector<8x32xbf16>, vector<32x128xbf16>, vector<8x128xf32> -> vector<8x128xf32>
    %541 = arith.addf %538, %540 : vector<8x128xf32>
    %542 = vector.extract_strided_slice %541 {offsets = [0, 0], sizes = [8, 64], strides = [1, 1]} : vector<8x128xf32> to vector<8x64xf32>
    %543 = arith.negf %542 : vector<8x64xf32>
    %544 = math.exp %543 : vector<8x64xf32>
    %cst_96 = arith.constant 1.000000e+00 : f32
    %545 = vector.broadcast %cst_96 : f32 to vector<8x64xf32>
    %546 = arith.addf %545, %544 : vector<8x64xf32>
    %547 = arith.divf %545, %546 : vector<8x64xf32>
    %548 = vector.extract_strided_slice %541 {offsets = [0, 64], sizes = [8, 32], strides = [1, 1]} : vector<8x128xf32> to vector<8x32xf32>
    %549 = math.tanh %548 : vector<8x32xf32>
    %550 = vector.extract_strided_slice %541 {offsets = [0, 96], sizes = [8, 32], strides = [1, 1]} : vector<8x128xf32> to vector<8x32xf32>
    %551 = arith.negf %550 : vector<8x32xf32>
    %552 = math.exp %551 : vector<8x32xf32>
    %cst_97 = arith.constant 1.000000e+00 : f32
    %553 = vector.broadcast %cst_97 : f32 to vector<8x32xf32>
    %554 = arith.addf %553, %552 : vector<8x32xf32>
    %555 = arith.divf %553, %554 : vector<8x32xf32>
    %556 = vector.extract_strided_slice %547 {offsets = [0, 32], sizes = [8, 32], strides = [1, 1]} : vector<8x64xf32> to vector<8x32xf32>
    %557 = arith.mulf %556, %509 : vector<8x32xf32>
    %558 = vector.extract_strided_slice %547 {offsets = [0, 0], sizes = [8, 32], strides = [1, 1]} : vector<8x64xf32> to vector<8x32xf32>
    %559 = arith.mulf %558, %549 : vector<8x32xf32>
    %560 = arith.addf %557, %559 : vector<8x32xf32>
    %561 = math.tanh %560 : vector<8x32xf32>
    %562 = arith.mulf %555, %561 : vector<8x32xf32>
    %563 = tpu.concatenate %562, %537 in 1 : vector<8x32xf32>, vector<8x32xf32> -> vector<8x64xf32>
    %564 = arith.truncf %563 : vector<8x64xf32> to vector<8x64xbf16>
    %cst_98 = arith.constant dense<0.000000e+00> : vector<8x128xf32>
    %565 = tpu.matmul %564, %22, %cst_98 {dimension_numbers = #tpu.dot_dimension_numbers<[1], [0], [0], [1], [0, 0, 1, 1], [], []>} : vector<8x64xbf16>, vector<64x128xbf16>, vector<8x128xf32> -> vector<8x128xf32>
    %566 = vector.broadcast %23 : vector<1x128xf32> to vector<8x128xf32>
    %567 = arith.addf %565, %566 : vector<8x128xf32>
    %568 = vector.extract_strided_slice %567 {offsets = [0, 0], sizes = [8, 64], strides = [1, 1]} : vector<8x128xf32> to vector<8x64xf32>
    %569 = arith.negf %568 : vector<8x64xf32>
    %570 = math.exp %569 : vector<8x64xf32>
    %cst_99 = arith.constant 1.000000e+00 : f32
    %571 = vector.broadcast %cst_99 : f32 to vector<8x64xf32>
    %572 = arith.addf %571, %570 : vector<8x64xf32>
    %573 = arith.divf %571, %572 : vector<8x64xf32>
    %574 = vector.extract_strided_slice %567 {offsets = [0, 64], sizes = [8, 32], strides = [1, 1]} : vector<8x128xf32> to vector<8x32xf32>
    %575 = math.tanh %574 : vector<8x32xf32>
    %576 = vector.extract_strided_slice %567 {offsets = [0, 96], sizes = [8, 32], strides = [1, 1]} : vector<8x128xf32> to vector<8x32xf32>
    %577 = arith.negf %576 : vector<8x32xf32>
    %578 = math.exp %577 : vector<8x32xf32>
    %cst_100 = arith.constant 1.000000e+00 : f32
    %579 = vector.broadcast %cst_100 : f32 to vector<8x32xf32>
    %580 = arith.addf %579, %578 : vector<8x32xf32>
    %581 = arith.divf %579, %580 : vector<8x32xf32>
    %582 = vector.extract_strided_slice %573 {offsets = [0, 32], sizes = [8, 32], strides = [1, 1]} : vector<8x64xf32> to vector<8x32xf32>
    %583 = arith.mulf %582, %535 : vector<8x32xf32>
    %584 = vector.extract_strided_slice %573 {offsets = [0, 0], sizes = [8, 32], strides = [1, 1]} : vector<8x64xf32> to vector<8x32xf32>
    %585 = arith.mulf %584, %575 : vector<8x32xf32>
    %586 = arith.addf %583, %585 : vector<8x32xf32>
    %587 = math.tanh %586 : vector<8x32xf32>
    %588 = arith.mulf %581, %587 : vector<8x32xf32>
    %c88 = arith.constant 88 : index
    %c0_101 = arith.constant 0 : index
    %589 = vector.load %arg11[%c88, %c0_101] : memref<128x128xf32, #tpu.memory_space<vmem>>, vector<8x128xf32>
    %590 = arith.truncf %562 : vector<8x32xf32> to vector<8x32xbf16>
    %cst_102 = arith.constant dense<0.000000e+00> : vector<8x128xf32>
    %591 = tpu.matmul %590, %21, %cst_102 {dimension_numbers = #tpu.dot_dimension_numbers<[1], [0], [0], [1], [0, 0, 1, 1], [], []>} : vector<8x32xbf16>, vector<32x128xbf16>, vector<8x128xf32> -> vector<8x128xf32>
    %592 = arith.addf %589, %591 : vector<8x128xf32>
    %593 = vector.extract_strided_slice %592 {offsets = [0, 0], sizes = [8, 64], strides = [1, 1]} : vector<8x128xf32> to vector<8x64xf32>
    %594 = arith.negf %593 : vector<8x64xf32>
    %595 = math.exp %594 : vector<8x64xf32>
    %cst_103 = arith.constant 1.000000e+00 : f32
    %596 = vector.broadcast %cst_103 : f32 to vector<8x64xf32>
    %597 = arith.addf %596, %595 : vector<8x64xf32>
    %598 = arith.divf %596, %597 : vector<8x64xf32>
    %599 = vector.extract_strided_slice %592 {offsets = [0, 64], sizes = [8, 32], strides = [1, 1]} : vector<8x128xf32> to vector<8x32xf32>
    %600 = math.tanh %599 : vector<8x32xf32>
    %601 = vector.extract_strided_slice %592 {offsets = [0, 96], sizes = [8, 32], strides = [1, 1]} : vector<8x128xf32> to vector<8x32xf32>
    %602 = arith.negf %601 : vector<8x32xf32>
    %603 = math.exp %602 : vector<8x32xf32>
    %cst_104 = arith.constant 1.000000e+00 : f32
    %604 = vector.broadcast %cst_104 : f32 to vector<8x32xf32>
    %605 = arith.addf %604, %603 : vector<8x32xf32>
    %606 = arith.divf %604, %605 : vector<8x32xf32>
    %607 = vector.extract_strided_slice %598 {offsets = [0, 32], sizes = [8, 32], strides = [1, 1]} : vector<8x64xf32> to vector<8x32xf32>
    %608 = arith.mulf %607, %560 : vector<8x32xf32>
    %609 = vector.extract_strided_slice %598 {offsets = [0, 0], sizes = [8, 32], strides = [1, 1]} : vector<8x64xf32> to vector<8x32xf32>
    %610 = arith.mulf %609, %600 : vector<8x32xf32>
    %611 = arith.addf %608, %610 : vector<8x32xf32>
    %612 = math.tanh %611 : vector<8x32xf32>
    %613 = arith.mulf %606, %612 : vector<8x32xf32>
    %614 = tpu.concatenate %613, %588 in 1 : vector<8x32xf32>, vector<8x32xf32> -> vector<8x64xf32>
    %615 = arith.truncf %614 : vector<8x64xf32> to vector<8x64xbf16>
    %cst_105 = arith.constant dense<0.000000e+00> : vector<8x128xf32>
    %616 = tpu.matmul %615, %22, %cst_105 {dimension_numbers = #tpu.dot_dimension_numbers<[1], [0], [0], [1], [0, 0, 1, 1], [], []>} : vector<8x64xbf16>, vector<64x128xbf16>, vector<8x128xf32> -> vector<8x128xf32>
    %617 = vector.broadcast %23 : vector<1x128xf32> to vector<8x128xf32>
    %618 = arith.addf %616, %617 : vector<8x128xf32>
    %619 = vector.extract_strided_slice %618 {offsets = [0, 0], sizes = [8, 64], strides = [1, 1]} : vector<8x128xf32> to vector<8x64xf32>
    %620 = arith.negf %619 : vector<8x64xf32>
    %621 = math.exp %620 : vector<8x64xf32>
    %cst_106 = arith.constant 1.000000e+00 : f32
    %622 = vector.broadcast %cst_106 : f32 to vector<8x64xf32>
    %623 = arith.addf %622, %621 : vector<8x64xf32>
    %624 = arith.divf %622, %623 : vector<8x64xf32>
    %625 = vector.extract_strided_slice %618 {offsets = [0, 64], sizes = [8, 32], strides = [1, 1]} : vector<8x128xf32> to vector<8x32xf32>
    %626 = math.tanh %625 : vector<8x32xf32>
    %627 = vector.extract_strided_slice %618 {offsets = [0, 96], sizes = [8, 32], strides = [1, 1]} : vector<8x128xf32> to vector<8x32xf32>
    %628 = arith.negf %627 : vector<8x32xf32>
    %629 = math.exp %628 : vector<8x32xf32>
    %cst_107 = arith.constant 1.000000e+00 : f32
    %630 = vector.broadcast %cst_107 : f32 to vector<8x32xf32>
    %631 = arith.addf %630, %629 : vector<8x32xf32>
    %632 = arith.divf %630, %631 : vector<8x32xf32>
    %633 = vector.extract_strided_slice %624 {offsets = [0, 32], sizes = [8, 32], strides = [1, 1]} : vector<8x64xf32> to vector<8x32xf32>
    %634 = arith.mulf %633, %586 : vector<8x32xf32>
    %635 = vector.extract_strided_slice %624 {offsets = [0, 0], sizes = [8, 32], strides = [1, 1]} : vector<8x64xf32> to vector<8x32xf32>
    %636 = arith.mulf %635, %626 : vector<8x32xf32>
    %637 = arith.addf %634, %636 : vector<8x32xf32>
    %638 = math.tanh %637 : vector<8x32xf32>
    %639 = arith.mulf %632, %638 : vector<8x32xf32>
    %c96 = arith.constant 96 : index
    %c0_108 = arith.constant 0 : index
    %640 = vector.load %arg11[%c96, %c0_108] : memref<128x128xf32, #tpu.memory_space<vmem>>, vector<8x128xf32>
    %641 = arith.truncf %613 : vector<8x32xf32> to vector<8x32xbf16>
    %cst_109 = arith.constant dense<0.000000e+00> : vector<8x128xf32>
    %642 = tpu.matmul %641, %21, %cst_109 {dimension_numbers = #tpu.dot_dimension_numbers<[1], [0], [0], [1], [0, 0, 1, 1], [], []>} : vector<8x32xbf16>, vector<32x128xbf16>, vector<8x128xf32> -> vector<8x128xf32>
    %643 = arith.addf %640, %642 : vector<8x128xf32>
    %644 = vector.extract_strided_slice %643 {offsets = [0, 0], sizes = [8, 64], strides = [1, 1]} : vector<8x128xf32> to vector<8x64xf32>
    %645 = arith.negf %644 : vector<8x64xf32>
    %646 = math.exp %645 : vector<8x64xf32>
    %cst_110 = arith.constant 1.000000e+00 : f32
    %647 = vector.broadcast %cst_110 : f32 to vector<8x64xf32>
    %648 = arith.addf %647, %646 : vector<8x64xf32>
    %649 = arith.divf %647, %648 : vector<8x64xf32>
    %650 = vector.extract_strided_slice %643 {offsets = [0, 64], sizes = [8, 32], strides = [1, 1]} : vector<8x128xf32> to vector<8x32xf32>
    %651 = math.tanh %650 : vector<8x32xf32>
    %652 = vector.extract_strided_slice %643 {offsets = [0, 96], sizes = [8, 32], strides = [1, 1]} : vector<8x128xf32> to vector<8x32xf32>
    %653 = arith.negf %652 : vector<8x32xf32>
    %654 = math.exp %653 : vector<8x32xf32>
    %cst_111 = arith.constant 1.000000e+00 : f32
    %655 = vector.broadcast %cst_111 : f32 to vector<8x32xf32>
    %656 = arith.addf %655, %654 : vector<8x32xf32>
    %657 = arith.divf %655, %656 : vector<8x32xf32>
    %658 = vector.extract_strided_slice %649 {offsets = [0, 32], sizes = [8, 32], strides = [1, 1]} : vector<8x64xf32> to vector<8x32xf32>
    %659 = arith.mulf %658, %611 : vector<8x32xf32>
    %660 = vector.extract_strided_slice %649 {offsets = [0, 0], sizes = [8, 32], strides = [1, 1]} : vector<8x64xf32> to vector<8x32xf32>
    %661 = arith.mulf %660, %651 : vector<8x32xf32>
    %662 = arith.addf %659, %661 : vector<8x32xf32>
    %663 = math.tanh %662 : vector<8x32xf32>
    %664 = arith.mulf %657, %663 : vector<8x32xf32>
    %665 = tpu.concatenate %664, %639 in 1 : vector<8x32xf32>, vector<8x32xf32> -> vector<8x64xf32>
    %666 = arith.truncf %665 : vector<8x64xf32> to vector<8x64xbf16>
    %cst_112 = arith.constant dense<0.000000e+00> : vector<8x128xf32>
    %667 = tpu.matmul %666, %22, %cst_112 {dimension_numbers = #tpu.dot_dimension_numbers<[1], [0], [0], [1], [0, 0, 1, 1], [], []>} : vector<8x64xbf16>, vector<64x128xbf16>, vector<8x128xf32> -> vector<8x128xf32>
    %668 = vector.broadcast %23 : vector<1x128xf32> to vector<8x128xf32>
    %669 = arith.addf %667, %668 : vector<8x128xf32>
    %670 = vector.extract_strided_slice %669 {offsets = [0, 0], sizes = [8, 64], strides = [1, 1]} : vector<8x128xf32> to vector<8x64xf32>
    %671 = arith.negf %670 : vector<8x64xf32>
    %672 = math.exp %671 : vector<8x64xf32>
    %cst_113 = arith.constant 1.000000e+00 : f32
    %673 = vector.broadcast %cst_113 : f32 to vector<8x64xf32>
    %674 = arith.addf %673, %672 : vector<8x64xf32>
    %675 = arith.divf %673, %674 : vector<8x64xf32>
    %676 = vector.extract_strided_slice %669 {offsets = [0, 64], sizes = [8, 32], strides = [1, 1]} : vector<8x128xf32> to vector<8x32xf32>
    %677 = math.tanh %676 : vector<8x32xf32>
    %678 = vector.extract_strided_slice %669 {offsets = [0, 96], sizes = [8, 32], strides = [1, 1]} : vector<8x128xf32> to vector<8x32xf32>
    %679 = arith.negf %678 : vector<8x32xf32>
    %680 = math.exp %679 : vector<8x32xf32>
    %cst_114 = arith.constant 1.000000e+00 : f32
    %681 = vector.broadcast %cst_114 : f32 to vector<8x32xf32>
    %682 = arith.addf %681, %680 : vector<8x32xf32>
    %683 = arith.divf %681, %682 : vector<8x32xf32>
    %684 = vector.extract_strided_slice %675 {offsets = [0, 32], sizes = [8, 32], strides = [1, 1]} : vector<8x64xf32> to vector<8x32xf32>
    %685 = arith.mulf %684, %637 : vector<8x32xf32>
    %686 = vector.extract_strided_slice %675 {offsets = [0, 0], sizes = [8, 32], strides = [1, 1]} : vector<8x64xf32> to vector<8x32xf32>
    %687 = arith.mulf %686, %677 : vector<8x32xf32>
    %688 = arith.addf %685, %687 : vector<8x32xf32>
    %689 = math.tanh %688 : vector<8x32xf32>
    %690 = arith.mulf %683, %689 : vector<8x32xf32>
    %c104 = arith.constant 104 : index
    %c0_115 = arith.constant 0 : index
    %691 = vector.load %arg11[%c104, %c0_115] : memref<128x128xf32, #tpu.memory_space<vmem>>, vector<8x128xf32>
    %692 = arith.truncf %664 : vector<8x32xf32> to vector<8x32xbf16>
    %cst_116 = arith.constant dense<0.000000e+00> : vector<8x128xf32>
    %693 = tpu.matmul %692, %21, %cst_116 {dimension_numbers = #tpu.dot_dimension_numbers<[1], [0], [0], [1], [0, 0, 1, 1], [], []>} : vector<8x32xbf16>, vector<32x128xbf16>, vector<8x128xf32> -> vector<8x128xf32>
    %694 = arith.addf %691, %693 : vector<8x128xf32>
    %695 = vector.extract_strided_slice %694 {offsets = [0, 0], sizes = [8, 64], strides = [1, 1]} : vector<8x128xf32> to vector<8x64xf32>
    %696 = arith.negf %695 : vector<8x64xf32>
    %697 = math.exp %696 : vector<8x64xf32>
    %cst_117 = arith.constant 1.000000e+00 : f32
    %698 = vector.broadcast %cst_117 : f32 to vector<8x64xf32>
    %699 = arith.addf %698, %697 : vector<8x64xf32>
    %700 = arith.divf %698, %699 : vector<8x64xf32>
    %701 = vector.extract_strided_slice %694 {offsets = [0, 64], sizes = [8, 32], strides = [1, 1]} : vector<8x128xf32> to vector<8x32xf32>
    %702 = math.tanh %701 : vector<8x32xf32>
    %703 = vector.extract_strided_slice %694 {offsets = [0, 96], sizes = [8, 32], strides = [1, 1]} : vector<8x128xf32> to vector<8x32xf32>
    %704 = arith.negf %703 : vector<8x32xf32>
    %705 = math.exp %704 : vector<8x32xf32>
    %cst_118 = arith.constant 1.000000e+00 : f32
    %706 = vector.broadcast %cst_118 : f32 to vector<8x32xf32>
    %707 = arith.addf %706, %705 : vector<8x32xf32>
    %708 = arith.divf %706, %707 : vector<8x32xf32>
    %709 = vector.extract_strided_slice %700 {offsets = [0, 32], sizes = [8, 32], strides = [1, 1]} : vector<8x64xf32> to vector<8x32xf32>
    %710 = arith.mulf %709, %662 : vector<8x32xf32>
    %711 = vector.extract_strided_slice %700 {offsets = [0, 0], sizes = [8, 32], strides = [1, 1]} : vector<8x64xf32> to vector<8x32xf32>
    %712 = arith.mulf %711, %702 : vector<8x32xf32>
    %713 = arith.addf %710, %712 : vector<8x32xf32>
    %714 = math.tanh %713 : vector<8x32xf32>
    %715 = arith.mulf %708, %714 : vector<8x32xf32>
    %716 = tpu.concatenate %715, %690 in 1 : vector<8x32xf32>, vector<8x32xf32> -> vector<8x64xf32>
    %717 = arith.truncf %716 : vector<8x64xf32> to vector<8x64xbf16>
    %cst_119 = arith.constant dense<0.000000e+00> : vector<8x128xf32>
    %718 = tpu.matmul %717, %22, %cst_119 {dimension_numbers = #tpu.dot_dimension_numbers<[1], [0], [0], [1], [0, 0, 1, 1], [], []>} : vector<8x64xbf16>, vector<64x128xbf16>, vector<8x128xf32> -> vector<8x128xf32>
    %719 = vector.broadcast %23 : vector<1x128xf32> to vector<8x128xf32>
    %720 = arith.addf %718, %719 : vector<8x128xf32>
    %721 = vector.extract_strided_slice %720 {offsets = [0, 0], sizes = [8, 64], strides = [1, 1]} : vector<8x128xf32> to vector<8x64xf32>
    %722 = arith.negf %721 : vector<8x64xf32>
    %723 = math.exp %722 : vector<8x64xf32>
    %cst_120 = arith.constant 1.000000e+00 : f32
    %724 = vector.broadcast %cst_120 : f32 to vector<8x64xf32>
    %725 = arith.addf %724, %723 : vector<8x64xf32>
    %726 = arith.divf %724, %725 : vector<8x64xf32>
    %727 = vector.extract_strided_slice %720 {offsets = [0, 64], sizes = [8, 32], strides = [1, 1]} : vector<8x128xf32> to vector<8x32xf32>
    %728 = math.tanh %727 : vector<8x32xf32>
    %729 = vector.extract_strided_slice %720 {offsets = [0, 96], sizes = [8, 32], strides = [1, 1]} : vector<8x128xf32> to vector<8x32xf32>
    %730 = arith.negf %729 : vector<8x32xf32>
    %731 = math.exp %730 : vector<8x32xf32>
    %cst_121 = arith.constant 1.000000e+00 : f32
    %732 = vector.broadcast %cst_121 : f32 to vector<8x32xf32>
    %733 = arith.addf %732, %731 : vector<8x32xf32>
    %734 = arith.divf %732, %733 : vector<8x32xf32>
    %735 = vector.extract_strided_slice %726 {offsets = [0, 32], sizes = [8, 32], strides = [1, 1]} : vector<8x64xf32> to vector<8x32xf32>
    %736 = arith.mulf %735, %688 : vector<8x32xf32>
    %737 = vector.extract_strided_slice %726 {offsets = [0, 0], sizes = [8, 32], strides = [1, 1]} : vector<8x64xf32> to vector<8x32xf32>
    %738 = arith.mulf %737, %728 : vector<8x32xf32>
    %739 = arith.addf %736, %738 : vector<8x32xf32>
    %740 = math.tanh %739 : vector<8x32xf32>
    %741 = arith.mulf %734, %740 : vector<8x32xf32>
    %c112 = arith.constant 112 : index
    %c0_122 = arith.constant 0 : index
    %742 = vector.load %arg11[%c112, %c0_122] : memref<128x128xf32, #tpu.memory_space<vmem>>, vector<8x128xf32>
    %743 = arith.truncf %715 : vector<8x32xf32> to vector<8x32xbf16>
    %cst_123 = arith.constant dense<0.000000e+00> : vector<8x128xf32>
    %744 = tpu.matmul %743, %21, %cst_123 {dimension_numbers = #tpu.dot_dimension_numbers<[1], [0], [0], [1], [0, 0, 1, 1], [], []>} : vector<8x32xbf16>, vector<32x128xbf16>, vector<8x128xf32> -> vector<8x128xf32>
    %745 = arith.addf %742, %744 : vector<8x128xf32>
    %746 = vector.extract_strided_slice %745 {offsets = [0, 0], sizes = [8, 64], strides = [1, 1]} : vector<8x128xf32> to vector<8x64xf32>
    %747 = arith.negf %746 : vector<8x64xf32>
    %748 = math.exp %747 : vector<8x64xf32>
    %cst_124 = arith.constant 1.000000e+00 : f32
    %749 = vector.broadcast %cst_124 : f32 to vector<8x64xf32>
    %750 = arith.addf %749, %748 : vector<8x64xf32>
    %751 = arith.divf %749, %750 : vector<8x64xf32>
    %752 = vector.extract_strided_slice %745 {offsets = [0, 64], sizes = [8, 32], strides = [1, 1]} : vector<8x128xf32> to vector<8x32xf32>
    %753 = math.tanh %752 : vector<8x32xf32>
    %754 = vector.extract_strided_slice %745 {offsets = [0, 96], sizes = [8, 32], strides = [1, 1]} : vector<8x128xf32> to vector<8x32xf32>
    %755 = arith.negf %754 : vector<8x32xf32>
    %756 = math.exp %755 : vector<8x32xf32>
    %cst_125 = arith.constant 1.000000e+00 : f32
    %757 = vector.broadcast %cst_125 : f32 to vector<8x32xf32>
    %758 = arith.addf %757, %756 : vector<8x32xf32>
    %759 = arith.divf %757, %758 : vector<8x32xf32>
    %760 = vector.extract_strided_slice %751 {offsets = [0, 32], sizes = [8, 32], strides = [1, 1]} : vector<8x64xf32> to vector<8x32xf32>
    %761 = arith.mulf %760, %713 : vector<8x32xf32>
    %762 = vector.extract_strided_slice %751 {offsets = [0, 0], sizes = [8, 32], strides = [1, 1]} : vector<8x64xf32> to vector<8x32xf32>
    %763 = arith.mulf %762, %753 : vector<8x32xf32>
    %764 = arith.addf %761, %763 : vector<8x32xf32>
    %765 = math.tanh %764 : vector<8x32xf32>
    %766 = arith.mulf %759, %765 : vector<8x32xf32>
    %767 = tpu.concatenate %766, %741 in 1 : vector<8x32xf32>, vector<8x32xf32> -> vector<8x64xf32>
    %768 = arith.truncf %767 : vector<8x64xf32> to vector<8x64xbf16>
    %cst_126 = arith.constant dense<0.000000e+00> : vector<8x128xf32>
    %769 = tpu.matmul %768, %22, %cst_126 {dimension_numbers = #tpu.dot_dimension_numbers<[1], [0], [0], [1], [0, 0, 1, 1], [], []>} : vector<8x64xbf16>, vector<64x128xbf16>, vector<8x128xf32> -> vector<8x128xf32>
    %770 = vector.broadcast %23 : vector<1x128xf32> to vector<8x128xf32>
    %771 = arith.addf %769, %770 : vector<8x128xf32>
    %772 = vector.extract_strided_slice %771 {offsets = [0, 0], sizes = [8, 64], strides = [1, 1]} : vector<8x128xf32> to vector<8x64xf32>
    %773 = arith.negf %772 : vector<8x64xf32>
    %774 = math.exp %773 : vector<8x64xf32>
    %cst_127 = arith.constant 1.000000e+00 : f32
    %775 = vector.broadcast %cst_127 : f32 to vector<8x64xf32>
    %776 = arith.addf %775, %774 : vector<8x64xf32>
    %777 = arith.divf %775, %776 : vector<8x64xf32>
    %778 = vector.extract_strided_slice %771 {offsets = [0, 64], sizes = [8, 32], strides = [1, 1]} : vector<8x128xf32> to vector<8x32xf32>
    %779 = math.tanh %778 : vector<8x32xf32>
    %780 = vector.extract_strided_slice %771 {offsets = [0, 96], sizes = [8, 32], strides = [1, 1]} : vector<8x128xf32> to vector<8x32xf32>
    %781 = arith.negf %780 : vector<8x32xf32>
    %782 = math.exp %781 : vector<8x32xf32>
    %cst_128 = arith.constant 1.000000e+00 : f32
    %783 = vector.broadcast %cst_128 : f32 to vector<8x32xf32>
    %784 = arith.addf %783, %782 : vector<8x32xf32>
    %785 = arith.divf %783, %784 : vector<8x32xf32>
    %786 = vector.extract_strided_slice %777 {offsets = [0, 32], sizes = [8, 32], strides = [1, 1]} : vector<8x64xf32> to vector<8x32xf32>
    %787 = arith.mulf %786, %739 : vector<8x32xf32>
    %788 = vector.extract_strided_slice %777 {offsets = [0, 0], sizes = [8, 32], strides = [1, 1]} : vector<8x64xf32> to vector<8x32xf32>
    %789 = arith.mulf %788, %779 : vector<8x32xf32>
    %790 = arith.addf %787, %789 : vector<8x32xf32>
    %791 = math.tanh %790 : vector<8x32xf32>
    %792 = arith.mulf %785, %791 : vector<8x32xf32>
    %c120 = arith.constant 120 : index
    %c0_129 = arith.constant 0 : index
    %793 = vector.load %arg11[%c120, %c0_129] : memref<128x128xf32, #tpu.memory_space<vmem>>, vector<8x128xf32>
    %794 = arith.truncf %766 : vector<8x32xf32> to vector<8x32xbf16>
    %cst_130 = arith.constant dense<0.000000e+00> : vector<8x128xf32>
    %795 = tpu.matmul %794, %21, %cst_130 {dimension_numbers = #tpu.dot_dimension_numbers<[1], [0], [0], [1], [0, 0, 1, 1], [], []>} : vector<8x32xbf16>, vector<32x128xbf16>, vector<8x128xf32> -> vector<8x128xf32>
    %796 = arith.addf %793, %795 : vector<8x128xf32>
    %797 = vector.extract_strided_slice %796 {offsets = [0, 0], sizes = [8, 64], strides = [1, 1]} : vector<8x128xf32> to vector<8x64xf32>
    %798 = arith.negf %797 : vector<8x64xf32>
    %799 = math.exp %798 : vector<8x64xf32>
    %cst_131 = arith.constant 1.000000e+00 : f32
    %800 = vector.broadcast %cst_131 : f32 to vector<8x64xf32>
    %801 = arith.addf %800, %799 : vector<8x64xf32>
    %802 = arith.divf %800, %801 : vector<8x64xf32>
    %803 = vector.extract_strided_slice %796 {offsets = [0, 64], sizes = [8, 32], strides = [1, 1]} : vector<8x128xf32> to vector<8x32xf32>
    %804 = math.tanh %803 : vector<8x32xf32>
    %805 = vector.extract_strided_slice %796 {offsets = [0, 96], sizes = [8, 32], strides = [1, 1]} : vector<8x128xf32> to vector<8x32xf32>
    %806 = arith.negf %805 : vector<8x32xf32>
    %807 = math.exp %806 : vector<8x32xf32>
    %cst_132 = arith.constant 1.000000e+00 : f32
    %808 = vector.broadcast %cst_132 : f32 to vector<8x32xf32>
    %809 = arith.addf %808, %807 : vector<8x32xf32>
    %810 = arith.divf %808, %809 : vector<8x32xf32>
    %811 = vector.extract_strided_slice %802 {offsets = [0, 32], sizes = [8, 32], strides = [1, 1]} : vector<8x64xf32> to vector<8x32xf32>
    %812 = arith.mulf %811, %764 : vector<8x32xf32>
    %813 = vector.extract_strided_slice %802 {offsets = [0, 0], sizes = [8, 32], strides = [1, 1]} : vector<8x64xf32> to vector<8x32xf32>
    %814 = arith.mulf %813, %804 : vector<8x32xf32>
    %815 = arith.addf %812, %814 : vector<8x32xf32>
    %816 = math.tanh %815 : vector<8x32xf32>
    %817 = arith.mulf %810, %816 : vector<8x32xf32>
    %818 = tpu.concatenate %817, %792 in 1 : vector<8x32xf32>, vector<8x32xf32> -> vector<8x64xf32>
    %819 = arith.truncf %818 : vector<8x64xf32> to vector<8x64xbf16>
    %cst_133 = arith.constant dense<0.000000e+00> : vector<8x128xf32>
    %820 = tpu.matmul %819, %22, %cst_133 {dimension_numbers = #tpu.dot_dimension_numbers<[1], [0], [0], [1], [0, 0, 1, 1], [], []>} : vector<8x64xbf16>, vector<64x128xbf16>, vector<8x128xf32> -> vector<8x128xf32>
    %821 = vector.broadcast %23 : vector<1x128xf32> to vector<8x128xf32>
    %822 = arith.addf %820, %821 : vector<8x128xf32>
    %823 = vector.extract_strided_slice %822 {offsets = [0, 0], sizes = [8, 64], strides = [1, 1]} : vector<8x128xf32> to vector<8x64xf32>
    %824 = arith.negf %823 : vector<8x64xf32>
    %825 = math.exp %824 : vector<8x64xf32>
    %cst_134 = arith.constant 1.000000e+00 : f32
    %826 = vector.broadcast %cst_134 : f32 to vector<8x64xf32>
    %827 = arith.addf %826, %825 : vector<8x64xf32>
    %828 = arith.divf %826, %827 : vector<8x64xf32>
    %829 = vector.extract_strided_slice %822 {offsets = [0, 64], sizes = [8, 32], strides = [1, 1]} : vector<8x128xf32> to vector<8x32xf32>
    %830 = math.tanh %829 : vector<8x32xf32>
    %831 = vector.extract_strided_slice %822 {offsets = [0, 96], sizes = [8, 32], strides = [1, 1]} : vector<8x128xf32> to vector<8x32xf32>
    %832 = arith.negf %831 : vector<8x32xf32>
    %833 = math.exp %832 : vector<8x32xf32>
    %cst_135 = arith.constant 1.000000e+00 : f32
    %834 = vector.broadcast %cst_135 : f32 to vector<8x32xf32>
    %835 = arith.addf %834, %833 : vector<8x32xf32>
    %836 = arith.divf %834, %835 : vector<8x32xf32>
    %837 = vector.extract_strided_slice %828 {offsets = [0, 32], sizes = [8, 32], strides = [1, 1]} : vector<8x64xf32> to vector<8x32xf32>
    %838 = arith.mulf %837, %790 : vector<8x32xf32>
    %839 = vector.extract_strided_slice %828 {offsets = [0, 0], sizes = [8, 32], strides = [1, 1]} : vector<8x64xf32> to vector<8x32xf32>
    %840 = arith.mulf %839, %830 : vector<8x32xf32>
    %841 = arith.addf %838, %840 : vector<8x32xf32>
    %842 = math.tanh %841 : vector<8x32xf32>
    %843 = arith.mulf %836, %842 : vector<8x32xf32>
    %844 = arith.truncf %843 : vector<8x32xf32> to vector<8x32xbf16>
    %c0_136 = arith.constant 0 : index
    %c0_137 = arith.constant 0 : index
    %845 = vector.load %arg8[%c0_136, %c0_137] : memref<32x128xbf16, #tpu.memory_space<vmem>>, vector<32x128xbf16>
    %cst_138 = arith.constant dense<0.000000e+00> : vector<8x128xf32>
    %846 = tpu.matmul %844, %845, %cst_138 {dimension_numbers = #tpu.dot_dimension_numbers<[1], [0], [0], [1], [0, 0, 1, 1], [], []>} : vector<8x32xbf16>, vector<32x128xbf16>, vector<8x128xf32> -> vector<8x128xf32>
    %c0_139 = arith.constant 0 : index
    %c0_140 = arith.constant 0 : index
    %847 = vector.load %arg9[%c0_139, %c0_140] : memref<1x128xf32, #tpu.memory_space<vmem>>, vector<1x128xf32>
    %848 = vector.broadcast %847 : vector<1x128xf32> to vector<8x128xf32>
    %849 = arith.addf %846, %848 : vector<8x128xf32>
    %c0_141 = arith.constant 0 : index
    %c0_142 = arith.constant 0 : index
    %850 = vector.load %arg10[%c0_141, %c0_142] : memref<8x128xf32, #tpu.memory_space<vmem>>, vector<8x128xf32>
    tpu.vector_store %arg10[%c0_141, %c0_142], %849 {strides = array<i32>} : memref<8x128xf32, #tpu.memory_space<vmem>>, vector<8x128xf32>,
    return
  }
}

</mosaic_0001>

<llo_original>
// kernel: cnn_lstm_forward.1
$region0: #{cnn_lstm_forward.1}
  #allocation0 [shape = 'u32[]', space=smem, size = 0x4, offset = 0x4, fixed_abs, tag = 'smem constant byte address 0x4 - core index']
  #allocation1 [shape = 'u32[144,128]{1,0:T(1,128)}', space=vmem, size = 0x12000, scoped, tag = 'internal scratch']
  #allocation2 [shape = 'f32[128,128]{1,0:T(8,128)}', space=vmem, size = 0x10000, scoped, tag = 'scratch operand']
  %s0 = inlined_call_operand.vmem [shape: bf16[128,8], index: 0, kind: input, shape index: {}]
  %s1 = inlined_call_operand.vmem [shape: bf16[24,8], index: 1, kind: input, shape index: {}]
  %s2 = inlined_call_operand.vmem [shape: f32[1,8], index: 2, kind: input, shape index: {}]
  %s3 = inlined_call_operand.vmem [shape: bf16[8,128], index: 3, kind: input, shape index: {}]
  %s4 = inlined_call_operand.vmem [shape: bf16[32,128], index: 4, kind: input, shape index: {}]
  %s5 = inlined_call_operand.vmem [shape: f32[1,128], index: 5, kind: input, shape index: {}]
  %s6 = inlined_call_operand.vmem [shape: bf16[64,128], index: 6, kind: input, shape index: {}]
  %s7 = inlined_call_operand.vmem [shape: f32[1,128], index: 7, kind: input, shape index: {}]
  %s8 = inlined_call_operand.vmem [shape: bf16[32,128], index: 8, kind: input, shape index: {}]
  %s9 = inlined_call_operand.vmem [shape: f32[1,128], index: 9, kind: input, shape index: {}]
  %s10 = inlined_call_operand.vmem [shape: f32[8,128], index: 10, kind: output, shape index: {}]
  %s11 = sld [smem:[#allocation0]]
  $region50: #{cnn_lstm_forward.1} parent=0
    _
  %s13 = ssub.s32 1, %s11
  %s14 = scalar_select 0, %s13, %s11
  // Predicated region
  $region2: #{cnn_lstm_forward.1} parent=0 // pred_check
    _
  $region3: #{cnn_lstm_forward.1} parent=0 // pred_check_branch
    %16 = sbr.rel (0) target = $region5
  $region4: #{cnn_lstm_forward.1} parent=0 // pred_region
    _
  $region5: #{cnn_lstm_forward.1} parent=0 // pred_fallthru
    _
  // Predicated region
  $region6: #{cnn_lstm_forward.1} parent=0 // pred_check
    _
  $region7: #{cnn_lstm_forward.1} parent=0 // pred_check_branch
    %18 = sbr.rel (0) target = $region9
  $region8: #{cnn_lstm_forward.1} parent=0 // pred_region
    _
  $region9: #{cnn_lstm_forward.1} parent=0 // pred_fallthru
    _
  // Predicated region
  $region10: #{cnn_lstm_forward.1} parent=0 // pred_check
    _
  $region11: #{cnn_lstm_forward.1} parent=0 // pred_check_branch
    %20 = sbr.rel (0) target = $region13
  $region12: #{cnn_lstm_forward.1} parent=0 // pred_region
    _
  $region13: #{cnn_lstm_forward.1} parent=0 // pred_fallthru
    _
  // Predicated region
  $region14: #{cnn_lstm_forward.1} parent=0 // pred_check
    _
  $region15: #{cnn_lstm_forward.1} parent=0 // pred_check_branch
    %22 = sbr.rel (0) target = $region17
  $region16: #{cnn_lstm_forward.1} parent=0 // pred_region
    _
  $region17: #{cnn_lstm_forward.1} parent=0 // pred_fallthru
    _
  // Predicated region
  $region18: #{cnn_lstm_forward.1} parent=0 // pred_check
    _
  $region19: #{cnn_lstm_forward.1} parent=0 // pred_check_branch
    %24 = sbr.rel (0) target = $region21
  $region20: #{cnn_lstm_forward.1} parent=0 // pred_region
    _
  $region21: #{cnn_lstm_forward.1} parent=0 // pred_fallthru
    _
  // Predicated region
  $region22: #{cnn_lstm_forward.1} parent=0 // pred_check
    _
  $region23: #{cnn_lstm_forward.1} parent=0 // pred_check_branch
    %26 = sbr.rel (0) target = $region25
  $region24: #{cnn_lstm_forward.1} parent=0 // pred_region
    _
  $region25: #{cnn_lstm_forward.1} parent=0 // pred_fallthru
    _
  // Predicated region
  $region26: #{cnn_lstm_forward.1} parent=0 // pred_check
    _
  $region27: #{cnn_lstm_forward.1} parent=0 // pred_check_branch
    %28 = sbr.rel (0) target = $region29
  $region28: #{cnn_lstm_forward.1} parent=0 // pred_region
    _
  $region29: #{cnn_lstm_forward.1} parent=0 // pred_fallthru
    _
  // Predicated region
  $region30: #{cnn_lstm_forward.1} parent=0 // pred_check
    _
  $region31: #{cnn_lstm_forward.1} parent=0 // pred_check_branch
    %30 = sbr.rel (0) target = $region33
  $region32: #{cnn_lstm_forward.1} parent=0 // pred_region
    _
  $region33: #{cnn_lstm_forward.1} parent=0 // pred_fallthru
    _
  // Predicated region
  $region34: #{cnn_lstm_forward.1} parent=0 // pred_check
    _
  $region35: #{cnn_lstm_forward.1} parent=0 // pred_check_branch
    %32 = sbr.rel (0) target = $region37
  $region36: #{cnn_lstm_forward.1} parent=0 // pred_region
    _
  $region37: #{cnn_lstm_forward.1} parent=0 // pred_fallthru
    _
  // Predicated region
  $region38: #{cnn_lstm_forward.1} parent=0 // pred_check
    _
  $region39: #{cnn_lstm_forward.1} parent=0 // pred_check_branch
    %34 = sbr.rel (0) target = $region41
  $region40: #{cnn_lstm_forward.1} parent=0 // pred_region
    _
  $region41: #{cnn_lstm_forward.1} parent=0 // pred_fallthru
    _
  %v36 = vld [vmem:[%s0] sm:$0xf]
  %v37 = vld [vmem:[%s0 + $0x4] sm:$0xf]
  %v38 = vld [vmem:[%s0 + $0x8] sm:$0xf]
  %v39 = vld [vmem:[%s0 + $0xc] sm:$0xf]
  %v40 = vld [vmem:[%s0 + $0x10] sm:$0xf]
  %v41 = vld [vmem:[%s0 + $0x14] sm:$0xf]
  %v42 = vld [vmem:[%s0 + $0x18] sm:$0xf]
  %v43 = vld [vmem:[%s0 + $0x1c] sm:$0xf]
  %v44 = vld [vmem:[%s0 + $0x20] sm:$0xf]
  %v45 = vld [vmem:[%s0 + $0x24] sm:$0xf]
  %v46 = vld [vmem:[%s0 + $0x28] sm:$0xf]
  %v47 = vld [vmem:[%s0 + $0x2c] sm:$0xf]
  %v48 = vld [vmem:[%s0 + $0x30] sm:$0xf]
  %v49 = vld [vmem:[%s0 + $0x34] sm:$0xf]
  %v50 = vld [vmem:[%s0 + $0x38] sm:$0xf]
  %v51 = vld [vmem:[%s0 + $0x3c] sm:$0xf]
  %v52 = vunpack.c.l.bf16 %v36
  %v53 = vunpack.c.l.bf16 %v37
  %v54 = vunpack.c.l.bf16 %v38
  %v55 = vunpack.c.l.bf16 %v39
  %v56 = vunpack.c.l.bf16 %v40
  %v57 = vunpack.c.l.bf16 %v41
  %v58 = vunpack.c.l.bf16 %v42
  %v59 = vunpack.c.l.bf16 %v43
  %v60 = vunpack.c.l.bf16 %v44
  %v61 = vunpack.c.l.bf16 %v45
  %v62 = vunpack.c.l.bf16 %v46
  %v63 = vunpack.c.l.bf16 %v47
  %v64 = vunpack.c.l.bf16 %v48
  %v65 = vunpack.c.l.bf16 %v49
  %v66 = vunpack.c.l.bf16 %v50
  %v67 = vunpack.c.l.bf16 %v51
  %84 = vrot.lane.b32.xlu0 %v52, 8
  %v85 = vpop.permute.xlu0 %84
  %86 = vrot.lane.b32.xlu0 %v53, 8
  %v87 = vpop.permute.xlu0 %86
  %88 = vrot.lane.b32.xlu0 %v54, 8
  %v89 = vpop.permute.xlu0 %88
  %90 = vrot.lane.b32.xlu0 %v55, 8
  %v91 = vpop.permute.xlu0 %90
  %92 = vrot.lane.b32.xlu0 %v56, 8
  %v93 = vpop.permute.xlu0 %92
  %94 = vrot.lane.b32.xlu0 %v57, 8
  %v95 = vpop.permute.xlu0 %94
  %96 = vrot.lane.b32.xlu0 %v58, 8
  %v97 = vpop.permute.xlu0 %96
  %98 = vrot.lane.b32.xlu0 %v59, 8
  %v99 = vpop.permute.xlu0 %98
  %100 = vrot.lane.b32.xlu0 %v60, 8
  %v101 = vpop.permute.xlu0 %100
  %102 = vrot.lane.b32.xlu0 %v61, 8
  %v103 = vpop.permute.xlu0 %102
  %104 = vrot.lane.b32.xlu0 %v62, 8
  %v105 = vpop.permute.xlu0 %104
  %106 = vrot.lane.b32.xlu0 %v63, 8
  %v107 = vpop.permute.xlu0 %106
  %108 = vrot.lane.b32.xlu0 %v64, 8
  %v109 = vpop.permute.xlu0 %108
  %110 = vrot.lane.b32.xlu0 %v65, 8
  %v111 = vpop.permute.xlu0 %110
  %112 = vrot.lane.b32.xlu0 %v66, 8
  %v113 = vpop.permute.xlu0 %112
  %114 = vrot.lane.b32.xlu0 %v67, 8
  %v115 = vpop.permute.xlu0 %114
  %133 = vrot.lane.b32.xlu0 %v53, 16
  %v134 = vpop.permute.xlu0 %133
  %135 = vrot.lane.b32.xlu0 %v54, 16
  %v136 = vpop.permute.xlu0 %135
  %137 = vrot.lane.b32.xlu0 %v55, 16
  %v138 = vpop.permute.xlu0 %137
  %139 = vrot.lane.b32.xlu0 %v56, 16
  %v140 = vpop.permute.xlu0 %139
  %141 = vrot.lane.b32.xlu0 %v57, 16
  %v142 = vpop.permute.xlu0 %141
  %143 = vrot.lane.b32.xlu0 %v58, 16
  %v144 = vpop.permute.xlu0 %143
  %145 = vrot.lane.b32.xlu0 %v59, 16
  %v146 = vpop.permute.xlu0 %145
  %147 = vrot.lane.b32.xlu0 %v60, 16
  %v148 = vpop.permute.xlu0 %147
  %149 = vrot.lane.b32.xlu0 %v61, 16
  %v150 = vpop.permute.xlu0 %149
  %151 = vrot.lane.b32.xlu0 %v62, 16
  %v152 = vpop.permute.xlu0 %151
  %153 = vrot.lane.b32.xlu0 %v63, 16
  %v154 = vpop.permute.xlu0 %153
  %155 = vrot.lane.b32.xlu0 %v64, 16
  %v156 = vpop.permute.xlu0 %155
  %157 = vrot.lane.b32.xlu0 %v65, 16
  %v158 = vpop.permute.xlu0 %157
  %159 = vrot.lane.b32.xlu0 %v66, 16
  %v160 = vpop.permute.xlu0 %159
  %161 = vrot.lane.b32.xlu0 %v67, 16
  %v162 = vpop.permute.xlu0 %161
  %163 = vrot.lane.b32.xlu0 0.0, 16
  %v164 = vpop.permute.xlu0 %163
  %vm181 = vcmask 64512
  %v182 = vsel %vm181, 0.0, %v85
  %v183 = vsel %vm181, %v52, %v87
  %v184 = vsel %vm181, %v53, %v89
  %v185 = vsel %vm181, %v54, %v91
  %v186 = vsel %vm181, %v55, %v93
  %v187 = vsel %vm181, %v56, %v95
  %v188 = vsel %vm181, %v57, %v97
  %v189 = vsel %vm181, %v58, %v99
  %v190 = vsel %vm181, %v59, %v101
  %v191 = vsel %vm181, %v60, %v103
  %v192 = vsel %vm181, %v61, %v105
  %v193 = vsel %vm181, %v62, %v107
  %v194 = vsel %vm181, %v63, %v109
  %v195 = vsel %vm181, %v64, %v111
  %v196 = vsel %vm181, %v65, %v113
  %v197 = vsel %vm181, %v66, %v115
  %vm198 = vcmask 130048
  %v199 = vsel %vm198, %v182, %v134
  %v200 = vsel %vm198, %v183, %v136
  %v201 = vsel %vm198, %v184, %v138
  %v202 = vsel %vm198, %v185, %v140
  %v203 = vsel %vm198, %v186, %v142
  %v204 = vsel %vm198, %v187, %v144
  %v205 = vsel %vm198, %v188, %v146
  %v206 = vsel %vm198, %v189, %v148
  %v207 = vsel %vm198, %v190, %v150
  %v208 = vsel %vm198, %v191, %v152
  %v209 = vsel %vm198, %v192, %v154
  %v210 = vsel %vm198, %v193, %v156
  %v211 = vsel %vm198, %v194, %v158
  %v212 = vsel %vm198, %v195, %v160
  %v213 = vsel %vm198, %v196, %v162
  %v214 = vsel %vm198, %v197, %v164
  %v215 = vpack.c.bf16 %v200, %v199
  %v216 = vpack.c.bf16 %v202, %v201
  %v217 = vpack.c.bf16 %v204, %v203
  %v218 = vpack.c.bf16 %v206, %v205
  %v219 = vpack.c.bf16 %v208, %v207
  %v220 = vpack.c.bf16 %v210, %v209
  %v221 = vpack.c.bf16 %v212, %v211
  %v222 = vpack.c.bf16 %v214, %v213
  %v223 = vld [vmem:[%s1] sm:$0xf]
  %v224 = vld [vmem:[%s1 + $0x4] sm:$0xf]
  %v225 = vld [vmem:[%s1 + $0x8] sm:$0xf]
  %v226 = vld [vmem:[%s2] sm:$0x1]
  %v228 = vlaneseq
  %v229 = vshrl.u32 %v228, 7
  %v230 = vsub.s32 0, %v229
  %v231 = vrot.slane %v226, %v230
  %v236 = vunpack.c.l.b16 %v223
  %v237 = vunpack.c.l.b16 %v224
  %v238 = vunpack.c.l.b16 %v225
  %v239 = vpack.c.b16 %v237, %v236
  %v240 = vpack.c.b16 %v238, %v238
  %vm242 = vcmask 195584
  %v244 = vsel %vm242, %v215, 0
  %v247 = vsel %vm242, %v216, 0
  %v250 = vsel %vm242, %v217, 0
  %v253 = vsel %vm242, %v218, 0
  %v256 = vsel %vm242, %v219, 0
  %v259 = vsel %vm242, %v220, 0
  %v262 = vsel %vm242, %v221, 0
  %v265 = vsel %vm242, %v222, 0
  %vm267 = vcmask 1043456
  %v269 = vsel %vm267, %v240, 0
  %271 = vmatprep.subr.bf16.mxu0 0
  %272 = vmatpush1.bf16.msra.mxu0 %v239
  %273 = vmatprep.subr.bf16.mxu0 0
  %274 = vmatpush1.bf16.msra.mxu0 %v269
  %275 = vmatprep.subr.bf16.mxu0 0
  %276 = vmatpush1.bf16.msra.mxu0 0
  %277 = vmatprep.subr.bf16.mxu0 0
  %278 = vmatpush1.bf16.msra.mxu0 0
  %279 = vmatprep.subr.bf16.mxu0 0
  %280 = vmatpush1.bf16.msra.mxu0 0
  %281 = vmatprep.subr.bf16.mxu0 0
  %282 = vmatpush1.bf16.msra.mxu0 0
  %283 = vmatprep.subr.bf16.mxu0 0
  %284 = vmatpush1.bf16.msra.mxu0 0
  %285 = vmatprep.subr.bf16.mxu0 0
  %286 = vmatpush1.bf16.msra.mxu0 0
  %287 = vmatprep.subr.bf16.mxu0 0
  %288 = vmatpush1.bf16.msra.mxu0 0
  %289 = vmatprep.subr.bf16.mxu0 0
  %290 = vmatpush1.bf16.msra.mxu0 0
  %291 = vmatprep.subr.bf16.mxu0 0
  %292 = vmatpush1.bf16.msra.mxu0 0
  %293 = vmatprep.subr.bf16.mxu0 0
  %294 = vmatpush1.bf16.msra.mxu0 0
  %295 = vmatprep.subr.bf16.mxu0 0
  %296 = vmatpush1.bf16.msra.mxu0 0
  %297 = vmatprep.subr.bf16.mxu0 0
  %298 = vmatpush1.bf16.msra.mxu0 0
  %299 = vmatprep.subr.bf16.mxu0 0
  %300 = vmatpush1.bf16.msra.mxu0 0
  %301 = vmatprep.subr.bf16.mxu0 0
  %302 = vmatpush1.bf16.msra.mxu0 0
  %303 = vmatprep.mubr.bf16.mxu0 0
  %304 = vmatmul.mubr.bf16.gmra.mrb[0].mxu0 %v244
  %v305 = vpop.f32.mrb[0].mxu0
  %v306 = vadd.f32 %v231, %v305
  %v307 = vpop.f32.mrb[0].mxu0
  %v308 = vpop.f32.mrb[0].mxu0
  %v309 = vadd.f32 %v231, %v308
  %v310 = vpop.f32.mrb[0].mxu0
  %311 = vmatprep.mubr.bf16.mxu0 0
  %312 = vmatmul.mubr.bf16.gmra.mrb[0].mxu0 %v247
  %v313 = vpop.f32.mrb[0].mxu0
  %v314 = vadd.f32 %v231, %v313
  %v315 = vpop.f32.mrb[0].mxu0
  %v316 = vpop.f32.mrb[0].mxu0
  %v317 = vadd.f32 %v231, %v316
  %v318 = vpop.f32.mrb[0].mxu0
  %319 = vmatprep.mubr.bf16.mxu0 0
  %320 = vmatmul.mubr.bf16.gmra.mrb[0].mxu0 %v250
  %v321 = vpop.f32.mrb[0].mxu0
  %v322 = vadd.f32 %v231, %v321
  %v323 = vpop.f32.mrb[0].mxu0
  %v324 = vpop.f32.mrb[0].mxu0
  %v325 = vadd.f32 %v231, %v324
  %v326 = vpop.f32.mrb[0].mxu0
  %327 = vmatprep.mubr.bf16.mxu0 0
  %328 = vmatmul.mubr.bf16.gmra.mrb[0].mxu0 %v253
  %v329 = vpop.f32.mrb[0].mxu0
  %v330 = vadd.f32 %v231, %v329
  %v331 = vpop.f32.mrb[0].mxu0
  %v332 = vpop.f32.mrb[0].mxu0
  %v333 = vadd.f32 %v231, %v332
  %v334 = vpop.f32.mrb[0].mxu0
  %335 = vmatprep.mubr.bf16.mxu0 0
  %336 = vmatmul.mubr.bf16.gmra.mrb[0].mxu0 %v256
  %v337 = vpop.f32.mrb[0].mxu0
  %v338 = vadd.f32 %v231, %v337
  %v339 = vpop.f32.mrb[0].mxu0
  %v340 = vpop.f32.mrb[0].mxu0
  %v341 = vadd.f32 %v231, %v340
  %v342 = vpop.f32.mrb[0].mxu0
  %343 = vmatprep.mubr.bf16.mxu0 0
  %344 = vmatmul.mubr.bf16.gmra.mrb[0].mxu0 %v259
  %v345 = vpop.f32.mrb[0].mxu0
  %v346 = vadd.f32 %v231, %v345
  %v347 = vpop.f32.mrb[0].mxu0
  %v348 = vpop.f32.mrb[0].mxu0
  %v349 = vadd.f32 %v231, %v348
  %v350 = vpop.f32.mrb[0].mxu0
  %351 = vmatprep.mubr.bf16.mxu0 0
  %352 = vmatmul.mubr.bf16.gmra.mrb[0].mxu0 %v262
  %v353 = vpop.f32.mrb[0].mxu0
  %v354 = vadd.f32 %v231, %v353
  %v355 = vpop.f32.mrb[0].mxu0
  %v356 = vpop.f32.mrb[0].mxu0
  %v357 = vadd.f32 %v231, %v356
  %v358 = vpop.f32.mrb[0].mxu0
  %359 = vmatprep.mubr.bf16.mxu0 0
  %360 = vmatmul.mubr.bf16.gmra.mrb[0].mxu0 %v265
  %v361 = vpop.f32.mrb[0].mxu0
  %v362 = vadd.f32 %v231, %v361
  %v363 = vpop.f32.mrb[0].mxu0
  %v364 = vpop.f32.mrb[0].mxu0
  %v365 = vadd.f32 %v231, %v364
  %v366 = vpop.f32.mrb[0].mxu0
  %367 = vdwg.mxu0
  %v368 = vpack.c.bf16 %v309, %v306
  %v369 = vpack.c.bf16 %v317, %v314
  %v370 = vpack.c.bf16 %v325, %v322
  %v371 = vpack.c.bf16 %v333, %v330
  %v372 = vpack.c.bf16 %v341, %v338
  %v373 = vpack.c.bf16 %v349, %v346
  %v374 = vpack.c.bf16 %v357, %v354
  %v375 = vpack.c.bf16 %v365, %v362
  %v376 = vld [vmem:[%s3] sm:$0xf]
  %v377 = vld [vmem:[%s5] sm:$0x1]
  %v379 = vlaneseq
  %v380 = vshrl.u32 %v379, 7
  %v381 = vsub.s32 0, %v380
  %v382 = vrot.slane %v377, %v381
  %v385 = vsel %vm181, %v368, 0
  %v388 = vsel %vm181, %v369, 0
  %v391 = vsel %vm181, %v370, 0
  %v394 = vsel %vm181, %v371, 0
  %v397 = vsel %vm181, %v372, 0
  %v400 = vsel %vm181, %v373, 0
  %v403 = vsel %vm181, %v374, 0
  %v406 = vsel %vm181, %v375, 0
  %v409 = vsel %vm267, %v376, 0
  %411 = vmatprep.subr.bf16.mxu0 0
  %412 = vmatpush1.bf16.msra.mxu0 %v409
  %413 = vmatprep.subr.bf16.mxu0 0
  %414 = vmatpush1.bf16.msra.mxu0 0
  %415 = vmatprep.subr.bf16.mxu0 0
  %416 = vmatpush1.bf16.msra.mxu0 0
  %417 = vmatprep.subr.bf16.mxu0 0
  %418 = vmatpush1.bf16.msra.mxu0 0
  %419 = vmatprep.subr.bf16.mxu0 0
  %420 = vmatpush1.bf16.msra.mxu0 0
  %421 = vmatprep.subr.bf16.mxu0 0
  %422 = vmatpush1.bf16.msra.mxu0 0
  %423 = vmatprep.subr.bf16.mxu0 0
  %424 = vmatpush1.bf16.msra.mxu0 0
  %425 = vmatprep.subr.bf16.mxu0 0
  %426 = vmatpush1.bf16.msra.mxu0 0
  %427 = vmatprep.subr.bf16.mxu0 0
  %428 = vmatpush1.bf16.msra.mxu0 0
  %429 = vmatprep.subr.bf16.mxu0 0
  %430 = vmatpush1.bf16.msra.mxu0 0
  %431 = vmatprep.subr.bf16.mxu0 0
  %432 = vmatpush1.bf16.msra.mxu0 0
  %433 = vmatprep.subr.bf16.mxu0 0
  %434 = vmatpush1.bf16.msra.mxu0 0
  %435 = vmatprep.subr.bf16.mxu0 0
  %436 = vmatpush1.bf16.msra.mxu0 0
  %437 = vmatprep.subr.bf16.mxu0 0
  %438 = vmatpush1.bf16.msra.mxu0 0
  %439 = vmatprep.subr.bf16.mxu0 0
  %440 = vmatpush1.bf16.msra.mxu0 0
  %441 = vmatprep.subr.bf16.mxu0 0
  %442 = vmatpush1.bf16.msra.mxu0 0
  %443 = vmatprep.mubr.bf16.mxu0 0
  %444 = vmatmul.mubr.bf16.gmra.mrb[0].mxu0 %v385
  %v445 = vpop.f32.mrb[0].mxu0
  %v446 = vadd.f32 %v382, %v445
  %v447 = vpop.f32.mrb[0].mxu0
  %v448 = vpop.f32.mrb[0].mxu0
  %v449 = vadd.f32 %v382, %v448
  %v450 = vpop.f32.mrb[0].mxu0
  %451 = vmatprep.mubr.bf16.mxu0 0
  %452 = vmatmul.mubr.bf16.gmra.mrb[0].mxu0 %v388
  %v453 = vpop.f32.mrb[0].mxu0
  %v454 = vadd.f32 %v382, %v453
  %v455 = vpop.f32.mrb[0].mxu0
  %v456 = vpop.f32.mrb[0].mxu0
  %v457 = vadd.f32 %v382, %v456
  %v458 = vpop.f32.mrb[0].mxu0
  %459 = vmatprep.mubr.bf16.mxu0 0
  %460 = vmatmul.mubr.bf16.gmra.mrb[0].mxu0 %v391
  %v461 = vpop.f32.mrb[0].mxu0
  %v462 = vadd.f32 %v382, %v461
  %v463 = vpop.f32.mrb[0].mxu0
  %v464 = vpop.f32.mrb[0].mxu0
  %v465 = vadd.f32 %v382, %v464
  %v466 = vpop.f32.mrb[0].mxu0
  %467 = vmatprep.mubr.bf16.mxu0 0
  %468 = vmatmul.mubr.bf16.gmra.mrb[0].mxu0 %v394
  %v469 = vpop.f32.mrb[0].mxu0
  %v470 = vadd.f32 %v382, %v469
  %v471 = vpop.f32.mrb[0].mxu0
  %v472 = vpop.f32.mrb[0].mxu0
  %v473 = vadd.f32 %v382, %v472
  %v474 = vpop.f32.mrb[0].mxu0
  %475 = vmatprep.mubr.bf16.mxu0 0
  %476 = vmatmul.mubr.bf16.gmra.mrb[0].mxu0 %v397
  %v477 = vpop.f32.mrb[0].mxu0
  %v478 = vadd.f32 %v382, %v477
  %v479 = vpop.f32.mrb[0].mxu0
  %v480 = vpop.f32.mrb[0].mxu0
  %v481 = vadd.f32 %v382, %v480
  %v482 = vpop.f32.mrb[0].mxu0
  %483 = vmatprep.mubr.bf16.mxu0 0
  %484 = vmatmul.mubr.bf16.gmra.mrb[0].mxu0 %v400
  %v485 = vpop.f32.mrb[0].mxu0
  %v486 = vadd.f32 %v382, %v485
  %v487 = vpop.f32.mrb[0].mxu0
  %v488 = vpop.f32.mrb[0].mxu0
  %v489 = vadd.f32 %v382, %v488
  %v490 = vpop.f32.mrb[0].mxu0
  %491 = vmatprep.mubr.bf16.mxu0 0
  %492 = vmatmul.mubr.bf16.gmra.mrb[0].mxu0 %v403
  %v493 = vpop.f32.mrb[0].mxu0
  %v494 = vadd.f32 %v382, %v493
  %v495 = vpop.f32.mrb[0].mxu0
  %v496 = vpop.f32.mrb[0].mxu0
  %v497 = vadd.f32 %v382, %v496
  %v498 = vpop.f32.mrb[0].mxu0
  %499 = vmatprep.mubr.bf16.mxu0 0
  %500 = vmatmul.mubr.bf16.gmra.mrb[0].mxu0 %v406
  %v501 = vpop.f32.mrb[0].mxu0
  %v502 = vadd.f32 %v382, %v501
  %v503 = vpop.f32.mrb[0].mxu0
  %v504 = vpop.f32.mrb[0].mxu0
  %v505 = vadd.f32 %v382, %v504
  %v506 = vpop.f32.mrb[0].mxu0
  %507 = vdwg.mxu0
  %508 = vst [vmem:[#allocation2] sm:$0xff] %v446
  %509 = vst [vmem:[#allocation2 + $0x8] sm:$0xff] %v449
  %510 = vst [vmem:[#allocation2 + $0x10] sm:$0xff] %v454
  %511 = vst [vmem:[#allocation2 + $0x18] sm:$0xff] %v457
  %512 = vst [vmem:[#allocation2 + $0x20] sm:$0xff] %v462
  %513 = vst [vmem:[#allocation2 + $0x28] sm:$0xff] %v465
  %514 = vst [vmem:[#allocation2 + $0x30] sm:$0xff] %v470
  %515 = vst [vmem:[#allocation2 + $0x38] sm:$0xff] %v473
  %516 = vst [vmem:[#allocation2 + $0x40] sm:$0xff] %v478
  %517 = vst [vmem:[#allocation2 + $0x48] sm:$0xff] %v481
  %518 = vst [vmem:[#allocation2 + $0x50] sm:$0xff] %v486
  %519 = vst [vmem:[#allocation2 + $0x58] sm:$0xff] %v489
  %520 = vst [vmem:[#allocation2 + $0x60] sm:$0xff] %v494
  %521 = vst [vmem:[#allocation2 + $0x68] sm:$0xff] %v497
  %522 = vst [vmem:[#allocation2 + $0x70] sm:$0xff] %v502
  %523 = vst [vmem:[#allocation2 + $0x78] sm:$0xff] %v505
  %v524 = vld [vmem:[%s4] sm:$0xf]
  %v525 = vld [vmem:[%s4 + $0x4] sm:$0xf]
  %v526 = vld [vmem:[%s4 + $0x8] sm:$0xf]
  %v527 = vld [vmem:[%s4 + $0xc] sm:$0xf]
  %v528 = vld [vmem:[%s6] sm:$0xf]
  %v529 = vld [vmem:[%s6 + $0x4] sm:$0xf]
  %v530 = vld [vmem:[%s6 + $0x8] sm:$0xf]
  %v531 = vld [vmem:[%s6 + $0xc] sm:$0xf]
  %v532 = vld [vmem:[%s6 + $0x10] sm:$0xf]
  %v533 = vld [vmem:[%s6 + $0x14] sm:$0xf]
  %v534 = vld [vmem:[%s6 + $0x18] sm:$0xf]
  %v535 = vld [vmem:[%s6 + $0x1c] sm:$0xf]
  %v536 = vld [vmem:[%s7] sm:$0x1]
  %v537 = vld [vmem:[#allocation2] sm:$0xff]
  %v542 = vunpack.c.l.b16 %v524
  %v543 = vunpack.c.l.b16 %v525
  %v544 = vunpack.c.l.b16 %v526
  %v545 = vunpack.c.l.b16 %v527
  %v546 = vpack.c.b16 %v543, %v542
  %v547 = vpack.c.b16 %v545, %v544
  %vm550 = vcmask 261120
  %v552 = vsel %vm550, 0, 0
  %554 = vmatprep.subr.bf16.mxu0 0
  %555 = vmatpush1.bf16.msra.mxu0 %v546
  %556 = vmatprep.subr.bf16.mxu0 0
  %557 = vmatpush1.bf16.msra.mxu0 %v547
  %558 = vmatprep.subr.bf16.mxu0 0
  %559 = vmatpush1.bf16.msra.mxu0 0
  %560 = vmatprep.subr.bf16.mxu0 0
  %561 = vmatpush1.bf16.msra.mxu0 0
  %562 = vmatprep.subr.bf16.mxu0 0
  %563 = vmatpush1.bf16.msra.mxu0 0
  %564 = vmatprep.subr.bf16.mxu0 0
  %565 = vmatpush1.bf16.msra.mxu0 0
  %566 = vmatprep.subr.bf16.mxu0 0
  %567 = vmatpush1.bf16.msra.mxu0 0
  %568 = vmatprep.subr.bf16.mxu0 0
  %569 = vmatpush1.bf16.msra.mxu0 0
  %570 = vmatprep.subr.bf16.mxu0 0
  %571 = vmatpush1.bf16.msra.mxu0 0
  %572 = vmatprep.subr.bf16.mxu0 0
  %573 = vmatpush1.bf16.msra.mxu0 0
  %574 = vmatprep.subr.bf16.mxu0 0
  %575 = vmatpush1.bf16.msra.mxu0 0
  %576 = vmatprep.subr.bf16.mxu0 0
  %577 = vmatpush1.bf16.msra.mxu0 0
  %578 = vmatprep.subr.bf16.mxu0 0
  %579 = vmatpush1.bf16.msra.mxu0 0
  %580 = vmatprep.subr.bf16.mxu0 0
  %581 = vmatpush1.bf16.msra.mxu0 0
  %582 = vmatprep.subr.bf16.mxu0 0
  %583 = vmatpush1.bf16.msra.mxu0 0
  %584 = vmatprep.subr.bf16.mxu0 0
  %585 = vmatpush1.bf16.msra.mxu0 0
  %586 = vmatprep.mubr.bf16.mxu0 0
  %587 = vmatmul.mubr.bf16.gmra.mrb[0].mxu0 %v552
  %v588 = vpop.f32.mrb[0].mxu0
  %v589 = vadd.f32 0.0, %v588
  %v590 = vpop.f32.mrb[0].mxu0
  %v591 = vpop.f32.mrb[0].mxu0
  %v592 = vpop.f32.mrb[0].mxu0
  %593 = vdwg.mxu0
  %v594 = vadd.f32 %v537, %v589
  %v595 = vxor.u32 %v594, 2147483648
  %v596 = vmul.f32 %v595, 1.442695
  %v597 = vpow.pop %v596
  %v598 = vadd.f32 %v597, 1.0
  %v599 = vrcp.pop %v598
  %v600 = vmul.f32 1.0, %v599
  %v601 = vtanh.pop %v594
  %v602 = vmul.f32 %v600, 0.0
  %604 = vrot.lane.b32.xlu0 %v601, 64
  %v605 = vpop.permute.xlu0 %604
  %v607 = vmul.f32 %v600, %v605
  %609 = vrot.lane.b32.xlu0 %v607, 32
  %v610 = vpop.permute.xlu0 %609
  %v612 = vadd.f32 %v602, %v610
  %v613 = vtanh.pop %v612
  %615 = vrot.lane.b32.xlu0 %v613, 64
  %v616 = vpop.permute.xlu0 %615
  %v618 = vmul.f32 %v600, %v616
  %620 = vrot.lane.b32.xlu0 %v618, 32
  %v621 = vpop.permute.xlu0 %620
  %v623 = vsel %vm550, %v621, 0.0
  %v624 = vpack.c.bf16 %v623, %v623
  %v626 = vlaneseq
  %v627 = vshrl.u32 %v626, 7
  %v628 = vsub.s32 0, %v627
  %v629 = vrot.slane %v536, %v628
  %v639 = vunpack.c.l.b16 %v528
  %v640 = vunpack.c.l.b16 %v529
  %v641 = vunpack.c.l.b16 %v530
  %v642 = vunpack.c.l.b16 %v531
  %v643 = vunpack.c.l.b16 %v532
  %v644 = vunpack.c.l.b16 %v533
  %v645 = vunpack.c.l.b16 %v534
  %v646 = vunpack.c.l.b16 %v535
  %v647 = vpack.c.b16 %v640, %v639
  %v648 = vpack.c.b16 %v642, %v641
  %v649 = vpack.c.b16 %v644, %v643
  %v650 = vpack.c.b16 %v646, %v645
  %vm655 = vcmask 523264
  %v657 = vsel %vm655, %v624, 0
  %659 = vmatprep.subr.bf16.mxu0 0
  %660 = vmatpush1.bf16.msra.mxu0 %v647
  %661 = vmatprep.subr.bf16.mxu0 0
  %662 = vmatpush1.bf16.msra.mxu0 %v648
  %663 = vmatprep.subr.bf16.mxu0 0
  %664 = vmatpush1.bf16.msra.mxu0 %v649
  %665 = vmatprep.subr.bf16.mxu0 0
  %666 = vmatpush1.bf16.msra.mxu0 %v650
  %667 = vmatprep.subr.bf16.mxu0 0
  %668 = vmatpush1.bf16.msra.mxu0 0
  %669 = vmatprep.subr.bf16.mxu0 0
  %670 = vmatpush1.bf16.msra.mxu0 0
  %671 = vmatprep.subr.bf16.mxu0 0
  %672 = vmatpush1.bf16.msra.mxu0 0
  %673 = vmatprep.subr.bf16.mxu0 0
  %674 = vmatpush1.bf16.msra.mxu0 0
  %675 = vmatprep.subr.bf16.mxu0 0
  %676 = vmatpush1.bf16.msra.mxu0 0
  %677 = vmatprep.subr.bf16.mxu0 0
  %678 = vmatpush1.bf16.msra.mxu0 0
  %679 = vmatprep.subr.bf16.mxu0 0
  %680 = vmatpush1.bf16.msra.mxu0 0
  %681 = vmatprep.subr.bf16.mxu0 0
  %682 = vmatpush1.bf16.msra.mxu0 0
  %683 = vmatprep.subr.bf16.mxu0 0
  %684 = vmatpush1.bf16.msra.mxu0 0
  %685 = vmatprep.subr.bf16.mxu0 0
  %686 = vmatpush1.bf16.msra.mxu0 0
  %687 = vmatprep.subr.bf16.mxu0 0
  %688 = vmatpush1.bf16.msra.mxu0 0
  %689 = vmatprep.subr.bf16.mxu0 0
  %690 = vmatpush1.bf16.msra.mxu0 0
  %691 = vmatprep.mubr.bf16.mxu0 0
  %692 = vmatmul.mubr.bf16.gmra.mrb[0].mxu0 %v657
  %v693 = vpop.f32.mrb[0].mxu0
  %v694 = vadd.f32 %v629, %v693
  %v695 = vpop.f32.mrb[0].mxu0
  %v696 = vpop.f32.mrb[0].mxu0
  %v697 = vpop.f32.mrb[0].mxu0
  %698 = vdwg.mxu0
  %v699 = vxor.u32 %v694, 2147483648
  %v700 = vmul.f32 %v699, 1.442695
  %v701 = vpow.pop %v700
  %v702 = vadd.f32 %v701, 1.0
  %v703 = vrcp.pop %v702
  %v704 = vmul.f32 1.0, %v703
  %v705 = vtanh.pop %v694
  %v706 = vmul.f32 %v704, 0.0
  %708 = vrot.lane.b32.xlu0 %v705, 64
  %v709 = vpop.permute.xlu0 %708
  %v711 = vmul.f32 %v704, %v709
  %713 = vrot.lane.b32.xlu0 %v711, 32
  %v714 = vpop.permute.xlu0 %713
  %v716 = vadd.f32 %v706, %v714
  %v717 = vtanh.pop %v716
  %719 = vrot.lane.b32.xlu0 %v717, 64
  %v720 = vpop.permute.xlu0 %719
  %v722 = vmul.f32 %v704, %v720
  %v723 = vld [vmem:[#allocation2 + $0x8] sm:$0xff]
  %v724 = vpack.c.bf16 %v618, %v618
  %726 = vrot.lane.b32.xlu0 %v724, 32
  %v727 = vpop.permute.xlu0 %726
  %v729 = vsel %vm550, %v727, 0
  %731 = vmatprep.subr.bf16.mxu0 0
  %732 = vmatpush1.bf16.msra.mxu0 %v546
  %733 = vmatprep.subr.bf16.mxu0 0
  %734 = vmatpush1.bf16.msra.mxu0 %v547
  %735 = vmatprep.subr.bf16.mxu0 0
  %736 = vmatpush1.bf16.msra.mxu0 0
  %737 = vmatprep.subr.bf16.mxu0 0
  %738 = vmatpush1.bf16.msra.mxu0 0
  %739 = vmatprep.subr.bf16.mxu0 0
  %740 = vmatpush1.bf16.msra.mxu0 0
  %741 = vmatprep.subr.bf16.mxu0 0
  %742 = vmatpush1.bf16.msra.mxu0 0
  %743 = vmatprep.subr.bf16.mxu0 0
  %744 = vmatpush1.bf16.msra.mxu0 0
  %745 = vmatprep.subr.bf16.mxu0 0
  %746 = vmatpush1.bf16.msra.mxu0 0
  %747 = vmatprep.subr.bf16.mxu0 0
  %748 = vmatpush1.bf16.msra.mxu0 0
  %749 = vmatprep.subr.bf16.mxu0 0
  %750 = vmatpush1.bf16.msra.mxu0 0
  %751 = vmatprep.subr.bf16.mxu0 0
  %752 = vmatpush1.bf16.msra.mxu0 0
  %753 = vmatprep.subr.bf16.mxu0 0
  %754 = vmatpush1.bf16.msra.mxu0 0
  %755 = vmatprep.subr.bf16.mxu0 0
  %756 = vmatpush1.bf16.msra.mxu0 0
  %757 = vmatprep.subr.bf16.mxu0 0
  %758 = vmatpush1.bf16.msra.mxu0 0
  %759 = vmatprep.subr.bf16.mxu0 0
  %760 = vmatpush1.bf16.msra.mxu0 0
  %761 = vmatprep.subr.bf16.mxu0 0
  %762 = vmatpush1.bf16.msra.mxu0 0
  %763 = vmatprep.mubr.bf16.mxu0 0
  %764 = vmatmul.mubr.bf16.gmra.mrb[0].mxu0 %v729
  %v765 = vpop.f32.mrb[0].mxu0
  %v766 = vadd.f32 0.0, %v765
  %v767 = vpop.f32.mrb[0].mxu0
  %v768 = vpop.f32.mrb[0].mxu0
  %v769 = vpop.f32.mrb[0].mxu0
  %770 = vdwg.mxu0
  %v771 = vadd.f32 %v723, %v766
  %v772 = vxor.u32 %v771, 2147483648
  %v773 = vmul.f32 %v772, 1.442695
  %v774 = vpow.pop %v773
  %v775 = vadd.f32 %v774, 1.0
  %v776 = vrcp.pop %v775
  %v777 = vmul.f32 1.0, %v776
  %v778 = vtanh.pop %v771
  %v779 = vmul.f32 %v777, %v612
  %781 = vrot.lane.b32.xlu0 %v778, 64
  %v782 = vpop.permute.xlu0 %781
  %v784 = vmul.f32 %v777, %v782
  %786 = vrot.lane.b32.xlu0 %v784, 32
  %v787 = vpop.permute.xlu0 %786
  %v789 = vadd.f32 %v779, %v787
  %v790 = vtanh.pop %v789
  %792 = vrot.lane.b32.xlu0 %v790, 64
  %v793 = vpop.permute.xlu0 %792
  %v795 = vmul.f32 %v777, %v793
  %797 = vrot.lane.b32.xlu0 %v795, 32
  %v798 = vpop.permute.xlu0 %797
  %801 = vrot.lane.b32.xlu0 %v722, 64
  %v802 = vpop.permute.xlu0 %801
  %v804 = vsel %vm550, %v798, %v802
  %v805 = vpack.c.bf16 %v804, %v804
  %v807 = vsel %vm655, %v805, 0
  %809 = vmatprep.subr.bf16.mxu0 0
  %810 = vmatpush1.bf16.msra.mxu0 %v647
  %811 = vmatprep.subr.bf16.mxu0 0
  %812 = vmatpush1.bf16.msra.mxu0 %v648
  %813 = vmatprep.subr.bf16.mxu0 0
  %814 = vmatpush1.bf16.msra.mxu0 %v649
  %815 = vmatprep.subr.bf16.mxu0 0
  %816 = vmatpush1.bf16.msra.mxu0 %v650
  %817 = vmatprep.subr.bf16.mxu0 0
  %818 = vmatpush1.bf16.msra.mxu0 0
  %819 = vmatprep.subr.bf16.mxu0 0
  %820 = vmatpush1.bf16.msra.mxu0 0
  %821 = vmatprep.subr.bf16.mxu0 0
  %822 = vmatpush1.bf16.msra.mxu0 0
  %823 = vmatprep.subr.bf16.mxu0 0
  %824 = vmatpush1.bf16.msra.mxu0 0
  %825 = vmatprep.subr.bf16.mxu0 0
  %826 = vmatpush1.bf16.msra.mxu0 0
  %827 = vmatprep.subr.bf16.mxu0 0
  %828 = vmatpush1.bf16.msra.mxu0 0
  %829 = vmatprep.subr.bf16.mxu0 0
  %830 = vmatpush1.bf16.msra.mxu0 0
  %831 = vmatprep.subr.bf16.mxu0 0
  %832 = vmatpush1.bf16.msra.mxu0 0
  %833 = vmatprep.subr.bf16.mxu0 0
  %834 = vmatpush1.bf16.msra.mxu0 0
  %835 = vmatprep.subr.bf16.mxu0 0
  %836 = vmatpush1.bf16.msra.mxu0 0
  %837 = vmatprep.subr.bf16.mxu0 0
  %838 = vmatpush1.bf16.msra.mxu0 0
  %839 = vmatprep.subr.bf16.mxu0 0
  %840 = vmatpush1.bf16.msra.mxu0 0
  %841 = vmatprep.mubr.bf16.mxu0 0
  %842 = vmatmul.mubr.bf16.gmra.mrb[0].mxu0 %v807
  %v843 = vpop.f32.mrb[0].mxu0
  %v844 = vadd.f32 %v629, %v843
  %v845 = vpop.f32.mrb[0].mxu0
  %v846 = vpop.f32.mrb[0].mxu0
  %v847 = vpop.f32.mrb[0].mxu0
  %848 = vdwg.mxu0
  %v849 = vxor.u32 %v844, 2147483648
  %v850 = vmul.f32 %v849, 1.442695
  %v851 = vpow.pop %v850
  %v852 = vadd.f32 %v851, 1.0
  %v853 = vrcp.pop %v852
  %v854 = vmul.f32 1.0, %v853
  %v855 = vtanh.pop %v844
  %v856 = vmul.f32 %v854, %v716
  %858 = vrot.lane.b32.xlu0 %v855, 64
  %v859 = vpop.permute.xlu0 %858
  %v861 = vmul.f32 %v854, %v859
  %863 = vrot.lane.b32.xlu0 %v861, 32
  %v864 = vpop.permute.xlu0 %863
  %v866 = vadd.f32 %v856, %v864
  %v867 = vtanh.pop %v866
  %869 = vrot.lane.b32.xlu0 %v867, 64
  %v870 = vpop.permute.xlu0 %869
  %v872 = vmul.f32 %v854, %v870
  %v873 = vld [vmem:[#allocation2 + $0x10] sm:$0xff]
  %v874 = vpack.c.bf16 %v795, %v795
  %876 = vrot.lane.b32.xlu0 %v874, 32
  %v877 = vpop.permute.xlu0 %876
  %v879 = vsel %vm550, %v877, 0
  %881 = vmatprep.subr.bf16.mxu0 0
  %882 = vmatpush1.bf16.msra.mxu0 %v546
  %883 = vmatprep.subr.bf16.mxu0 0
  %884 = vmatpush1.bf16.msra.mxu0 %v547
  %885 = vmatprep.subr.bf16.mxu0 0
  %886 = vmatpush1.bf16.msra.mxu0 0
  %887 = vmatprep.subr.bf16.mxu0 0
  %888 = vmatpush1.bf16.msra.mxu0 0
  %889 = vmatprep.subr.bf16.mxu0 0
  %890 = vmatpush1.bf16.msra.mxu0 0
  %891 = vmatprep.subr.bf16.mxu0 0
  %892 = vmatpush1.bf16.msra.mxu0 0
  %893 = vmatprep.subr.bf16.mxu0 0
  %894 = vmatpush1.bf16.msra.mxu0 0
  %895 = vmatprep.subr.bf16.mxu0 0
  %896 = vmatpush1.bf16.msra.mxu0 0
  %897 = vmatprep.subr.bf16.mxu0 0
  %898 = vmatpush1.bf16.msra.mxu0 0
  %899 = vmatprep.subr.bf16.mxu0 0
  %900 = vmatpush1.bf16.msra.mxu0 0
  %901 = vmatprep.subr.bf16.mxu0 0
  %902 = vmatpush1.bf16.msra.mxu0 0
  %903 = vmatprep.subr.bf16.mxu0 0
  %904 = vmatpush1.bf16.msra.mxu0 0
  %905 = vmatprep.subr.bf16.mxu0 0
  %906 = vmatpush1.bf16.msra.mxu0 0
  %907 = vmatprep.subr.bf16.mxu0 0
  %908 = vmatpush1.bf16.msra.mxu0 0
  %909 = vmatprep.subr.bf16.mxu0 0
  %910 = vmatpush1.bf16.msra.mxu0 0
  %911 = vmatprep.subr.bf16.mxu0 0
  %912 = vmatpush1.bf16.msra.mxu0 0
  %913 = vmatprep.mubr.bf16.mxu0 0
  %914 = vmatmul.mubr.bf16.gmra.mrb[0].mxu0 %v879
  %v915 = vpop.f32.mrb[0].mxu0
  %v916 = vadd.f32 0.0, %v915
  %v917 = vpop.f32.mrb[0].mxu0
  %v918 = vpop.f32.mrb[0].mxu0
  %v919 = vpop.f32.mrb[0].mxu0
  %920 = vdwg.mxu0
  %v921 = vadd.f32 %v873, %v916
  %v922 = vxor.u32 %v921, 2147483648
  %v923 = vmul.f32 %v922, 1.442695
  %v924 = vpow.pop %v923
  %v925 = vadd.f32 %v924, 1.0
  %v926 = vrcp.pop %v925
  %v927 = vmul.f32 1.0, %v926
  %v928 = vtanh.pop %v921
  %v929 = vmul.f32 %v927, %v789
  %931 = vrot.lane.b32.xlu0 %v928, 64
  %v932 = vpop.permute.xlu0 %931
  %v934 = vmul.f32 %v927, %v932
  %936 = vrot.lane.b32.xlu0 %v934, 32
  %v937 = vpop.permute.xlu0 %936
  %v939 = vadd.f32 %v929, %v937
  %v940 = vtanh.pop %v939
  %942 = vrot.lane.b32.xlu0 %v940, 64
  %v943 = vpop.permute.xlu0 %942
  %v945 = vmul.f32 %v927, %v943
  %947 = vrot.lane.b32.xlu0 %v945, 32
  %v948 = vpop.permute.xlu0 %947
  %951 = vrot.lane.b32.xlu0 %v872, 64
  %v952 = vpop.permute.xlu0 %951
  %v954 = vsel %vm550, %v948, %v952
  %v955 = vpack.c.bf16 %v954, %v954
  %v957 = vsel %vm655, %v955, 0
  %959 = vmatprep.subr.bf16.mxu0 0
  %960 = vmatpush1.bf16.msra.mxu0 %v647
  %961 = vmatprep.subr.bf16.mxu0 0
  %962 = vmatpush1.bf16.msra.mxu0 %v648
  %963 = vmatprep.subr.bf16.mxu0 0
  %964 = vmatpush1.bf16.msra.mxu0 %v649
  %965 = vmatprep.subr.bf16.mxu0 0
  %966 = vmatpush1.bf16.msra.mxu0 %v650
  %967 = vmatprep.subr.bf16.mxu0 0
  %968 = vmatpush1.bf16.msra.mxu0 0
  %969 = vmatprep.subr.bf16.mxu0 0
  %970 = vmatpush1.bf16.msra.mxu0 0
  %971 = vmatprep.subr.bf16.mxu0 0
  %972 = vmatpush1.bf16.msra.mxu0 0
  %973 = vmatprep.subr.bf16.mxu0 0
  %974 = vmatpush1.bf16.msra.mxu0 0
  %975 = vmatprep.subr.bf16.mxu0 0
  %976 = vmatpush1.bf16.msra.mxu0 0
  %977 = vmatprep.subr.bf16.mxu0 0
  %978 = vmatpush1.bf16.msra.mxu0 0
  %979 = vmatprep.subr.bf16.mxu0 0
  %980 = vmatpush1.bf16.msra.mxu0 0
  %981 = vmatprep.subr.bf16.mxu0 0
  %982 = vmatpush1.bf16.msra.mxu0 0
  %983 = vmatprep.subr.bf16.mxu0 0
  %984 = vmatpush1.bf16.msra.mxu0 0
  %985 = vmatprep.subr.bf16.mxu0 0
  %986 = vmatpush1.bf16.msra.mxu0 0
  %987 = vmatprep.subr.bf16.mxu0 0
  %988 = vmatpush1.bf16.msra.mxu0 0
  %989 = vmatprep.subr.bf16.mxu0 0
  %990 = vmatpush1.bf16.msra.mxu0 0
  %991 = vmatprep.mubr.bf16.mxu0 0
  %992 = vmatmul.mubr.bf16.gmra.mrb[0].mxu0 %v957
  %v993 = vpop.f32.mrb[0].mxu0
  %v994 = vadd.f32 %v629, %v993
  %v995 = vpop.f32.mrb[0].mxu0
  %v996 = vpop.f32.mrb[0].mxu0
  %v997 = vpop.f32.mrb[0].mxu0
  %998 = vdwg.mxu0
  %v999 = vxor.u32 %v994, 2147483648
  %v1000 = vmul.f32 %v999, 1.442695
  %v1001 = vpow.pop %v1000
  %v1002 = vadd.f32 %v1001, 1.0
  %v1003 = vrcp.pop %v1002
  %v1004 = vmul.f32 1.0, %v1003
  %v1005 = vtanh.pop %v994
  %v1006 = vmul.f32 %v1004, %v866
  %1008 = vrot.lane.b32.xlu0 %v1005, 64
  %v1009 = vpop.permute.xlu0 %1008
  %v1011 = vmul.f32 %v1004, %v1009
  %1013 = vrot.lane.b32.xlu0 %v1011, 32
  %v1014 = vpop.permute.xlu0 %1013
  %v1016 = vadd.f32 %v1006, %v1014
  %v1017 = vtanh.pop %v1016
  %1019 = vrot.lane.b32.xlu0 %v1017, 64
  %v1020 = vpop.permute.xlu0 %1019
  %v1022 = vmul.f32 %v1004, %v1020
  %v1023 = vld [vmem:[#allocation2 + $0x18] sm:$0xff]
  %v1024 = vpack.c.bf16 %v945, %v945
  %1026 = vrot.lane.b32.xlu0 %v1024, 32
  %v1027 = vpop.permute.xlu0 %1026
  %v1029 = vsel %vm550, %v1027, 0
  %1031 = vmatprep.subr.bf16.mxu0 0
  %1032 = vmatpush1.bf16.msra.mxu0 %v546
  %1033 = vmatprep.subr.bf16.mxu0 0
  %1034 = vmatpush1.bf16.msra.mxu0 %v547
  %1035 = vmatprep.subr.bf16.mxu0 0
  %1036 = vmatpush1.bf16.msra.mxu0 0
  %1037 = vmatprep.subr.bf16.mxu0 0
  %1038 = vmatpush1.bf16.msra.mxu0 0
  %1039 = vmatprep.subr.bf16.mxu0 0
  %1040 = vmatpush1.bf16.msra.mxu0 0
  %1041 = vmatprep.subr.bf16.mxu0 0
  %1042 = vmatpush1.bf16.msra.mxu0 0
  %1043 = vmatprep.subr.bf16.mxu0 0
  %1044 = vmatpush1.bf16.msra.mxu0 0
  %1045 = vmatprep.subr.bf16.mxu0 0
  %1046 = vmatpush1.bf16.msra.mxu0 0
  %1047 = vmatprep.subr.bf16.mxu0 0
  %1048 = vmatpush1.bf16.msra.mxu0 0
  %1049 = vmatprep.subr.bf16.mxu0 0
  %1050 = vmatpush1.bf16.msra.mxu0 0
  %1051 = vmatprep.subr.bf16.mxu0 0
  %1052 = vmatpush1.bf16.msra.mxu0 0
  %1053 = vmatprep.subr.bf16.mxu0 0
  %1054 = vmatpush1.bf16.msra.mxu0 0
  %1055 = vmatprep.subr.bf16.mxu0 0
  %1056 = vmatpush1.bf16.msra.mxu0 0
  %1057 = vmatprep.subr.bf16.mxu0 0
  %1058 = vmatpush1.bf16.msra.mxu0 0
  %1059 = vmatprep.subr.bf16.mxu0 0
  %1060 = vmatpush1.bf16.msra.mxu0 0
  %1061 = vmatprep.subr.bf16.mxu0 0
  %1062 = vmatpush1.bf16.msra.mxu0 0
  %1063 = vmatprep.mubr.bf16.mxu0 0
  %1064 = vmatmul.mubr.bf16.gmra.mrb[0].mxu0 %v1029
  %v1065 = vpop.f32.mrb[0].mxu0
  %v1066 = vadd.f32 0.0, %v1065
  %v1067 = vpop.f32.mrb[0].mxu0
  %v1068 = vpop.f32.mrb[0].mxu0
  %v1069 = vpop.f32.mrb[0].mxu0
  %1070 = vdwg.mxu0
  %v1071 = vadd.f32 %v1023, %v1066
  %v1072 = vxor.u32 %v1071, 2147483648
  %v1073 = vmul.f32 %v1072, 1.442695
  %v1074 = vpow.pop %v1073
  %v1075 = vadd.f32 %v1074, 1.0
  %v1076 = vrcp.pop %v1075
  %v1077 = vmul.f32 1.0, %v1076
  %v1078 = vtanh.pop %v1071
  %v1079 = vmul.f32 %v1077, %v939
  %1081 = vrot.lane.b32.xlu0 %v1078, 64
  %v1082 = vpop.permute.xlu0 %1081
  %v1084 = vmul.f32 %v1077, %v1082
  %1086 = vrot.lane.b32.xlu0 %v1084, 32
  %v1087 = vpop.permute.xlu0 %1086
  %v1089 = vadd.f32 %v1079, %v1087
  %v1090 = vtanh.pop %v1089
  %1092 = vrot.lane.b32.xlu0 %v1090, 64
  %v1093 = vpop.permute.xlu0 %1092
  %v1095 = vmul.f32 %v1077, %v1093
  %1097 = vrot.lane.b32.xlu0 %v1095, 32
  %v1098 = vpop.permute.xlu0 %1097
  %1101 = vrot.lane.b32.xlu0 %v1022, 64
  %v1102 = vpop.permute.xlu0 %1101
  %v1104 = vsel %vm550, %v1098, %v1102
  %v1105 = vpack.c.bf16 %v1104, %v1104
  %v1107 = vsel %vm655, %v1105, 0
  %1109 = vmatprep.subr.bf16.mxu0 0
  %1110 = vmatpush1.bf16.msra.mxu0 %v647
  %1111 = vmatprep.subr.bf16.mxu0 0
  %1112 = vmatpush1.bf16.msra.mxu0 %v648
  %1113 = vmatprep.subr.bf16.mxu0 0
  %1114 = vmatpush1.bf16.msra.mxu0 %v649
  %1115 = vmatprep.subr.bf16.mxu0 0
  %1116 = vmatpush1.bf16.msra.mxu0 %v650
  %1117 = vmatprep.subr.bf16.mxu0 0
  %1118 = vmatpush1.bf16.msra.mxu0 0
  %1119 = vmatprep.subr.bf16.mxu0 0
  %1120 = vmatpush1.bf16.msra.mxu0 0
  %1121 = vmatprep.subr.bf16.mxu0 0
  %1122 = vmatpush1.bf16.msra.mxu0 0
  %1123 = vmatprep.subr.bf16.mxu0 0
  %1124 = vmatpush1.bf16.msra.mxu0 0
  %1125 = vmatprep.subr.bf16.mxu0 0
  %1126 = vmatpush1.bf16.msra.mxu0 0
  %1127 = vmatprep.subr.bf16.mxu0 0
  %1128 = vmatpush1.bf16.msra.mxu0 0
  %1129 = vmatprep.subr.bf16.mxu0 0
  %1130 = vmatpush1.bf16.msra.mxu0 0
  %1131 = vmatprep.subr.bf16.mxu0 0
  %1132 = vmatpush1.bf16.msra.mxu0 0
  %1133 = vmatprep.subr.bf16.mxu0 0
  %1134 = vmatpush1.bf16.msra.mxu0 0
  %1135 = vmatprep.subr.bf16.mxu0 0
  %1136 = vmatpush1.bf16.msra.mxu0 0
  %1137 = vmatprep.subr.bf16.mxu0 0
  %1138 = vmatpush1.bf16.msra.mxu0 0
  %1139 = vmatprep.subr.bf16.mxu0 0
  %1140 = vmatpush1.bf16.msra.mxu0 0
  %1141 = vmatprep.mubr.bf16.mxu0 0
  %1142 = vmatmul.mubr.bf16.gmra.mrb[0].mxu0 %v1107
  %v1143 = vpop.f32.mrb[0].mxu0
  %v1144 = vadd.f32 %v629, %v1143
  %v1145 = vpop.f32.mrb[0].mxu0
  %v1146 = vpop.f32.mrb[0].mxu0
  %v1147 = vpop.f32.mrb[0].mxu0
  %1148 = vdwg.mxu0
  %v1149 = vxor.u32 %v1144, 2147483648
  %v1150 = vmul.f32 %v1149, 1.442695
  %v1151 = vpow.pop %v1150
  %v1152 = vadd.f32 %v1151, 1.0
  %v1153 = vrcp.pop %v1152
  %v1154 = vmul.f32 1.0, %v1153
  %v1155 = vtanh.pop %v1144
  %v1156 = vmul.f32 %v1154, %v1016
  %1158 = vrot.lane.b32.xlu0 %v1155, 64
  %v1159 = vpop.permute.xlu0 %1158
  %v1161 = vmul.f32 %v1154, %v1159
  %1163 = vrot.lane.b32.xlu0 %v1161, 32
  %v1164 = vpop.permute.xlu0 %1163
  %v1166 = vadd.f32 %v1156, %v1164
  %v1167 = vtanh.pop %v1166
  %1169 = vrot.lane.b32.xlu0 %v1167, 64
  %v1170 = vpop.permute.xlu0 %1169
  %v1172 = vmul.f32 %v1154, %v1170
  %v1173 = vld [vmem:[#allocation2 + $0x20] sm:$0xff]
  %v1174 = vpack.c.bf16 %v1095, %v1095
  %1176 = vrot.lane.b32.xlu0 %v1174, 32
  %v1177 = vpop.permute.xlu0 %1176
  %v1179 = vsel %vm550, %v1177, 0
  %1181 = vmatprep.subr.bf16.mxu0 0
  %1182 = vmatpush1.bf16.msra.mxu0 %v546
  %1183 = vmatprep.subr.bf16.mxu0 0
  %1184 = vmatpush1.bf16.msra.mxu0 %v547
  %1185 = vmatprep.subr.bf16.mxu0 0
  %1186 = vmatpush1.bf16.msra.mxu0 0
  %1187 = vmatprep.subr.bf16.mxu0 0
  %1188 = vmatpush1.bf16.msra.mxu0 0
  %1189 = vmatprep.subr.bf16.mxu0 0
  %1190 = vmatpush1.bf16.msra.mxu0 0
  %1191 = vmatprep.subr.bf16.mxu0 0
  %1192 = vmatpush1.bf16.msra.mxu0 0
  %1193 = vmatprep.subr.bf16.mxu0 0
  %1194 = vmatpush1.bf16.msra.mxu0 0
  %1195 = vmatprep.subr.bf16.mxu0 0
  %1196 = vmatpush1.bf16.msra.mxu0 0
  %1197 = vmatprep.subr.bf16.mxu0 0
  %1198 = vmatpush1.bf16.msra.mxu0 0
  %1199 = vmatprep.subr.bf16.mxu0 0
  %1200 = vmatpush1.bf16.msra.mxu0 0
  %1201 = vmatprep.subr.bf16.mxu0 0
  %1202 = vmatpush1.bf16.msra.mxu0 0
  %1203 = vmatprep.subr.bf16.mxu0 0
  %1204 = vmatpush1.bf16.msra.mxu0 0
  %1205 = vmatprep.subr.bf16.mxu0 0
  %1206 = vmatpush1.bf16.msra.mxu0 0
  %1207 = vmatprep.subr.bf16.mxu0 0
  %1208 = vmatpush1.bf16.msra.mxu0 0
  %1209 = vmatprep.subr.bf16.mxu0 0
  %1210 = vmatpush1.bf16.msra.mxu0 0
  %1211 = vmatprep.subr.bf16.mxu0 0
  %1212 = vmatpush1.bf16.msra.mxu0 0
  %1213 = vmatprep.mubr.bf16.mxu0 0
  %1214 = vmatmul.mubr.bf16.gmra.mrb[0].mxu0 %v1179
  %v1215 = vpop.f32.mrb[0].mxu0
  %v1216 = vadd.f32 0.0, %v1215
  %v1217 = vpop.f32.mrb[0].mxu0
  %v1218 = vpop.f32.mrb[0].mxu0
  %v1219 = vpop.f32.mrb[0].mxu0
  %1220 = vdwg.mxu0
  %v1221 = vadd.f32 %v1173, %v1216
  %v1222 = vxor.u32 %v1221, 2147483648
  %v1223 = vmul.f32 %v1222, 1.442695
  %v1224 = vpow.pop %v1223
  %v1225 = vadd.f32 %v1224, 1.0
  %v1226 = vrcp.pop %v1225
  %v1227 = vmul.f32 1.0, %v1226
  %v1228 = vtanh.pop %v1221
  %v1229 = vmul.f32 %v1227, %v1089
  %1231 = vrot.lane.b32.xlu0 %v1228, 64
  %v1232 = vpop.permute.xlu0 %1231
  %v1234 = vmul.f32 %v1227, %v1232
  %1236 = vrot.lane.b32.xlu0 %v1234, 32
  %v1237 = vpop.permute.xlu0 %1236
  %v1239 = vadd.f32 %v1229, %v1237
  %v1240 = vtanh.pop %v1239
  %1242 = vrot.lane.b32.xlu0 %v1240, 64
  %v1243 = vpop.permute.xlu0 %1242
  %v1245 = vmul.f32 %v1227, %v1243
  %1247 = vrot.lane.b32.xlu0 %v1245, 32
  %v1248 = vpop.permute.xlu0 %1247
  %1251 = vrot.lane.b32.xlu0 %v1172, 64
  %v1252 = vpop.permute.xlu0 %1251
  %v1254 = vsel %vm550, %v1248, %v1252
  %v1255 = vpack.c.bf16 %v1254, %v1254
  %v1257 = vsel %vm655, %v1255, 0
  %1259 = vmatprep.subr.bf16.mxu0 0
  %1260 = vmatpush1.bf16.msra.mxu0 %v647
  %1261 = vmatprep.subr.bf16.mxu0 0
  %1262 = vmatpush1.bf16.msra.mxu0 %v648
  %1263 = vmatprep.subr.bf16.mxu0 0
  %1264 = vmatpush1.bf16.msra.mxu0 %v649
  %1265 = vmatprep.subr.bf16.mxu0 0
  %1266 = vmatpush1.bf16.msra.mxu0 %v650
  %1267 = vmatprep.subr.bf16.mxu0 0
  %1268 = vmatpush1.bf16.msra.mxu0 0
  %1269 = vmatprep.subr.bf16.mxu0 0
  %1270 = vmatpush1.bf16.msra.mxu0 0
  %1271 = vmatprep.subr.bf16.mxu0 0
  %1272 = vmatpush1.bf16.msra.mxu0 0
  %1273 = vmatprep.subr.bf16.mxu0 0
  %1274 = vmatpush1.bf16.msra.mxu0 0
  %1275 = vmatprep.subr.bf16.mxu0 0
  %1276 = vmatpush1.bf16.msra.mxu0 0
  %1277 = vmatprep.subr.bf16.mxu0 0
  %1278 = vmatpush1.bf16.msra.mxu0 0
  %1279 = vmatprep.subr.bf16.mxu0 0
  %1280 = vmatpush1.bf16.msra.mxu0 0
  %1281 = vmatprep.subr.bf16.mxu0 0
  %1282 = vmatpush1.bf16.msra.mxu0 0
  %1283 = vmatprep.subr.bf16.mxu0 0
  %1284 = vmatpush1.bf16.msra.mxu0 0
  %1285 = vmatprep.subr.bf16.mxu0 0
  %1286 = vmatpush1.bf16.msra.mxu0 0
  %1287 = vmatprep.subr.bf16.mxu0 0
  %1288 = vmatpush1.bf16.msra.mxu0 0
  %1289 = vmatprep.subr.bf16.mxu0 0
  %1290 = vmatpush1.bf16.msra.mxu0 0
  %1291 = vmatprep.mubr.bf16.mxu0 0
  %1292 = vmatmul.mubr.bf16.gmra.mrb[0].mxu0 %v1257
  %v1293 = vpop.f32.mrb[0].mxu0
  %v1294 = vadd.f32 %v629, %v1293
  %v1295 = vpop.f32.mrb[0].mxu0
  %v1296 = vpop.f32.mrb[0].mxu0
  %v1297 = vpop.f32.mrb[0].mxu0
  %1298 = vdwg.mxu0
  %v1299 = vxor.u32 %v1294, 2147483648
  %v1300 = vmul.f32 %v1299, 1.442695
  %v1301 = vpow.pop %v1300
  %v1302 = vadd.f32 %v1301, 1.0
  %v1303 = vrcp.pop %v1302
  %v1304 = vmul.f32 1.0, %v1303
  %v1305 = vtanh.pop %v1294
  %v1306 = vmul.f32 %v1304, %v1166
  %1308 = vrot.lane.b32.xlu0 %v1305, 64
  %v1309 = vpop.permute.xlu0 %1308
  %v1311 = vmul.f32 %v1304, %v1309
  %1313 = vrot.lane.b32.xlu0 %v1311, 32
  %v1314 = vpop.permute.xlu0 %1313
  %v1316 = vadd.f32 %v1306, %v1314
  %v1317 = vtanh.pop %v1316
  %1319 = vrot.lane.b32.xlu0 %v1317, 64
  %v1320 = vpop.permute.xlu0 %1319
  %v1322 = vmul.f32 %v1304, %v1320
  %v1323 = vld [vmem:[#allocation2 + $0x28] sm:$0xff]
  %v1324 = vpack.c.bf16 %v1245, %v1245
  %1326 = vrot.lane.b32.xlu0 %v1324, 32
  %v1327 = vpop.permute.xlu0 %1326
  %v1329 = vsel %vm550, %v1327, 0
  %1331 = vmatprep.subr.bf16.mxu0 0
  %1332 = vmatpush1.bf16.msra.mxu0 %v546
  %1333 = vmatprep.subr.bf16.mxu0 0
  %1334 = vmatpush1.bf16.msra.mxu0 %v547
  %1335 = vmatprep.subr.bf16.mxu0 0
  %1336 = vmatpush1.bf16.msra.mxu0 0
  %1337 = vmatprep.subr.bf16.mxu0 0
  %1338 = vmatpush1.bf16.msra.mxu0 0
  %1339 = vmatprep.subr.bf16.mxu0 0
  %1340 = vmatpush1.bf16.msra.mxu0 0
  %1341 = vmatprep.subr.bf16.mxu0 0
  %1342 = vmatpush1.bf16.msra.mxu0 0
  %1343 = vmatprep.subr.bf16.mxu0 0
  %1344 = vmatpush1.bf16.msra.mxu0 0
  %1345 = vmatprep.subr.bf16.mxu0 0
  %1346 = vmatpush1.bf16.msra.mxu0 0
  %1347 = vmatprep.subr.bf16.mxu0 0
  %1348 = vmatpush1.bf16.msra.mxu0 0
  %1349 = vmatprep.subr.bf16.mxu0 0
  %1350 = vmatpush1.bf16.msra.mxu0 0
  %1351 = vmatprep.subr.bf16.mxu0 0
  %1352 = vmatpush1.bf16.msra.mxu0 0
  %1353 = vmatprep.subr.bf16.mxu0 0
  %1354 = vmatpush1.bf16.msra.mxu0 0
  %1355 = vmatprep.subr.bf16.mxu0 0
  %1356 = vmatpush1.bf16.msra.mxu0 0
  %1357 = vmatprep.subr.bf16.mxu0 0
  %1358 = vmatpush1.bf16.msra.mxu0 0
  %1359 = vmatprep.subr.bf16.mxu0 0
  %1360 = vmatpush1.bf16.msra.mxu0 0
  %1361 = vmatprep.subr.bf16.mxu0 0
  %1362 = vmatpush1.bf16.msra.mxu0 0
  %1363 = vmatprep.mubr.bf16.mxu0 0
  %1364 = vmatmul.mubr.bf16.gmra.mrb[0].mxu0 %v1329
  %v1365 = vpop.f32.mrb[0].mxu0
  %v1366 = vadd.f32 0.0, %v1365
  %v1367 = vpop.f32.mrb[0].mxu0
  %v1368 = vpop.f32.mrb[0].mxu0
  %v1369 = vpop.f32.mrb[0].mxu0
  %1370 = vdwg.mxu0
  %v1371 = vadd.f32 %v1323, %v1366
  %v1372 = vxor.u32 %v1371, 2147483648
  %v1373 = vmul.f32 %v1372, 1.442695
  %v1374 = vpow.pop %v1373
  %v1375 = vadd.f32 %v1374, 1.0
  %v1376 = vrcp.pop %v1375
  %v1377 = vmul.f32 1.0, %v1376
  %v1378 = vtanh.pop %v1371
  %v1379 = vmul.f32 %v1377, %v1239
  %1381 = vrot.lane.b32.xlu0 %v1378, 64
  %v1382 = vpop.permute.xlu0 %1381
  %v1384 = vmul.f32 %v1377, %v1382
  %1386 = vrot.lane.b32.xlu0 %v1384, 32
  %v1387 = vpop.permute.xlu0 %1386
  %v1389 = vadd.f32 %v1379, %v1387
  %v1390 = vtanh.pop %v1389
  %1392 = vrot.lane.b32.xlu0 %v1390, 64
  %v1393 = vpop.permute.xlu0 %1392
  %v1395 = vmul.f32 %v1377, %v1393
  %1397 = vrot.lane.b32.xlu0 %v1395, 32
  %v1398 = vpop.permute.xlu0 %1397
  %1401 = vrot.lane.b32.xlu0 %v1322, 64
  %v1402 = vpop.permute.xlu0 %1401
  %v1404 = vsel %vm550, %v1398, %v1402
  %v1405 = vpack.c.bf16 %v1404, %v1404
  %v1407 = vsel %vm655, %v1405, 0
  %1409 = vmatprep.subr.bf16.mxu0 0
  %1410 = vmatpush1.bf16.msra.mxu0 %v647
  %1411 = vmatprep.subr.bf16.mxu0 0
  %1412 = vmatpush1.bf16.msra.mxu0 %v648
  %1413 = vmatprep.subr.bf16.mxu0 0
  %1414 = vmatpush1.bf16.msra.mxu0 %v649
  %1415 = vmatprep.subr.bf16.mxu0 0
  %1416 = vmatpush1.bf16.msra.mxu0 %v650
  %1417 = vmatprep.subr.bf16.mxu0 0
  %1418 = vmatpush1.bf16.msra.mxu0 0
  %1419 = vmatprep.subr.bf16.mxu0 0
  %1420 = vmatpush1.bf16.msra.mxu0 0
  %1421 = vmatprep.subr.bf16.mxu0 0
  %1422 = vmatpush1.bf16.msra.mxu0 0
  %1423 = vmatprep.subr.bf16.mxu0 0
  %1424 = vmatpush1.bf16.msra.mxu0 0
  %1425 = vmatprep.subr.bf16.mxu0 0
  %1426 = vmatpush1.bf16.msra.mxu0 0
  %1427 = vmatprep.subr.bf16.mxu0 0
  %1428 = vmatpush1.bf16.msra.mxu0 0
  %1429 = vmatprep.subr.bf16.mxu0 0
  %1430 = vmatpush1.bf16.msra.mxu0 0
  %1431 = vmatprep.subr.bf16.mxu0 0
  %1432 = vmatpush1.bf16.msra.mxu0 0
  %1433 = vmatprep.subr.bf16.mxu0 0
  %1434 = vmatpush1.bf16.msra.mxu0 0
  %1435 = vmatprep.subr.bf16.mxu0 0
  %1436 = vmatpush1.bf16.msra.mxu0 0
  %1437 = vmatprep.subr.bf16.mxu0 0
  %1438 = vmatpush1.bf16.msra.mxu0 0
  %1439 = vmatprep.subr.bf16.mxu0 0
  %1440 = vmatpush1.bf16.msra.mxu0 0
  %1441 = vmatprep.mubr.bf16.mxu0 0
  %1442 = vmatmul.mubr.bf16.gmra.mrb[0].mxu0 %v1407
  %v1443 = vpop.f32.mrb[0].mxu0
  %v1444 = vadd.f32 %v629, %v1443
  %v1445 = vpop.f32.mrb[0].mxu0
  %v1446 = vpop.f32.mrb[0].mxu0
  %v1447 = vpop.f32.mrb[0].mxu0
  %1448 = vdwg.mxu0
  %v1449 = vxor.u32 %v1444, 2147483648
  %v1450 = vmul.f32 %v1449, 1.442695
  %v1451 = vpow.pop %v1450
  %v1452 = vadd.f32 %v1451, 1.0
  %v1453 = vrcp.pop %v1452
  %v1454 = vmul.f32 1.0, %v1453
  %v1455 = vtanh.pop %v1444
  %v1456 = vmul.f32 %v1454, %v1316
  %1458 = vrot.lane.b32.xlu0 %v1455, 64
  %v1459 = vpop.permute.xlu0 %1458
  %v1461 = vmul.f32 %v1454, %v1459
  %1463 = vrot.lane.b32.xlu0 %v1461, 32
  %v1464 = vpop.permute.xlu0 %1463
  %v1466 = vadd.f32 %v1456, %v1464
  %v1467 = vtanh.pop %v1466
  %1469 = vrot.lane.b32.xlu0 %v1467, 64
  %v1470 = vpop.permute.xlu0 %1469
  %v1472 = vmul.f32 %v1454, %v1470
  %v1473 = vld [vmem:[#allocation2 + $0x30] sm:$0xff]
  %v1474 = vpack.c.bf16 %v1395, %v1395
  %1476 = vrot.lane.b32.xlu0 %v1474, 32
  %v1477 = vpop.permute.xlu0 %1476
  %v1479 = vsel %vm550, %v1477, 0
  %1481 = vmatprep.subr.bf16.mxu0 0
  %1482 = vmatpush1.bf16.msra.mxu0 %v546
  %1483 = vmatprep.subr.bf16.mxu0 0
  %1484 = vmatpush1.bf16.msra.mxu0 %v547
  %1485 = vmatprep.subr.bf16.mxu0 0
  %1486 = vmatpush1.bf16.msra.mxu0 0
  %1487 = vmatprep.subr.bf16.mxu0 0
  %1488 = vmatpush1.bf16.msra.mxu0 0
  %1489 = vmatprep.subr.bf16.mxu0 0
  %1490 = vmatpush1.bf16.msra.mxu0 0
  %1491 = vmatprep.subr.bf16.mxu0 0
  %1492 = vmatpush1.bf16.msra.mxu0 0
  %1493 = vmatprep.subr.bf16.mxu0 0
  %1494 = vmatpush1.bf16.msra.mxu0 0
  %1495 = vmatprep.subr.bf16.mxu0 0
  %1496 = vmatpush1.bf16.msra.mxu0 0
  %1497 = vmatprep.subr.bf16.mxu0 0
  %1498 = vmatpush1.bf16.msra.mxu0 0
  %1499 = vmatprep.subr.bf16.mxu0 0
  %1500 = vmatpush1.bf16.msra.mxu0 0
  %1501 = vmatprep.subr.bf16.mxu0 0
  %1502 = vmatpush1.bf16.msra.mxu0 0
  %1503 = vmatprep.subr.bf16.mxu0 0
  %1504 = vmatpush1.bf16.msra.mxu0 0
  %1505 = vmatprep.subr.bf16.mxu0 0
  %1506 = vmatpush1.bf16.msra.mxu0 0
  %1507 = vmatprep.subr.bf16.mxu0 0
  %1508 = vmatpush1.bf16.msra.mxu0 0
  %1509 = vmatprep.subr.bf16.mxu0 0
  %1510 = vmatpush1.bf16.msra.mxu0 0
  %1511 = vmatprep.subr.bf16.mxu0 0
  %1512 = vmatpush1.bf16.msra.mxu0 0
  %1513 = vmatprep.mubr.bf16.mxu0 0
  %1514 = vmatmul.mubr.bf16.gmra.mrb[0].mxu0 %v1479
  %v1515 = vpop.f32.mrb[0].mxu0
  %v1516 = vadd.f32 0.0, %v1515
  %v1517 = vpop.f32.mrb[0].mxu0
  %v1518 = vpop.f32.mrb[0].mxu0
  %v1519 = vpop.f32.mrb[0].mxu0
  %1520 = vdwg.mxu0
  %v1521 = vadd.f32 %v1473, %v1516
  %v1522 = vxor.u32 %v1521, 2147483648
  %v1523 = vmul.f32 %v1522, 1.442695
  %v1524 = vpow.pop %v1523
  %v1525 = vadd.f32 %v1524, 1.0
  %v1526 = vrcp.pop %v1525
  %v1527 = vmul.f32 1.0, %v1526
  %v1528 = vtanh.pop %v1521
  %v1529 = vmul.f32 %v1527, %v1389
  %1531 = vrot.lane.b32.xlu0 %v1528, 64
  %v1532 = vpop.permute.xlu0 %1531
  %v1534 = vmul.f32 %v1527, %v1532
  %1536 = vrot.lane.b32.xlu0 %v1534, 32
  %v1537 = vpop.permute.xlu0 %1536
  %v1539 = vadd.f32 %v1529, %v1537
  %v1540 = vtanh.pop %v1539
  %1542 = vrot.lane.b32.xlu0 %v1540, 64
  %v1543 = vpop.permute.xlu0 %1542
  %v1545 = vmul.f32 %v1527, %v1543
  %1547 = vrot.lane.b32.xlu0 %v1545, 32
  %v1548 = vpop.permute.xlu0 %1547
  %1551 = vrot.lane.b32.xlu0 %v1472, 64
  %v1552 = vpop.permute.xlu0 %1551
  %v1554 = vsel %vm550, %v1548, %v1552
  %v1555 = vpack.c.bf16 %v1554, %v1554
  %v1557 = vsel %vm655, %v1555, 0
  %1559 = vmatprep.subr.bf16.mxu0 0
  %1560 = vmatpush1.bf16.msra.mxu0 %v647
  %1561 = vmatprep.subr.bf16.mxu0 0
  %1562 = vmatpush1.bf16.msra.mxu0 %v648
  %1563 = vmatprep.subr.bf16.mxu0 0
  %1564 = vmatpush1.bf16.msra.mxu0 %v649
  %1565 = vmatprep.subr.bf16.mxu0 0
  %1566 = vmatpush1.bf16.msra.mxu0 %v650
  %1567 = vmatprep.subr.bf16.mxu0 0
  %1568 = vmatpush1.bf16.msra.mxu0 0
  %1569 = vmatprep.subr.bf16.mxu0 0
  %1570 = vmatpush1.bf16.msra.mxu0 0
  %1571 = vmatprep.subr.bf16.mxu0 0
  %1572 = vmatpush1.bf16.msra.mxu0 0
  %1573 = vmatprep.subr.bf16.mxu0 0
  %1574 = vmatpush1.bf16.msra.mxu0 0
  %1575 = vmatprep.subr.bf16.mxu0 0
  %1576 = vmatpush1.bf16.msra.mxu0 0
  %1577 = vmatprep.subr.bf16.mxu0 0
  %1578 = vmatpush1.bf16.msra.mxu0 0
  %1579 = vmatprep.subr.bf16.mxu0 0
  %1580 = vmatpush1.bf16.msra.mxu0 0
  %1581 = vmatprep.subr.bf16.mxu0 0
  %1582 = vmatpush1.bf16.msra.mxu0 0
  %1583 = vmatprep.subr.bf16.mxu0 0
  %1584 = vmatpush1.bf16.msra.mxu0 0
  %1585 = vmatprep.subr.bf16.mxu0 0
  %1586 = vmatpush1.bf16.msra.mxu0 0
  %1587 = vmatprep.subr.bf16.mxu0 0
  %1588 = vmatpush1.bf16.msra.mxu0 0
  %1589 = vmatprep.subr.bf16.mxu0 0
  %1590 = vmatpush1.bf16.msra.mxu0 0
  %1591 = vmatprep.mubr.bf16.mxu0 0
  %1592 = vmatmul.mubr.bf16.gmra.mrb[0].mxu0 %v1557
  %v1593 = vpop.f32.mrb[0].mxu0
  %v1594 = vadd.f32 %v629, %v1593
  %v1595 = vpop.f32.mrb[0].mxu0
  %v1596 = vpop.f32.mrb[0].mxu0
  %v1597 = vpop.f32.mrb[0].mxu0
  %1598 = vdwg.mxu0
  %v1599 = vxor.u32 %v1594, 2147483648
  %v1600 = vmul.f32 %v1599, 1.442695
  %v1601 = vpow.pop %v1600
  %v1602 = vadd.f32 %v1601, 1.0
  %v1603 = vrcp.pop %v1602
  %v1604 = vmul.f32 1.0, %v1603
  %v1605 = vtanh.pop %v1594
  %v1606 = vmul.f32 %v1604, %v1466
  %1608 = vrot.lane.b32.xlu0 %v1605, 64
  %v1609 = vpop.permute.xlu0 %1608
  %v1611 = vmul.f32 %v1604, %v1609
  %1613 = vrot.lane.b32.xlu0 %v1611, 32
  %v1614 = vpop.permute.xlu0 %1613
  %v1616 = vadd.f32 %v1606, %v1614
  %v1617 = vtanh.pop %v1616
  %1619 = vrot.lane.b32.xlu0 %v1617, 64
  %v1620 = vpop.permute.xlu0 %1619
  %v1622 = vmul.f32 %v1604, %v1620
  %v1623 = vld [vmem:[#allocation2 + $0x38] sm:$0xff]
  %v1624 = vpack.c.bf16 %v1545, %v1545
  %1626 = vrot.lane.b32.xlu0 %v1624, 32
  %v1627 = vpop.permute.xlu0 %1626
  %v1629 = vsel %vm550, %v1627, 0
  %1631 = vmatprep.subr.bf16.mxu0 0
  %1632 = vmatpush1.bf16.msra.mxu0 %v546
  %1633 = vmatprep.subr.bf16.mxu0 0
  %1634 = vmatpush1.bf16.msra.mxu0 %v547
  %1635 = vmatprep.subr.bf16.mxu0 0
  %1636 = vmatpush1.bf16.msra.mxu0 0
  %1637 = vmatprep.subr.bf16.mxu0 0
  %1638 = vmatpush1.bf16.msra.mxu0 0
  %1639 = vmatprep.subr.bf16.mxu0 0
  %1640 = vmatpush1.bf16.msra.mxu0 0
  %1641 = vmatprep.subr.bf16.mxu0 0
  %1642 = vmatpush1.bf16.msra.mxu0 0
  %1643 = vmatprep.subr.bf16.mxu0 0
  %1644 = vmatpush1.bf16.msra.mxu0 0
  %1645 = vmatprep.subr.bf16.mxu0 0
  %1646 = vmatpush1.bf16.msra.mxu0 0
  %1647 = vmatprep.subr.bf16.mxu0 0
  %1648 = vmatpush1.bf16.msra.mxu0 0
  %1649 = vmatprep.subr.bf16.mxu0 0
  %1650 = vmatpush1.bf16.msra.mxu0 0
  %1651 = vmatprep.subr.bf16.mxu0 0
  %1652 = vmatpush1.bf16.msra.mxu0 0
  %1653 = vmatprep.subr.bf16.mxu0 0
  %1654 = vmatpush1.bf16.msra.mxu0 0
  %1655 = vmatprep.subr.bf16.mxu0 0
  %1656 = vmatpush1.bf16.msra.mxu0 0
  %1657 = vmatprep.subr.bf16.mxu0 0
  %1658 = vmatpush1.bf16.msra.mxu0 0
  %1659 = vmatprep.subr.bf16.mxu0 0
  %1660 = vmatpush1.bf16.msra.mxu0 0
  %1661 = vmatprep.subr.bf16.mxu0 0
  %1662 = vmatpush1.bf16.msra.mxu0 0
  %1663 = vmatprep.mubr.bf16.mxu0 0
  %1664 = vmatmul.mubr.bf16.gmra.mrb[0].mxu0 %v1629
  %v1665 = vpop.f32.mrb[0].mxu0
  %v1666 = vadd.f32 0.0, %v1665
  %v1667 = vpop.f32.mrb[0].mxu0
  %v1668 = vpop.f32.mrb[0].mxu0
  %v1669 = vpop.f32.mrb[0].mxu0
  %1670 = vdwg.mxu0
  %v1671 = vadd.f32 %v1623, %v1666
  %v1672 = vxor.u32 %v1671, 2147483648
  %v1673 = vmul.f32 %v1672, 1.442695
  %v1674 = vpow.pop %v1673
  %v1675 = vadd.f32 %v1674, 1.0
  %v1676 = vrcp.pop %v1675
  %v1677 = vmul.f32 1.0, %v1676
  %v1678 = vtanh.pop %v1671
  %v1679 = vmul.f32 %v1677, %v1539
  %1681 = vrot.lane.b32.xlu0 %v1678, 64
  %v1682 = vpop.permute.xlu0 %1681
  %v1684 = vmul.f32 %v1677, %v1682
  %1686 = vrot.lane.b32.xlu0 %v1684, 32
  %v1687 = vpop.permute.xlu0 %1686
  %v1689 = vadd.f32 %v1679, %v1687
  %v1690 = vtanh.pop %v1689
  %1692 = vrot.lane.b32.xlu0 %v1690, 64
  %v1693 = vpop.permute.xlu0 %1692
  %v1695 = vmul.f32 %v1677, %v1693
  %1697 = vrot.lane.b32.xlu0 %v1695, 32
  %v1698 = vpop.permute.xlu0 %1697
  %1701 = vrot.lane.b32.xlu0 %v1622, 64
  %v1702 = vpop.permute.xlu0 %1701
  %v1704 = vsel %vm550, %v1698, %v1702
  %v1705 = vpack.c.bf16 %v1704, %v1704
  %v1707 = vsel %vm655, %v1705, 0
  %1709 = vmatprep.subr.bf16.mxu0 0
  %1710 = vmatpush1.bf16.msra.mxu0 %v647
  %1711 = vmatprep.subr.bf16.mxu0 0
  %1712 = vmatpush1.bf16.msra.mxu0 %v648
  %1713 = vmatprep.subr.bf16.mxu0 0
  %1714 = vmatpush1.bf16.msra.mxu0 %v649
  %1715 = vmatprep.subr.bf16.mxu0 0
  %1716 = vmatpush1.bf16.msra.mxu0 %v650
  %1717 = vmatprep.subr.bf16.mxu0 0
  %1718 = vmatpush1.bf16.msra.mxu0 0
  %1719 = vmatprep.subr.bf16.mxu0 0
  %1720 = vmatpush1.bf16.msra.mxu0 0
  %1721 = vmatprep.subr.bf16.mxu0 0
  %1722 = vmatpush1.bf16.msra.mxu0 0
  %1723 = vmatprep.subr.bf16.mxu0 0
  %1724 = vmatpush1.bf16.msra.mxu0 0
  %1725 = vmatprep.subr.bf16.mxu0 0
  %1726 = vmatpush1.bf16.msra.mxu0 0
  %1727 = vmatprep.subr.bf16.mxu0 0
  %1728 = vmatpush1.bf16.msra.mxu0 0
  %1729 = vmatprep.subr.bf16.mxu0 0
  %1730 = vmatpush1.bf16.msra.mxu0 0
  %1731 = vmatprep.subr.bf16.mxu0 0
  %1732 = vmatpush1.bf16.msra.mxu0 0
  %1733 = vmatprep.subr.bf16.mxu0 0
  %1734 = vmatpush1.bf16.msra.mxu0 0
  %1735 = vmatprep.subr.bf16.mxu0 0
  %1736 = vmatpush1.bf16.msra.mxu0 0
  %1737 = vmatprep.subr.bf16.mxu0 0
  %1738 = vmatpush1.bf16.msra.mxu0 0
  %1739 = vmatprep.subr.bf16.mxu0 0
  %1740 = vmatpush1.bf16.msra.mxu0 0
  %1741 = vmatprep.mubr.bf16.mxu0 0
  %1742 = vmatmul.mubr.bf16.gmra.mrb[0].mxu0 %v1707
  %v1743 = vpop.f32.mrb[0].mxu0
  %v1744 = vadd.f32 %v629, %v1743
  %v1745 = vpop.f32.mrb[0].mxu0
  %v1746 = vpop.f32.mrb[0].mxu0
  %v1747 = vpop.f32.mrb[0].mxu0
  %1748 = vdwg.mxu0
  %v1749 = vxor.u32 %v1744, 2147483648
  %v1750 = vmul.f32 %v1749, 1.442695
  %v1751 = vpow.pop %v1750
  %v1752 = vadd.f32 %v1751, 1.0
  %v1753 = vrcp.pop %v1752
  %v1754 = vmul.f32 1.0, %v1753
  %v1755 = vtanh.pop %v1744
  %v1756 = vmul.f32 %v1754, %v1616
  %1758 = vrot.lane.b32.xlu0 %v1755, 64
  %v1759 = vpop.permute.xlu0 %1758
  %v1761 = vmul.f32 %v1754, %v1759
  %1763 = vrot.lane.b32.xlu0 %v1761, 32
  %v1764 = vpop.permute.xlu0 %1763
  %v1766 = vadd.f32 %v1756, %v1764
  %v1767 = vtanh.pop %v1766
  %1769 = vrot.lane.b32.xlu0 %v1767, 64
  %v1770 = vpop.permute.xlu0 %1769
  %v1772 = vmul.f32 %v1754, %v1770
  %v1773 = vld [vmem:[#allocation2 + $0x40] sm:$0xff]
  %v1774 = vpack.c.bf16 %v1695, %v1695
  %1776 = vrot.lane.b32.xlu0 %v1774, 32
  %v1777 = vpop.permute.xlu0 %1776
  %v1779 = vsel %vm550, %v1777, 0
  %1781 = vmatprep.subr.bf16.mxu0 0
  %1782 = vmatpush1.bf16.msra.mxu0 %v546
  %1783 = vmatprep.subr.bf16.mxu0 0
  %1784 = vmatpush1.bf16.msra.mxu0 %v547
  %1785 = vmatprep.subr.bf16.mxu0 0
  %1786 = vmatpush1.bf16.msra.mxu0 0
  %1787 = vmatprep.subr.bf16.mxu0 0
  %1788 = vmatpush1.bf16.msra.mxu0 0
  %1789 = vmatprep.subr.bf16.mxu0 0
  %1790 = vmatpush1.bf16.msra.mxu0 0
  %1791 = vmatprep.subr.bf16.mxu0 0
  %1792 = vmatpush1.bf16.msra.mxu0 0
  %1793 = vmatprep.subr.bf16.mxu0 0
  %1794 = vmatpush1.bf16.msra.mxu0 0
  %1795 = vmatprep.subr.bf16.mxu0 0
  %1796 = vmatpush1.bf16.msra.mxu0 0
  %1797 = vmatprep.subr.bf16.mxu0 0
  %1798 = vmatpush1.bf16.msra.mxu0 0
  %1799 = vmatprep.subr.bf16.mxu0 0
  %1800 = vmatpush1.bf16.msra.mxu0 0
  %1801 = vmatprep.subr.bf16.mxu0 0
  %1802 = vmatpush1.bf16.msra.mxu0 0
  %1803 = vmatprep.subr.bf16.mxu0 0
  %1804 = vmatpush1.bf16.msra.mxu0 0
  %1805 = vmatprep.subr.bf16.mxu0 0
  %1806 = vmatpush1.bf16.msra.mxu0 0
  %1807 = vmatprep.subr.bf16.mxu0 0
  %1808 = vmatpush1.bf16.msra.mxu0 0
  %1809 = vmatprep.subr.bf16.mxu0 0
  %1810 = vmatpush1.bf16.msra.mxu0 0
  %1811 = vmatprep.subr.bf16.mxu0 0
  %1812 = vmatpush1.bf16.msra.mxu0 0
  %1813 = vmatprep.mubr.bf16.mxu0 0
  %1814 = vmatmul.mubr.bf16.gmra.mrb[0].mxu0 %v1779
  %v1815 = vpop.f32.mrb[0].mxu0
  %v1816 = vadd.f32 0.0, %v1815
  %v1817 = vpop.f32.mrb[0].mxu0
  %v1818 = vpop.f32.mrb[0].mxu0
  %v1819 = vpop.f32.mrb[0].mxu0
  %1820 = vdwg.mxu0
  %v1821 = vadd.f32 %v1773, %v1816
  %v1822 = vxor.u32 %v1821, 2147483648
  %v1823 = vmul.f32 %v1822, 1.442695
  %v1824 = vpow.pop %v1823
  %v1825 = vadd.f32 %v1824, 1.0
  %v1826 = vrcp.pop %v1825
  %v1827 = vmul.f32 1.0, %v1826
  %v1828 = vtanh.pop %v1821
  %v1829 = vmul.f32 %v1827, %v1689
  %1831 = vrot.lane.b32.xlu0 %v1828, 64
  %v1832 = vpop.permute.xlu0 %1831
  %v1834 = vmul.f32 %v1827, %v1832
  %1836 = vrot.lane.b32.xlu0 %v1834, 32
  %v1837 = vpop.permute.xlu0 %1836
  %v1839 = vadd.f32 %v1829, %v1837
  %v1840 = vtanh.pop %v1839
  %1842 = vrot.lane.b32.xlu0 %v1840, 64
  %v1843 = vpop.permute.xlu0 %1842
  %v1845 = vmul.f32 %v1827, %v1843
  %1847 = vrot.lane.b32.xlu0 %v1845, 32
  %v1848 = vpop.permute.xlu0 %1847
  %1851 = vrot.lane.b32.xlu0 %v1772, 64
  %v1852 = vpop.permute.xlu0 %1851
  %v1854 = vsel %vm550, %v1848, %v1852
  %v1855 = vpack.c.bf16 %v1854, %v1854
  %v1857 = vsel %vm655, %v1855, 0
  %1859 = vmatprep.subr.bf16.mxu0 0
  %1860 = vmatpush1.bf16.msra.mxu0 %v647
  %1861 = vmatprep.subr.bf16.mxu0 0
  %1862 = vmatpush1.bf16.msra.mxu0 %v648
  %1863 = vmatprep.subr.bf16.mxu0 0
  %1864 = vmatpush1.bf16.msra.mxu0 %v649
  %1865 = vmatprep.subr.bf16.mxu0 0
  %1866 = vmatpush1.bf16.msra.mxu0 %v650
  %1867 = vmatprep.subr.bf16.mxu0 0
  %1868 = vmatpush1.bf16.msra.mxu0 0
  %1869 = vmatprep.subr.bf16.mxu0 0
  %1870 = vmatpush1.bf16.msra.mxu0 0
  %1871 = vmatprep.subr.bf16.mxu0 0
  %1872 = vmatpush1.bf16.msra.mxu0 0
  %1873 = vmatprep.subr.bf16.mxu0 0
  %1874 = vmatpush1.bf16.msra.mxu0 0
  %1875 = vmatprep.subr.bf16.mxu0 0
  %1876 = vmatpush1.bf16.msra.mxu0 0
  %1877 = vmatprep.subr.bf16.mxu0 0
  %1878 = vmatpush1.bf16.msra.mxu0 0
  %1879 = vmatprep.subr.bf16.mxu0 0
  %1880 = vmatpush1.bf16.msra.mxu0 0
  %1881 = vmatprep.subr.bf16.mxu0 0
  %1882 = vmatpush1.bf16.msra.mxu0 0
  %1883 = vmatprep.subr.bf16.mxu0 0
  %1884 = vmatpush1.bf16.msra.mxu0 0
  %1885 = vmatprep.subr.bf16.mxu0 0
  %1886 = vmatpush1.bf16.msra.mxu0 0
  %1887 = vmatprep.subr.bf16.mxu0 0
  %1888 = vmatpush1.bf16.msra.mxu0 0
  %1889 = vmatprep.subr.bf16.mxu0 0
  %1890 = vmatpush1.bf16.msra.mxu0 0
  %1891 = vmatprep.mubr.bf16.mxu0 0
  %1892 = vmatmul.mubr.bf16.gmra.mrb[0].mxu0 %v1857
  %v1893 = vpop.f32.mrb[0].mxu0
  %v1894 = vadd.f32 %v629, %v1893
  %v1895 = vpop.f32.mrb[0].mxu0
  %v1896 = vpop.f32.mrb[0].mxu0
  %v1897 = vpop.f32.mrb[0].mxu0
  %1898 = vdwg.mxu0
  %v1899 = vxor.u32 %v1894, 2147483648
  %v1900 = vmul.f32 %v1899, 1.442695
  %v1901 = vpow.pop %v1900
  %v1902 = vadd.f32 %v1901, 1.0
  %v1903 = vrcp.pop %v1902
  %v1904 = vmul.f32 1.0, %v1903
  %v1905 = vtanh.pop %v1894
  %v1906 = vmul.f32 %v1904, %v1766
  %1908 = vrot.lane.b32.xlu0 %v1905, 64
  %v1909 = vpop.permute.xlu0 %1908
  %v1911 = vmul.f32 %v1904, %v1909
  %1913 = vrot.lane.b32.xlu0 %v1911, 32
  %v1914 = vpop.permute.xlu0 %1913
  %v1916 = vadd.f32 %v1906, %v1914
  %v1917 = vtanh.pop %v1916
  %1919 = vrot.lane.b32.xlu0 %v1917, 64
  %v1920 = vpop.permute.xlu0 %1919
  %v1922 = vmul.f32 %v1904, %v1920
  %v1923 = vld [vmem:[#allocation2 + $0x48] sm:$0xff]
  %v1924 = vpack.c.bf16 %v1845, %v1845
  %1926 = vrot.lane.b32.xlu0 %v1924, 32
  %v1927 = vpop.permute.xlu0 %1926
  %v1929 = vsel %vm550, %v1927, 0
  %1931 = vmatprep.subr.bf16.mxu0 0
  %1932 = vmatpush1.bf16.msra.mxu0 %v546
  %1933 = vmatprep.subr.bf16.mxu0 0
  %1934 = vmatpush1.bf16.msra.mxu0 %v547
  %1935 = vmatprep.subr.bf16.mxu0 0
  %1936 = vmatpush1.bf16.msra.mxu0 0
  %1937 = vmatprep.subr.bf16.mxu0 0
  %1938 = vmatpush1.bf16.msra.mxu0 0
  %1939 = vmatprep.subr.bf16.mxu0 0
  %1940 = vmatpush1.bf16.msra.mxu0 0
  %1941 = vmatprep.subr.bf16.mxu0 0
  %1942 = vmatpush1.bf16.msra.mxu0 0
  %1943 = vmatprep.subr.bf16.mxu0 0
  %1944 = vmatpush1.bf16.msra.mxu0 0
  %1945 = vmatprep.subr.bf16.mxu0 0
  %1946 = vmatpush1.bf16.msra.mxu0 0
  %1947 = vmatprep.subr.bf16.mxu0 0
  %1948 = vmatpush1.bf16.msra.mxu0 0
  %1949 = vmatprep.subr.bf16.mxu0 0
  %1950 = vmatpush1.bf16.msra.mxu0 0
  %1951 = vmatprep.subr.bf16.mxu0 0
  %1952 = vmatpush1.bf16.msra.mxu0 0
  %1953 = vmatprep.subr.bf16.mxu0 0
  %1954 = vmatpush1.bf16.msra.mxu0 0
  %1955 = vmatprep.subr.bf16.mxu0 0
  %1956 = vmatpush1.bf16.msra.mxu0 0
  %1957 = vmatprep.subr.bf16.mxu0 0
  %1958 = vmatpush1.bf16.msra.mxu0 0
  %1959 = vmatprep.subr.bf16.mxu0 0
  %1960 = vmatpush1.bf16.msra.mxu0 0
  %1961 = vmatprep.subr.bf16.mxu0 0
  %1962 = vmatpush1.bf16.msra.mxu0 0
  %1963 = vmatprep.mubr.bf16.mxu0 0
  %1964 = vmatmul.mubr.bf16.gmra.mrb[0].mxu0 %v1929
  %v1965 = vpop.f32.mrb[0].mxu0
  %v1966 = vadd.f32 0.0, %v1965
  %v1967 = vpop.f32.mrb[0].mxu0
  %v1968 = vpop.f32.mrb[0].mxu0
  %v1969 = vpop.f32.mrb[0].mxu0
  %1970 = vdwg.mxu0
  %v1971 = vadd.f32 %v1923, %v1966
  %v1972 = vxor.u32 %v1971, 2147483648
  %v1973 = vmul.f32 %v1972, 1.442695
  %v1974 = vpow.pop %v1973
  %v1975 = vadd.f32 %v1974, 1.0
  %v1976 = vrcp.pop %v1975
  %v1977 = vmul.f32 1.0, %v1976
  %v1978 = vtanh.pop %v1971
  %v1979 = vmul.f32 %v1977, %v1839
  %1981 = vrot.lane.b32.xlu0 %v1978, 64
  %v1982 = vpop.permute.xlu0 %1981
  %v1984 = vmul.f32 %v1977, %v1982
  %1986 = vrot.lane.b32.xlu0 %v1984, 32
  %v1987 = vpop.permute.xlu0 %1986
  %v1989 = vadd.f32 %v1979, %v1987
  %v1990 = vtanh.pop %v1989
  %1992 = vrot.lane.b32.xlu0 %v1990, 64
  %v1993 = vpop.permute.xlu0 %1992
  %v1995 = vmul.f32 %v1977, %v1993
  %1997 = vrot.lane.b32.xlu0 %v1995, 32
  %v1998 = vpop.permute.xlu0 %1997
  %2001 = vrot.lane.b32.xlu0 %v1922, 64
  %v2002 = vpop.permute.xlu0 %2001
  %v2004 = vsel %vm550, %v1998, %v2002
  %v2005 = vpack.c.bf16 %v2004, %v2004
  %v2007 = vsel %vm655, %v2005, 0
  %2009 = vmatprep.subr.bf16.mxu0 0
  %2010 = vmatpush1.bf16.msra.mxu0 %v647
  %2011 = vmatprep.subr.bf16.mxu0 0
  %2012 = vmatpush1.bf16.msra.mxu0 %v648
  %2013 = vmatprep.subr.bf16.mxu0 0
  %2014 = vmatpush1.bf16.msra.mxu0 %v649
  %2015 = vmatprep.subr.bf16.mxu0 0
  %2016 = vmatpush1.bf16.msra.mxu0 %v650
  %2017 = vmatprep.subr.bf16.mxu0 0
  %2018 = vmatpush1.bf16.msra.mxu0 0
  %2019 = vmatprep.subr.bf16.mxu0 0
  %2020 = vmatpush1.bf16.msra.mxu0 0
  %2021 = vmatprep.subr.bf16.mxu0 0
  %2022 = vmatpush1.bf16.msra.mxu0 0
  %2023 = vmatprep.subr.bf16.mxu0 0
  %2024 = vmatpush1.bf16.msra.mxu0 0
  %2025 = vmatprep.subr.bf16.mxu0 0
  %2026 = vmatpush1.bf16.msra.mxu0 0
  %2027 = vmatprep.subr.bf16.mxu0 0
  %2028 = vmatpush1.bf16.msra.mxu0 0
  %2029 = vmatprep.subr.bf16.mxu0 0
  %2030 = vmatpush1.bf16.msra.mxu0 0
  %2031 = vmatprep.subr.bf16.mxu0 0
  %2032 = vmatpush1.bf16.msra.mxu0 0
  %2033 = vmatprep.subr.bf16.mxu0 0
  %2034 = vmatpush1.bf16.msra.mxu0 0
  %2035 = vmatprep.subr.bf16.mxu0 0
  %2036 = vmatpush1.bf16.msra.mxu0 0
  %2037 = vmatprep.subr.bf16.mxu0 0
  %2038 = vmatpush1.bf16.msra.mxu0 0
  %2039 = vmatprep.subr.bf16.mxu0 0
  %2040 = vmatpush1.bf16.msra.mxu0 0
  %2041 = vmatprep.mubr.bf16.mxu0 0
  %2042 = vmatmul.mubr.bf16.gmra.mrb[0].mxu0 %v2007
  %v2043 = vpop.f32.mrb[0].mxu0
  %v2044 = vadd.f32 %v629, %v2043
  %v2045 = vpop.f32.mrb[0].mxu0
  %v2046 = vpop.f32.mrb[0].mxu0
  %v2047 = vpop.f32.mrb[0].mxu0
  %2048 = vdwg.mxu0
  %v2049 = vxor.u32 %v2044, 2147483648
  %v2050 = vmul.f32 %v2049, 1.442695
  %v2051 = vpow.pop %v2050
  %v2052 = vadd.f32 %v2051, 1.0
  %v2053 = vrcp.pop %v2052
  %v2054 = vmul.f32 1.0, %v2053
  %v2055 = vtanh.pop %v2044
  %v2056 = vmul.f32 %v2054, %v1916
  %2058 = vrot.lane.b32.xlu0 %v2055, 64
  %v2059 = vpop.permute.xlu0 %2058
  %v2061 = vmul.f32 %v2054, %v2059
  %2063 = vrot.lane.b32.xlu0 %v2061, 32
  %v2064 = vpop.permute.xlu0 %2063
  %v2066 = vadd.f32 %v2056, %v2064
  %v2067 = vtanh.pop %v2066
  %2069 = vrot.lane.b32.xlu0 %v2067, 64
  %v2070 = vpop.permute.xlu0 %2069
  %v2072 = vmul.f32 %v2054, %v2070
  %v2073 = vld [vmem:[#allocation2 + $0x50] sm:$0xff]
  %v2074 = vpack.c.bf16 %v1995, %v1995
  %2076 = vrot.lane.b32.xlu0 %v2074, 32
  %v2077 = vpop.permute.xlu0 %2076
  %v2079 = vsel %vm550, %v2077, 0
  %2081 = vmatprep.subr.bf16.mxu0 0
  %2082 = vmatpush1.bf16.msra.mxu0 %v546
  %2083 = vmatprep.subr.bf16.mxu0 0
  %2084 = vmatpush1.bf16.msra.mxu0 %v547
  %2085 = vmatprep.subr.bf16.mxu0 0
  %2086 = vmatpush1.bf16.msra.mxu0 0
  %2087 = vmatprep.subr.bf16.mxu0 0
  %2088 = vmatpush1.bf16.msra.mxu0 0
  %2089 = vmatprep.subr.bf16.mxu0 0
  %2090 = vmatpush1.bf16.msra.mxu0 0
  %2091 = vmatprep.subr.bf16.mxu0 0
  %2092 = vmatpush1.bf16.msra.mxu0 0
  %2093 = vmatprep.subr.bf16.mxu0 0
  %2094 = vmatpush1.bf16.msra.mxu0 0
  %2095 = vmatprep.subr.bf16.mxu0 0
  %2096 = vmatpush1.bf16.msra.mxu0 0
  %2097 = vmatprep.subr.bf16.mxu0 0
  %2098 = vmatpush1.bf16.msra.mxu0 0
  %2099 = vmatprep.subr.bf16.mxu0 0
  %2100 = vmatpush1.bf16.msra.mxu0 0
  %2101 = vmatprep.subr.bf16.mxu0 0
  %2102 = vmatpush1.bf16.msra.mxu0 0
  %2103 = vmatprep.subr.bf16.mxu0 0
  %2104 = vmatpush1.bf16.msra.mxu0 0
  %2105 = vmatprep.subr.bf16.mxu0 0
  %2106 = vmatpush1.bf16.msra.mxu0 0
  %2107 = vmatprep.subr.bf16.mxu0 0
  %2108 = vmatpush1.bf16.msra.mxu0 0
  %2109 = vmatprep.subr.bf16.mxu0 0
  %2110 = vmatpush1.bf16.msra.mxu0 0
  %2111 = vmatprep.subr.bf16.mxu0 0
  %2112 = vmatpush1.bf16.msra.mxu0 0
  %2113 = vmatprep.mubr.bf16.mxu0 0
  %2114 = vmatmul.mubr.bf16.gmra.mrb[0].mxu0 %v2079
  %v2115 = vpop.f32.mrb[0].mxu0
  %v2116 = vadd.f32 0.0, %v2115
  %v2117 = vpop.f32.mrb[0].mxu0
  %v2118 = vpop.f32.mrb[0].mxu0
  %v2119 = vpop.f32.mrb[0].mxu0
  %2120 = vdwg.mxu0
  %v2121 = vadd.f32 %v2073, %v2116
  %v2122 = vxor.u32 %v2121, 2147483648
  %v2123 = vmul.f32 %v2122, 1.442695
  %v2124 = vpow.pop %v2123
  %v2125 = vadd.f32 %v2124, 1.0
  %v2126 = vrcp.pop %v2125
  %v2127 = vmul.f32 1.0, %v2126
  %v2128 = vtanh.pop %v2121
  %v2129 = vmul.f32 %v2127, %v1989
  %2131 = vrot.lane.b32.xlu0 %v2128, 64
  %v2132 = vpop.permute.xlu0 %2131
  %v2134 = vmul.f32 %v2127, %v2132
  %2136 = vrot.lane.b32.xlu0 %v2134, 32
  %v2137 = vpop.permute.xlu0 %2136
  %v2139 = vadd.f32 %v2129, %v2137
  %v2140 = vtanh.pop %v2139
  %2142 = vrot.lane.b32.xlu0 %v2140, 64
  %v2143 = vpop.permute.xlu0 %2142
  %v2145 = vmul.f32 %v2127, %v2143
  %2147 = vrot.lane.b32.xlu0 %v2145, 32
  %v2148 = vpop.permute.xlu0 %2147
  %2151 = vrot.lane.b32.xlu0 %v2072, 64
  %v2152 = vpop.permute.xlu0 %2151
  %v2154 = vsel %vm550, %v2148, %v2152
  %v2155 = vpack.c.bf16 %v2154, %v2154
  %v2157 = vsel %vm655, %v2155, 0
  %2159 = vmatprep.subr.bf16.mxu0 0
  %2160 = vmatpush1.bf16.msra.mxu0 %v647
  %2161 = vmatprep.subr.bf16.mxu0 0
  %2162 = vmatpush1.bf16.msra.mxu0 %v648
  %2163 = vmatprep.subr.bf16.mxu0 0
  %2164 = vmatpush1.bf16.msra.mxu0 %v649
  %2165 = vmatprep.subr.bf16.mxu0 0
  %2166 = vmatpush1.bf16.msra.mxu0 %v650
  %2167 = vmatprep.subr.bf16.mxu0 0
  %2168 = vmatpush1.bf16.msra.mxu0 0
  %2169 = vmatprep.subr.bf16.mxu0 0
  %2170 = vmatpush1.bf16.msra.mxu0 0
  %2171 = vmatprep.subr.bf16.mxu0 0
  %2172 = vmatpush1.bf16.msra.mxu0 0
  %2173 = vmatprep.subr.bf16.mxu0 0
  %2174 = vmatpush1.bf16.msra.mxu0 0
  %2175 = vmatprep.subr.bf16.mxu0 0
  %2176 = vmatpush1.bf16.msra.mxu0 0
  %2177 = vmatprep.subr.bf16.mxu0 0
  %2178 = vmatpush1.bf16.msra.mxu0 0
  %2179 = vmatprep.subr.bf16.mxu0 0
  %2180 = vmatpush1.bf16.msra.mxu0 0
  %2181 = vmatprep.subr.bf16.mxu0 0
  %2182 = vmatpush1.bf16.msra.mxu0 0
  %2183 = vmatprep.subr.bf16.mxu0 0
  %2184 = vmatpush1.bf16.msra.mxu0 0
  %2185 = vmatprep.subr.bf16.mxu0 0
  %2186 = vmatpush1.bf16.msra.mxu0 0
  %2187 = vmatprep.subr.bf16.mxu0 0
  %2188 = vmatpush1.bf16.msra.mxu0 0
  %2189 = vmatprep.subr.bf16.mxu0 0
  %2190 = vmatpush1.bf16.msra.mxu0 0
  %2191 = vmatprep.mubr.bf16.mxu0 0
  %2192 = vmatmul.mubr.bf16.gmra.mrb[0].mxu0 %v2157
  %v2193 = vpop.f32.mrb[0].mxu0
  %v2194 = vadd.f32 %v629, %v2193
  %v2195 = vpop.f32.mrb[0].mxu0
  %v2196 = vpop.f32.mrb[0].mxu0
  %v2197 = vpop.f32.mrb[0].mxu0
  %2198 = vdwg.mxu0
  %v2199 = vxor.u32 %v2194, 2147483648
  %v2200 = vmul.f32 %v2199, 1.442695
  %v2201 = vpow.pop %v2200
  %v2202 = vadd.f32 %v2201, 1.0
  %v2203 = vrcp.pop %v2202
  %v2204 = vmul.f32 1.0, %v2203
  %v2205 = vtanh.pop %v2194
  %v2206 = vmul.f32 %v2204, %v2066
  %2208 = vrot.lane.b32.xlu0 %v2205, 64
  %v2209 = vpop.permute.xlu0 %2208
  %v2211 = vmul.f32 %v2204, %v2209
  %2213 = vrot.lane.b32.xlu0 %v2211, 32
  %v2214 = vpop.permute.xlu0 %2213
  %v2216 = vadd.f32 %v2206, %v2214
  %v2217 = vtanh.pop %v2216
  %2219 = vrot.lane.b32.xlu0 %v2217, 64
  %v2220 = vpop.permute.xlu0 %2219
  %v2222 = vmul.f32 %v2204, %v2220
  %v2223 = vld [vmem:[#allocation2 + $0x58] sm:$0xff]
  %v2224 = vpack.c.bf16 %v2145, %v2145
  %2226 = vrot.lane.b32.xlu0 %v2224, 32
  %v2227 = vpop.permute.xlu0 %2226
  %v2229 = vsel %vm550, %v2227, 0
  %2231 = vmatprep.subr.bf16.mxu0 0
  %2232 = vmatpush1.bf16.msra.mxu0 %v546
  %2233 = vmatprep.subr.bf16.mxu0 0
  %2234 = vmatpush1.bf16.msra.mxu0 %v547
  %2235 = vmatprep.subr.bf16.mxu0 0
  %2236 = vmatpush1.bf16.msra.mxu0 0
  %2237 = vmatprep.subr.bf16.mxu0 0
  %2238 = vmatpush1.bf16.msra.mxu0 0
  %2239 = vmatprep.subr.bf16.mxu0 0
  %2240 = vmatpush1.bf16.msra.mxu0 0
  %2241 = vmatprep.subr.bf16.mxu0 0
  %2242 = vmatpush1.bf16.msra.mxu0 0
  %2243 = vmatprep.subr.bf16.mxu0 0
  %2244 = vmatpush1.bf16.msra.mxu0 0
  %2245 = vmatprep.subr.bf16.mxu0 0
  %2246 = vmatpush1.bf16.msra.mxu0 0
  %2247 = vmatprep.subr.bf16.mxu0 0
  %2248 = vmatpush1.bf16.msra.mxu0 0
  %2249 = vmatprep.subr.bf16.mxu0 0
  %2250 = vmatpush1.bf16.msra.mxu0 0
  %2251 = vmatprep.subr.bf16.mxu0 0
  %2252 = vmatpush1.bf16.msra.mxu0 0
  %2253 = vmatprep.subr.bf16.mxu0 0
  %2254 = vmatpush1.bf16.msra.mxu0 0
  %2255 = vmatprep.subr.bf16.mxu0 0
  %2256 = vmatpush1.bf16.msra.mxu0 0
  %2257 = vmatprep.subr.bf16.mxu0 0
  %2258 = vmatpush1.bf16.msra.mxu0 0
  %2259 = vmatprep.subr.bf16.mxu0 0
  %2260 = vmatpush1.bf16.msra.mxu0 0
  %2261 = vmatprep.subr.bf16.mxu0 0
  %2262 = vmatpush1.bf16.msra.mxu0 0
  %2263 = vmatprep.mubr.bf16.mxu0 0
  %2264 = vmatmul.mubr.bf16.gmra.mrb[0].mxu0 %v2229
  %v2265 = vpop.f32.mrb[0].mxu0
  %v2266 = vadd.f32 0.0, %v2265
  %v2267 = vpop.f32.mrb[0].mxu0
  %v2268 = vpop.f32.mrb[0].mxu0
  %v2269 = vpop.f32.mrb[0].mxu0
  %2270 = vdwg.mxu0
  %v2271 = vadd.f32 %v2223, %v2266
  %v2272 = vxor.u32 %v2271, 2147483648
  %v2273 = vmul.f32 %v2272, 1.442695
  %v2274 = vpow.pop %v2273
  %v2275 = vadd.f32 %v2274, 1.0
  %v2276 = vrcp.pop %v2275
  %v2277 = vmul.f32 1.0, %v2276
  %v2278 = vtanh.pop %v2271
  %v2279 = vmul.f32 %v2277, %v2139
  %2281 = vrot.lane.b32.xlu0 %v2278, 64
  %v2282 = vpop.permute.xlu0 %2281
  %v2284 = vmul.f32 %v2277, %v2282
  %2286 = vrot.lane.b32.xlu0 %v2284, 32
  %v2287 = vpop.permute.xlu0 %2286
  %v2289 = vadd.f32 %v2279, %v2287
  %v2290 = vtanh.pop %v2289
  %2292 = vrot.lane.b32.xlu0 %v2290, 64
  %v2293 = vpop.permute.xlu0 %2292
  %v2295 = vmul.f32 %v2277, %v2293
  %2297 = vrot.lane.b32.xlu0 %v2295, 32
  %v2298 = vpop.permute.xlu0 %2297
  %2301 = vrot.lane.b32.xlu0 %v2222, 64
  %v2302 = vpop.permute.xlu0 %2301
  %v2304 = vsel %vm550, %v2298, %v2302
  %v2305 = vpack.c.bf16 %v2304, %v2304
  %v2307 = vsel %vm655, %v2305, 0
  %2309 = vmatprep.subr.bf16.mxu0 0
  %2310 = vmatpush1.bf16.msra.mxu0 %v647
  %2311 = vmatprep.subr.bf16.mxu0 0
  %2312 = vmatpush1.bf16.msra.mxu0 %v648
  %2313 = vmatprep.subr.bf16.mxu0 0
  %2314 = vmatpush1.bf16.msra.mxu0 %v649
  %2315 = vmatprep.subr.bf16.mxu0 0
  %2316 = vmatpush1.bf16.msra.mxu0 %v650
  %2317 = vmatprep.subr.bf16.mxu0 0
  %2318 = vmatpush1.bf16.msra.mxu0 0
  %2319 = vmatprep.subr.bf16.mxu0 0
  %2320 = vmatpush1.bf16.msra.mxu0 0
  %2321 = vmatprep.subr.bf16.mxu0 0
  %2322 = vmatpush1.bf16.msra.mxu0 0
  %2323 = vmatprep.subr.bf16.mxu0 0
  %2324 = vmatpush1.bf16.msra.mxu0 0
  %2325 = vmatprep.subr.bf16.mxu0 0
  %2326 = vmatpush1.bf16.msra.mxu0 0
  %2327 = vmatprep.subr.bf16.mxu0 0
  %2328 = vmatpush1.bf16.msra.mxu0 0
  %2329 = vmatprep.subr.bf16.mxu0 0
  %2330 = vmatpush1.bf16.msra.mxu0 0
  %2331 = vmatprep.subr.bf16.mxu0 0
  %2332 = vmatpush1.bf16.msra.mxu0 0
  %2333 = vmatprep.subr.bf16.mxu0 0
  %2334 = vmatpush1.bf16.msra.mxu0 0
  %2335 = vmatprep.subr.bf16.mxu0 0
  %2336 = vmatpush1.bf16.msra.mxu0 0
  %2337 = vmatprep.subr.bf16.mxu0 0
  %2338 = vmatpush1.bf16.msra.mxu0 0
  %2339 = vmatprep.subr.bf16.mxu0 0
  %2340 = vmatpush1.bf16.msra.mxu0 0
  %2341 = vmatprep.mubr.bf16.mxu0 0
  %2342 = vmatmul.mubr.bf16.gmra.mrb[0].mxu0 %v2307
  %v2343 = vpop.f32.mrb[0].mxu0
  %v2344 = vadd.f32 %v629, %v2343
  %v2345 = vpop.f32.mrb[0].mxu0
  %v2346 = vpop.f32.mrb[0].mxu0
  %v2347 = vpop.f32.mrb[0].mxu0
  %2348 = vdwg.mxu0
  %v2349 = vxor.u32 %v2344, 2147483648
  %v2350 = vmul.f32 %v2349, 1.442695
  %v2351 = vpow.pop %v2350
  %v2352 = vadd.f32 %v2351, 1.0
  %v2353 = vrcp.pop %v2352
  %v2354 = vmul.f32 1.0, %v2353
  %v2355 = vtanh.pop %v2344
  %v2356 = vmul.f32 %v2354, %v2216
  %2358 = vrot.lane.b32.xlu0 %v2355, 64
  %v2359 = vpop.permute.xlu0 %2358
  %v2361 = vmul.f32 %v2354, %v2359
  %2363 = vrot.lane.b32.xlu0 %v2361, 32
  %v2364 = vpop.permute.xlu0 %2363
  %v2366 = vadd.f32 %v2356, %v2364
  %v2367 = vtanh.pop %v2366
  %2369 = vrot.lane.b32.xlu0 %v2367, 64
  %v2370 = vpop.permute.xlu0 %2369
  %v2372 = vmul.f32 %v2354, %v2370
  %v2373 = vld [vmem:[#allocation2 + $0x60] sm:$0xff]
  %v2374 = vpack.c.bf16 %v2295, %v2295
  %2376 = vrot.lane.b32.xlu0 %v2374, 32
  %v2377 = vpop.permute.xlu0 %2376
  %v2379 = vsel %vm550, %v2377, 0
  %2381 = vmatprep.subr.bf16.mxu0 0
  %2382 = vmatpush1.bf16.msra.mxu0 %v546
  %2383 = vmatprep.subr.bf16.mxu0 0
  %2384 = vmatpush1.bf16.msra.mxu0 %v547
  %2385 = vmatprep.subr.bf16.mxu0 0
  %2386 = vmatpush1.bf16.msra.mxu0 0
  %2387 = vmatprep.subr.bf16.mxu0 0
  %2388 = vmatpush1.bf16.msra.mxu0 0
  %2389 = vmatprep.subr.bf16.mxu0 0
  %2390 = vmatpush1.bf16.msra.mxu0 0
  %2391 = vmatprep.subr.bf16.mxu0 0
  %2392 = vmatpush1.bf16.msra.mxu0 0
  %2393 = vmatprep.subr.bf16.mxu0 0
  %2394 = vmatpush1.bf16.msra.mxu0 0
  %2395 = vmatprep.subr.bf16.mxu0 0
  %2396 = vmatpush1.bf16.msra.mxu0 0
  %2397 = vmatprep.subr.bf16.mxu0 0
  %2398 = vmatpush1.bf16.msra.mxu0 0
  %2399 = vmatprep.subr.bf16.mxu0 0
  %2400 = vmatpush1.bf16.msra.mxu0 0
  %2401 = vmatprep.subr.bf16.mxu0 0
  %2402 = vmatpush1.bf16.msra.mxu0 0
  %2403 = vmatprep.subr.bf16.mxu0 0
  %2404 = vmatpush1.bf16.msra.mxu0 0
  %2405 = vmatprep.subr.bf16.mxu0 0
  %2406 = vmatpush1.bf16.msra.mxu0 0
  %2407 = vmatprep.subr.bf16.mxu0 0
  %2408 = vmatpush1.bf16.msra.mxu0 0
  %2409 = vmatprep.subr.bf16.mxu0 0
  %2410 = vmatpush1.bf16.msra.mxu0 0
  %2411 = vmatprep.subr.bf16.mxu0 0
  %2412 = vmatpush1.bf16.msra.mxu0 0
  %2413 = vmatprep.mubr.bf16.mxu0 0
  %2414 = vmatmul.mubr.bf16.gmra.mrb[0].mxu0 %v2379
  %v2415 = vpop.f32.mrb[0].mxu0
  %v2416 = vadd.f32 0.0, %v2415
  %v2417 = vpop.f32.mrb[0].mxu0
  %v2418 = vpop.f32.mrb[0].mxu0
  %v2419 = vpop.f32.mrb[0].mxu0
  %2420 = vdwg.mxu0
  %v2421 = vadd.f32 %v2373, %v2416
  %v2422 = vxor.u32 %v2421, 2147483648
  %v2423 = vmul.f32 %v2422, 1.442695
  %v2424 = vpow.pop %v2423
  %v2425 = vadd.f32 %v2424, 1.0
  %v2426 = vrcp.pop %v2425
  %v2427 = vmul.f32 1.0, %v2426
  %v2428 = vtanh.pop %v2421
  %v2429 = vmul.f32 %v2427, %v2289
  %2431 = vrot.lane.b32.xlu0 %v2428, 64
  %v2432 = vpop.permute.xlu0 %2431
  %v2434 = vmul.f32 %v2427, %v2432
  %2436 = vrot.lane.b32.xlu0 %v2434, 32
  %v2437 = vpop.permute.xlu0 %2436
  %v2439 = vadd.f32 %v2429, %v2437
  %v2440 = vtanh.pop %v2439
  %2442 = vrot.lane.b32.xlu0 %v2440, 64
  %v2443 = vpop.permute.xlu0 %2442
  %v2445 = vmul.f32 %v2427, %v2443
  %2447 = vrot.lane.b32.xlu0 %v2445, 32
  %v2448 = vpop.permute.xlu0 %2447
  %2451 = vrot.lane.b32.xlu0 %v2372, 64
  %v2452 = vpop.permute.xlu0 %2451
  %v2454 = vsel %vm550, %v2448, %v2452
  %v2455 = vpack.c.bf16 %v2454, %v2454
  %v2457 = vsel %vm655, %v2455, 0
  %2459 = vmatprep.subr.bf16.mxu0 0
  %2460 = vmatpush1.bf16.msra.mxu0 %v647
  %2461 = vmatprep.subr.bf16.mxu0 0
  %2462 = vmatpush1.bf16.msra.mxu0 %v648
  %2463 = vmatprep.subr.bf16.mxu0 0
  %2464 = vmatpush1.bf16.msra.mxu0 %v649
  %2465 = vmatprep.subr.bf16.mxu0 0
  %2466 = vmatpush1.bf16.msra.mxu0 %v650
  %2467 = vmatprep.subr.bf16.mxu0 0
  %2468 = vmatpush1.bf16.msra.mxu0 0
  %2469 = vmatprep.subr.bf16.mxu0 0
  %2470 = vmatpush1.bf16.msra.mxu0 0
  %2471 = vmatprep.subr.bf16.mxu0 0
  %2472 = vmatpush1.bf16.msra.mxu0 0
  %2473 = vmatprep.subr.bf16.mxu0 0
  %2474 = vmatpush1.bf16.msra.mxu0 0
  %2475 = vmatprep.subr.bf16.mxu0 0
  %2476 = vmatpush1.bf16.msra.mxu0 0
  %2477 = vmatprep.subr.bf16.mxu0 0
  %2478 = vmatpush1.bf16.msra.mxu0 0
  %2479 = vmatprep.subr.bf16.mxu0 0
  %2480 = vmatpush1.bf16.msra.mxu0 0
  %2481 = vmatprep.subr.bf16.mxu0 0
  %2482 = vmatpush1.bf16.msra.mxu0 0
  %2483 = vmatprep.subr.bf16.mxu0 0
  %2484 = vmatpush1.bf16.msra.mxu0 0
  %2485 = vmatprep.subr.bf16.mxu0 0
  %2486 = vmatpush1.bf16.msra.mxu0 0
  %2487 = vmatprep.subr.bf16.mxu0 0
  %2488 = vmatpush1.bf16.msra.mxu0 0
  %2489 = vmatprep.subr.bf16.mxu0 0
  %2490 = vmatpush1.bf16.msra.mxu0 0
  %2491 = vmatprep.mubr.bf16.mxu0 0
  %2492 = vmatmul.mubr.bf16.gmra.mrb[0].mxu0 %v2457
  %v2493 = vpop.f32.mrb[0].mxu0
  %v2494 = vadd.f32 %v629, %v2493
  %v2495 = vpop.f32.mrb[0].mxu0
  %v2496 = vpop.f32.mrb[0].mxu0
  %v2497 = vpop.f32.mrb[0].mxu0
  %2498 = vdwg.mxu0
  %v2499 = vxor.u32 %v2494, 2147483648
  %v2500 = vmul.f32 %v2499, 1.442695
  %v2501 = vpow.pop %v2500
  %v2502 = vadd.f32 %v2501, 1.0
  %v2503 = vrcp.pop %v2502
  %v2504 = vmul.f32 1.0, %v2503
  %v2505 = vtanh.pop %v2494
  %v2506 = vmul.f32 %v2504, %v2366
  %2508 = vrot.lane.b32.xlu0 %v2505, 64
  %v2509 = vpop.permute.xlu0 %2508
  %v2511 = vmul.f32 %v2504, %v2509
  %2513 = vrot.lane.b32.xlu0 %v2511, 32
  %v2514 = vpop.permute.xlu0 %2513
  %v2516 = vadd.f32 %v2506, %v2514
  %v2517 = vtanh.pop %v2516
  %2519 = vrot.lane.b32.xlu0 %v2517, 64
  %v2520 = vpop.permute.xlu0 %2519
  %v2522 = vmul.f32 %v2504, %v2520
  %v2523 = vld [vmem:[#allocation2 + $0x68] sm:$0xff]
  %v2524 = vpack.c.bf16 %v2445, %v2445
  %2526 = vrot.lane.b32.xlu0 %v2524, 32
  %v2527 = vpop.permute.xlu0 %2526
  %v2529 = vsel %vm550, %v2527, 0
  %2531 = vmatprep.subr.bf16.mxu0 0
  %2532 = vmatpush1.bf16.msra.mxu0 %v546
  %2533 = vmatprep.subr.bf16.mxu0 0
  %2534 = vmatpush1.bf16.msra.mxu0 %v547
  %2535 = vmatprep.subr.bf16.mxu0 0
  %2536 = vmatpush1.bf16.msra.mxu0 0
  %2537 = vmatprep.subr.bf16.mxu0 0
  %2538 = vmatpush1.bf16.msra.mxu0 0
  %2539 = vmatprep.subr.bf16.mxu0 0
  %2540 = vmatpush1.bf16.msra.mxu0 0
  %2541 = vmatprep.subr.bf16.mxu0 0
  %2542 = vmatpush1.bf16.msra.mxu0 0
  %2543 = vmatprep.subr.bf16.mxu0 0
  %2544 = vmatpush1.bf16.msra.mxu0 0
  %2545 = vmatprep.subr.bf16.mxu0 0
  %2546 = vmatpush1.bf16.msra.mxu0 0
  %2547 = vmatprep.subr.bf16.mxu0 0
  %2548 = vmatpush1.bf16.msra.mxu0 0
  %2549 = vmatprep.subr.bf16.mxu0 0
  %2550 = vmatpush1.bf16.msra.mxu0 0
  %2551 = vmatprep.subr.bf16.mxu0 0
  %2552 = vmatpush1.bf16.msra.mxu0 0
  %2553 = vmatprep.subr.bf16.mxu0 0
  %2554 = vmatpush1.bf16.msra.mxu0 0
  %2555 = vmatprep.subr.bf16.mxu0 0
  %2556 = vmatpush1.bf16.msra.mxu0 0
  %2557 = vmatprep.subr.bf16.mxu0 0
  %2558 = vmatpush1.bf16.msra.mxu0 0
  %2559 = vmatprep.subr.bf16.mxu0 0
  %2560 = vmatpush1.bf16.msra.mxu0 0
  %2561 = vmatprep.subr.bf16.mxu0 0
  %2562 = vmatpush1.bf16.msra.mxu0 0
  %2563 = vmatprep.mubr.bf16.mxu0 0
  %2564 = vmatmul.mubr.bf16.gmra.mrb[0].mxu0 %v2529
  %v2565 = vpop.f32.mrb[0].mxu0
  %v2566 = vadd.f32 0.0, %v2565
  %v2567 = vpop.f32.mrb[0].mxu0
  %v2568 = vpop.f32.mrb[0].mxu0
  %v2569 = vpop.f32.mrb[0].mxu0
  %2570 = vdwg.mxu0
  %v2571 = vadd.f32 %v2523, %v2566
  %v2572 = vxor.u32 %v2571, 2147483648
  %v2573 = vmul.f32 %v2572, 1.442695
  %v2574 = vpow.pop %v2573
  %v2575 = vadd.f32 %v2574, 1.0
  %v2576 = vrcp.pop %v2575
  %v2577 = vmul.f32 1.0, %v2576
  %v2578 = vtanh.pop %v2571
  %v2579 = vmul.f32 %v2577, %v2439
  %2581 = vrot.lane.b32.xlu0 %v2578, 64
  %v2582 = vpop.permute.xlu0 %2581
  %v2584 = vmul.f32 %v2577, %v2582
  %2586 = vrot.lane.b32.xlu0 %v2584, 32
  %v2587 = vpop.permute.xlu0 %2586
  %v2589 = vadd.f32 %v2579, %v2587
  %v2590 = vtanh.pop %v2589
  %2592 = vrot.lane.b32.xlu0 %v2590, 64
  %v2593 = vpop.permute.xlu0 %2592
  %v2595 = vmul.f32 %v2577, %v2593
  %2597 = vrot.lane.b32.xlu0 %v2595, 32
  %v2598 = vpop.permute.xlu0 %2597
  %2601 = vrot.lane.b32.xlu0 %v2522, 64
  %v2602 = vpop.permute.xlu0 %2601
  %v2604 = vsel %vm550, %v2598, %v2602
  %v2605 = vpack.c.bf16 %v2604, %v2604
  %v2607 = vsel %vm655, %v2605, 0
  %2609 = vmatprep.subr.bf16.mxu0 0
  %2610 = vmatpush1.bf16.msra.mxu0 %v647
  %2611 = vmatprep.subr.bf16.mxu0 0
  %2612 = vmatpush1.bf16.msra.mxu0 %v648
  %2613 = vmatprep.subr.bf16.mxu0 0
  %2614 = vmatpush1.bf16.msra.mxu0 %v649
  %2615 = vmatprep.subr.bf16.mxu0 0
  %2616 = vmatpush1.bf16.msra.mxu0 %v650
  %2617 = vmatprep.subr.bf16.mxu0 0
  %2618 = vmatpush1.bf16.msra.mxu0 0
  %2619 = vmatprep.subr.bf16.mxu0 0
  %2620 = vmatpush1.bf16.msra.mxu0 0
  %2621 = vmatprep.subr.bf16.mxu0 0
  %2622 = vmatpush1.bf16.msra.mxu0 0
  %2623 = vmatprep.subr.bf16.mxu0 0
  %2624 = vmatpush1.bf16.msra.mxu0 0
  %2625 = vmatprep.subr.bf16.mxu0 0
  %2626 = vmatpush1.bf16.msra.mxu0 0
  %2627 = vmatprep.subr.bf16.mxu0 0
  %2628 = vmatpush1.bf16.msra.mxu0 0
  %2629 = vmatprep.subr.bf16.mxu0 0
  %2630 = vmatpush1.bf16.msra.mxu0 0
  %2631 = vmatprep.subr.bf16.mxu0 0
  %2632 = vmatpush1.bf16.msra.mxu0 0
  %2633 = vmatprep.subr.bf16.mxu0 0
  %2634 = vmatpush1.bf16.msra.mxu0 0
  %2635 = vmatprep.subr.bf16.mxu0 0
  %2636 = vmatpush1.bf16.msra.mxu0 0
  %2637 = vmatprep.subr.bf16.mxu0 0
  %2638 = vmatpush1.bf16.msra.mxu0 0
  %2639 = vmatprep.subr.bf16.mxu0 0
  %2640 = vmatpush1.bf16.msra.mxu0 0
  %2641 = vmatprep.mubr.bf16.mxu0 0
  %2642 = vmatmul.mubr.bf16.gmra.mrb[0].mxu0 %v2607
  %v2643 = vpop.f32.mrb[0].mxu0
  %v2644 = vadd.f32 %v629, %v2643
  %v2645 = vpop.f32.mrb[0].mxu0
  %v2646 = vpop.f32.mrb[0].mxu0
  %v2647 = vpop.f32.mrb[0].mxu0
  %2648 = vdwg.mxu0
  %v2649 = vxor.u32 %v2644, 2147483648
  %v2650 = vmul.f32 %v2649, 1.442695
  %v2651 = vpow.pop %v2650
  %v2652 = vadd.f32 %v2651, 1.0
  %v2653 = vrcp.pop %v2652
  %v2654 = vmul.f32 1.0, %v2653
  %v2655 = vtanh.pop %v2644
  %v2656 = vmul.f32 %v2654, %v2516
  %2658 = vrot.lane.b32.xlu0 %v2655, 64
  %v2659 = vpop.permute.xlu0 %2658
  %v2661 = vmul.f32 %v2654, %v2659
  %2663 = vrot.lane.b32.xlu0 %v2661, 32
  %v2664 = vpop.permute.xlu0 %2663
  %v2666 = vadd.f32 %v2656, %v2664
  %v2667 = vtanh.pop %v2666
  %2669 = vrot.lane.b32.xlu0 %v2667, 64
  %v2670 = vpop.permute.xlu0 %2669
  %v2672 = vmul.f32 %v2654, %v2670
  %v2673 = vld [vmem:[#allocation2 + $0x70] sm:$0xff]
  %v2674 = vpack.c.bf16 %v2595, %v2595
  %2676 = vrot.lane.b32.xlu0 %v2674, 32
  %v2677 = vpop.permute.xlu0 %2676
  %v2679 = vsel %vm550, %v2677, 0
  %2681 = vmatprep.subr.bf16.mxu0 0
  %2682 = vmatpush1.bf16.msra.mxu0 %v546
  %2683 = vmatprep.subr.bf16.mxu0 0
  %2684 = vmatpush1.bf16.msra.mxu0 %v547
  %2685 = vmatprep.subr.bf16.mxu0 0
  %2686 = vmatpush1.bf16.msra.mxu0 0
  %2687 = vmatprep.subr.bf16.mxu0 0
  %2688 = vmatpush1.bf16.msra.mxu0 0
  %2689 = vmatprep.subr.bf16.mxu0 0
  %2690 = vmatpush1.bf16.msra.mxu0 0
  %2691 = vmatprep.subr.bf16.mxu0 0
  %2692 = vmatpush1.bf16.msra.mxu0 0
  %2693 = vmatprep.subr.bf16.mxu0 0
  %2694 = vmatpush1.bf16.msra.mxu0 0
  %2695 = vmatprep.subr.bf16.mxu0 0
  %2696 = vmatpush1.bf16.msra.mxu0 0
  %2697 = vmatprep.subr.bf16.mxu0 0
  %2698 = vmatpush1.bf16.msra.mxu0 0
  %2699 = vmatprep.subr.bf16.mxu0 0
  %2700 = vmatpush1.bf16.msra.mxu0 0
  %2701 = vmatprep.subr.bf16.mxu0 0
  %2702 = vmatpush1.bf16.msra.mxu0 0
  %2703 = vmatprep.subr.bf16.mxu0 0
  %2704 = vmatpush1.bf16.msra.mxu0 0
  %2705 = vmatprep.subr.bf16.mxu0 0
  %2706 = vmatpush1.bf16.msra.mxu0 0
  %2707 = vmatprep.subr.bf16.mxu0 0
  %2708 = vmatpush1.bf16.msra.mxu0 0
  %2709 = vmatprep.subr.bf16.mxu0 0
  %2710 = vmatpush1.bf16.msra.mxu0 0
  %2711 = vmatprep.subr.bf16.mxu0 0
  %2712 = vmatpush1.bf16.msra.mxu0 0
  %2713 = vmatprep.mubr.bf16.mxu0 0
  %2714 = vmatmul.mubr.bf16.gmra.mrb[0].mxu0 %v2679
  %v2715 = vpop.f32.mrb[0].mxu0
  %v2716 = vadd.f32 0.0, %v2715
  %v2717 = vpop.f32.mrb[0].mxu0
  %v2718 = vpop.f32.mrb[0].mxu0
  %v2719 = vpop.f32.mrb[0].mxu0
  %2720 = vdwg.mxu0
  %v2721 = vadd.f32 %v2673, %v2716
  %v2722 = vxor.u32 %v2721, 2147483648
  %v2723 = vmul.f32 %v2722, 1.442695
  %v2724 = vpow.pop %v2723
  %v2725 = vadd.f32 %v2724, 1.0
  %v2726 = vrcp.pop %v2725
  %v2727 = vmul.f32 1.0, %v2726
  %v2728 = vtanh.pop %v2721
  %v2729 = vmul.f32 %v2727, %v2589
  %2731 = vrot.lane.b32.xlu0 %v2728, 64
  %v2732 = vpop.permute.xlu0 %2731
  %v2734 = vmul.f32 %v2727, %v2732
  %2736 = vrot.lane.b32.xlu0 %v2734, 32
  %v2737 = vpop.permute.xlu0 %2736
  %v2739 = vadd.f32 %v2729, %v2737
  %v2740 = vtanh.pop %v2739
  %2742 = vrot.lane.b32.xlu0 %v2740, 64
  %v2743 = vpop.permute.xlu0 %2742
  %v2745 = vmul.f32 %v2727, %v2743
  %2747 = vrot.lane.b32.xlu0 %v2745, 32
  %v2748 = vpop.permute.xlu0 %2747
  %2751 = vrot.lane.b32.xlu0 %v2672, 64
  %v2752 = vpop.permute.xlu0 %2751
  %v2754 = vsel %vm550, %v2748, %v2752
  %v2755 = vpack.c.bf16 %v2754, %v2754
  %v2757 = vsel %vm655, %v2755, 0
  %2759 = vmatprep.subr.bf16.mxu0 0
  %2760 = vmatpush1.bf16.msra.mxu0 %v647
  %2761 = vmatprep.subr.bf16.mxu0 0
  %2762 = vmatpush1.bf16.msra.mxu0 %v648
  %2763 = vmatprep.subr.bf16.mxu0 0
  %2764 = vmatpush1.bf16.msra.mxu0 %v649
  %2765 = vmatprep.subr.bf16.mxu0 0
  %2766 = vmatpush1.bf16.msra.mxu0 %v650
  %2767 = vmatprep.subr.bf16.mxu0 0
  %2768 = vmatpush1.bf16.msra.mxu0 0
  %2769 = vmatprep.subr.bf16.mxu0 0
  %2770 = vmatpush1.bf16.msra.mxu0 0
  %2771 = vmatprep.subr.bf16.mxu0 0
  %2772 = vmatpush1.bf16.msra.mxu0 0
  %2773 = vmatprep.subr.bf16.mxu0 0
  %2774 = vmatpush1.bf16.msra.mxu0 0
  %2775 = vmatprep.subr.bf16.mxu0 0
  %2776 = vmatpush1.bf16.msra.mxu0 0
  %2777 = vmatprep.subr.bf16.mxu0 0
  %2778 = vmatpush1.bf16.msra.mxu0 0
  %2779 = vmatprep.subr.bf16.mxu0 0
  %2780 = vmatpush1.bf16.msra.mxu0 0
  %2781 = vmatprep.subr.bf16.mxu0 0
  %2782 = vmatpush1.bf16.msra.mxu0 0
  %2783 = vmatprep.subr.bf16.mxu0 0
  %2784 = vmatpush1.bf16.msra.mxu0 0
  %2785 = vmatprep.subr.bf16.mxu0 0
  %2786 = vmatpush1.bf16.msra.mxu0 0
  %2787 = vmatprep.subr.bf16.mxu0 0
  %2788 = vmatpush1.bf16.msra.mxu0 0
  %2789 = vmatprep.subr.bf16.mxu0 0
  %2790 = vmatpush1.bf16.msra.mxu0 0
  %2791 = vmatprep.mubr.bf16.mxu0 0
  %2792 = vmatmul.mubr.bf16.gmra.mrb[0].mxu0 %v2757
  %v2793 = vpop.f32.mrb[0].mxu0
  %v2794 = vadd.f32 %v629, %v2793
  %v2795 = vpop.f32.mrb[0].mxu0
  %v2796 = vpop.f32.mrb[0].mxu0
  %v2797 = vpop.f32.mrb[0].mxu0
  %2798 = vdwg.mxu0
  %v2799 = vxor.u32 %v2794, 2147483648
  %v2800 = vmul.f32 %v2799, 1.442695
  %v2801 = vpow.pop %v2800
  %v2802 = vadd.f32 %v2801, 1.0
  %v2803 = vrcp.pop %v2802
  %v2804 = vmul.f32 1.0, %v2803
  %v2805 = vtanh.pop %v2794
  %v2806 = vmul.f32 %v2804, %v2666
  %2808 = vrot.lane.b32.xlu0 %v2805, 64
  %v2809 = vpop.permute.xlu0 %2808
  %v2811 = vmul.f32 %v2804, %v2809
  %2813 = vrot.lane.b32.xlu0 %v2811, 32
  %v2814 = vpop.permute.xlu0 %2813
  %v2816 = vadd.f32 %v2806, %v2814
  %v2817 = vtanh.pop %v2816
  %2819 = vrot.lane.b32.xlu0 %v2817, 64
  %v2820 = vpop.permute.xlu0 %2819
  %v2822 = vmul.f32 %v2804, %v2820
  %v2823 = vld [vmem:[#allocation2 + $0x78] sm:$0xff]
  %v2824 = vpack.c.bf16 %v2745, %v2745
  %2826 = vrot.lane.b32.xlu0 %v2824, 32
  %v2827 = vpop.permute.xlu0 %2826
  %v2829 = vsel %vm550, %v2827, 0
  %2831 = vmatprep.subr.bf16.mxu0 0
  %2832 = vmatpush1.bf16.msra.mxu0 %v546
  %2833 = vmatprep.subr.bf16.mxu0 0
  %2834 = vmatpush1.bf16.msra.mxu0 %v547
  %2835 = vmatprep.subr.bf16.mxu0 0
  %2836 = vmatpush1.bf16.msra.mxu0 0
  %2837 = vmatprep.subr.bf16.mxu0 0
  %2838 = vmatpush1.bf16.msra.mxu0 0
  %2839 = vmatprep.subr.bf16.mxu0 0
  %2840 = vmatpush1.bf16.msra.mxu0 0
  %2841 = vmatprep.subr.bf16.mxu0 0
  %2842 = vmatpush1.bf16.msra.mxu0 0
  %2843 = vmatprep.subr.bf16.mxu0 0
  %2844 = vmatpush1.bf16.msra.mxu0 0
  %2845 = vmatprep.subr.bf16.mxu0 0
  %2846 = vmatpush1.bf16.msra.mxu0 0
  %2847 = vmatprep.subr.bf16.mxu0 0
  %2848 = vmatpush1.bf16.msra.mxu0 0
  %2849 = vmatprep.subr.bf16.mxu0 0
  %2850 = vmatpush1.bf16.msra.mxu0 0
  %2851 = vmatprep.subr.bf16.mxu0 0
  %2852 = vmatpush1.bf16.msra.mxu0 0
  %2853 = vmatprep.subr.bf16.mxu0 0
  %2854 = vmatpush1.bf16.msra.mxu0 0
  %2855 = vmatprep.subr.bf16.mxu0 0
  %2856 = vmatpush1.bf16.msra.mxu0 0
  %2857 = vmatprep.subr.bf16.mxu0 0
  %2858 = vmatpush1.bf16.msra.mxu0 0
  %2859 = vmatprep.subr.bf16.mxu0 0
  %2860 = vmatpush1.bf16.msra.mxu0 0
  %2861 = vmatprep.subr.bf16.mxu0 0
  %2862 = vmatpush1.bf16.msra.mxu0 0
  %2863 = vmatprep.mubr.bf16.mxu0 0
  %2864 = vmatmul.mubr.bf16.gmra.mrb[0].mxu0 %v2829
  %v2865 = vpop.f32.mrb[0].mxu0
  %v2866 = vadd.f32 0.0, %v2865
  %v2867 = vpop.f32.mrb[0].mxu0
  %v2868 = vpop.f32.mrb[0].mxu0
  %v2869 = vpop.f32.mrb[0].mxu0
  %2870 = vdwg.mxu0
  %v2871 = vadd.f32 %v2823, %v2866
  %v2872 = vxor.u32 %v2871, 2147483648
  %v2873 = vmul.f32 %v2872, 1.442695
  %v2874 = vpow.pop %v2873
  %v2875 = vadd.f32 %v2874, 1.0
  %v2876 = vrcp.pop %v2875
  %v2877 = vmul.f32 1.0, %v2876
  %v2878 = vtanh.pop %v2871
  %v2879 = vmul.f32 %v2877, %v2739
  %2881 = vrot.lane.b32.xlu0 %v2878, 64
  %v2882 = vpop.permute.xlu0 %2881
  %v2884 = vmul.f32 %v2877, %v2882
  %2886 = vrot.lane.b32.xlu0 %v2884, 32
  %v2887 = vpop.permute.xlu0 %2886
  %v2889 = vadd.f32 %v2879, %v2887
  %v2890 = vtanh.pop %v2889
  %2892 = vrot.lane.b32.xlu0 %v2890, 64
  %v2893 = vpop.permute.xlu0 %2892
  %v2895 = vmul.f32 %v2877, %v2893
  %2897 = vrot.lane.b32.xlu0 %v2895, 32
  %v2898 = vpop.permute.xlu0 %2897
  %2901 = vrot.lane.b32.xlu0 %v2822, 64
  %v2902 = vpop.permute.xlu0 %2901
  %v2904 = vsel %vm550, %v2898, %v2902
  %v2905 = vpack.c.bf16 %v2904, %v2904
  %v2907 = vsel %vm655, %v2905, 0
  %2909 = vmatprep.subr.bf16.mxu0 0
  %2910 = vmatpush1.bf16.msra.mxu0 %v647
  %2911 = vmatprep.subr.bf16.mxu0 0
  %2912 = vmatpush1.bf16.msra.mxu0 %v648
  %2913 = vmatprep.subr.bf16.mxu0 0
  %2914 = vmatpush1.bf16.msra.mxu0 %v649
  %2915 = vmatprep.subr.bf16.mxu0 0
  %2916 = vmatpush1.bf16.msra.mxu0 %v650
  %2917 = vmatprep.subr.bf16.mxu0 0
  %2918 = vmatpush1.bf16.msra.mxu0 0
  %2919 = vmatprep.subr.bf16.mxu0 0
  %2920 = vmatpush1.bf16.msra.mxu0 0
  %2921 = vmatprep.subr.bf16.mxu0 0
  %2922 = vmatpush1.bf16.msra.mxu0 0
  %2923 = vmatprep.subr.bf16.mxu0 0
  %2924 = vmatpush1.bf16.msra.mxu0 0
  %2925 = vmatprep.subr.bf16.mxu0 0
  %2926 = vmatpush1.bf16.msra.mxu0 0
  %2927 = vmatprep.subr.bf16.mxu0 0
  %2928 = vmatpush1.bf16.msra.mxu0 0
  %2929 = vmatprep.subr.bf16.mxu0 0
  %2930 = vmatpush1.bf16.msra.mxu0 0
  %2931 = vmatprep.subr.bf16.mxu0 0
  %2932 = vmatpush1.bf16.msra.mxu0 0
  %2933 = vmatprep.subr.bf16.mxu0 0
  %2934 = vmatpush1.bf16.msra.mxu0 0
  %2935 = vmatprep.subr.bf16.mxu0 0
  %2936 = vmatpush1.bf16.msra.mxu0 0
  %2937 = vmatprep.subr.bf16.mxu0 0
  %2938 = vmatpush1.bf16.msra.mxu0 0
  %2939 = vmatprep.subr.bf16.mxu0 0
  %2940 = vmatpush1.bf16.msra.mxu0 0
  %2941 = vmatprep.mubr.bf16.mxu0 0
  %2942 = vmatmul.mubr.bf16.gmra.mrb[0].mxu0 %v2907
  %v2943 = vpop.f32.mrb[0].mxu0
  %v2944 = vadd.f32 %v629, %v2943
  %v2945 = vpop.f32.mrb[0].mxu0
  %v2946 = vpop.f32.mrb[0].mxu0
  %v2947 = vpop.f32.mrb[0].mxu0
  %2948 = vdwg.mxu0
  %v2949 = vxor.u32 %v2944, 2147483648
  %v2950 = vmul.f32 %v2949, 1.442695
  %v2951 = vpow.pop %v2950
  %v2952 = vadd.f32 %v2951, 1.0
  %v2953 = vrcp.pop %v2952
  %v2954 = vmul.f32 1.0, %v2953
  %v2955 = vtanh.pop %v2944
  %v2956 = vmul.f32 %v2954, %v2816
  %2958 = vrot.lane.b32.xlu0 %v2955, 64
  %v2959 = vpop.permute.xlu0 %2958
  %v2961 = vmul.f32 %v2954, %v2959
  %2963 = vrot.lane.b32.xlu0 %v2961, 32
  %v2964 = vpop.permute.xlu0 %2963
  %v2966 = vadd.f32 %v2956, %v2964
  %v2967 = vtanh.pop %v2966
  %2969 = vrot.lane.b32.xlu0 %v2967, 64
  %v2970 = vpop.permute.xlu0 %2969
  %v2972 = vmul.f32 %v2954, %v2970
  %v2973 = vpack.c.bf16 %v2972, %v2972
  %v2974 = vld [vmem:[%s8] sm:$0xf]
  %v2975 = vld [vmem:[%s8 + $0x4] sm:$0xf]
  %v2976 = vld [vmem:[%s8 + $0x8] sm:$0xf]
  %v2977 = vld [vmem:[%s8 + $0xc] sm:$0xf]
  %v2978 = vld [vmem:[%s9] sm:$0x1]
  %v2980 = vlaneseq
  %v2981 = vshrl.u32 %v2980, 7
  %v2982 = vsub.s32 0, %v2981
  %v2983 = vrot.slane %v2978, %v2982
  %2986 = vrot.lane.b32.xlu0 %v2973, 32
  %v2987 = vpop.permute.xlu0 %2986
  %v2992 = vunpack.c.l.b16 %v2974
  %v2993 = vunpack.c.l.b16 %v2975
  %v2994 = vunpack.c.l.b16 %v2976
  %v2995 = vunpack.c.l.b16 %v2977
  %v2996 = vpack.c.b16 %v2993, %v2992
  %v2997 = vpack.c.b16 %v2995, %v2994
  %v3001 = vsel %vm550, %v2987, 0
  %3003 = vmatprep.subr.bf16.mxu0 0
  %3004 = vmatpush1.bf16.msra.mxu0 %v2996
  %3005 = vmatprep.subr.bf16.mxu0 0
  %3006 = vmatpush1.bf16.msra.mxu0 %v2997
  %3007 = vmatprep.subr.bf16.mxu0 0
  %3008 = vmatpush1.bf16.msra.mxu0 0
  %3009 = vmatprep.subr.bf16.mxu0 0
  %3010 = vmatpush1.bf16.msra.mxu0 0
  %3011 = vmatprep.subr.bf16.mxu0 0
  %3012 = vmatpush1.bf16.msra.mxu0 0
  %3013 = vmatprep.subr.bf16.mxu0 0
  %3014 = vmatpush1.bf16.msra.mxu0 0
  %3015 = vmatprep.subr.bf16.mxu0 0
  %3016 = vmatpush1.bf16.msra.mxu0 0
  %3017 = vmatprep.subr.bf16.mxu0 0
  %3018 = vmatpush1.bf16.msra.mxu0 0
  %3019 = vmatprep.subr.bf16.mxu0 0
  %3020 = vmatpush1.bf16.msra.mxu0 0
  %3021 = vmatprep.subr.bf16.mxu0 0
  %3022 = vmatpush1.bf16.msra.mxu0 0
  %3023 = vmatprep.subr.bf16.mxu0 0
  %3024 = vmatpush1.bf16.msra.mxu0 0
  %3025 = vmatprep.subr.bf16.mxu0 0
  %3026 = vmatpush1.bf16.msra.mxu0 0
  %3027 = vmatprep.subr.bf16.mxu0 0
  %3028 = vmatpush1.bf16.msra.mxu0 0
  %3029 = vmatprep.subr.bf16.mxu0 0
  %3030 = vmatpush1.bf16.msra.mxu0 0
  %3031 = vmatprep.subr.bf16.mxu0 0
  %3032 = vmatpush1.bf16.msra.mxu0 0
  %3033 = vmatprep.subr.bf16.mxu0 0
  %3034 = vmatpush1.bf16.msra.mxu0 0
  %3035 = vmatprep.mubr.bf16.mxu0 0
  %3036 = vmatmul.mubr.bf16.gmra.mrb[0].mxu0 %v3001
  %v3037 = vpop.f32.mrb[0].mxu0
  %v3038 = vadd.f32 %v2983, %v3037
  %v3039 = vpop.f32.mrb[0].mxu0
  %v3040 = vpop.f32.mrb[0].mxu0
  %v3041 = vpop.f32.mrb[0].mxu0
  %3042 = vdwg.mxu0
  %3043 = vst [vmem:[%s10] sm:$0xff] %v3038
  // Predicated region
  $region42: #{cnn_lstm_forward.1} parent=0 // pred_check
    _
  $region43: #{cnn_lstm_forward.1} parent=0 // pred_check_branch
    %3045 = sbr.rel (0) target = $region45
  $region44: #{cnn_lstm_forward.1} parent=0 // pred_region
    _
  $region45: #{cnn_lstm_forward.1} parent=0 // pred_fallthru
    _
  // Predicated region
  $region46: #{cnn_lstm_forward.1} parent=0 // pred_check
    _
  $region47: #{cnn_lstm_forward.1} parent=0 // pred_check_branch
    %3047 = sbr.rel (0) target = $region49
  $region48: #{cnn_lstm_forward.1} parent=0 // pred_region
    _
  $region49: #{cnn_lstm_forward.1} parent=0 // pred_fallthru
    _

</llo_original>
